<compile_context>
chip_gen: v5e
topology: v5e:2x2
jax: 0.10.0
libtpu: 0.0.40
codegen_flags: <defaults>
</compile_context>

<pallas_src>
import numpy as np

import jax
import jax.numpy as jnp
from jax import lax
from jax.experimental import pallas as pl
from jax.experimental.pallas import tpu as pltpu


def make_quantizer_params(nq: int, mn: float, mx: float):
    """Exactly mirrors APLoss.__init__ Conv1d weight/bias initialization (reference only)."""
    assert isinstance(nq, int) and 2 <= nq <= 100
    gap = mx - mn
    assert gap > 0
    a = (nq - 1) / gap
    w = np.zeros(2 * nq, np.float32)
    b = np.zeros(2 * nq, np.float32)
    w[:nq] = -a
    b[:nq] = a * mn + np.arange(nq, 0, -1)
    w[nq:] = a
    b[nq:] = np.arange(2 - nq, 2, 1) - a * mn
    w[0] = w[-1] = 0.0
    b[0] = b[-1] = 1.0
    return w, b


def make_ap_loss(nq: int = 25, mn: float = 0.0, mx: float = 1.0,
                 euc: bool = False, bn: int = 256):
    """Returns forward(x, label) -> ap of shape (N,), matching APLoss.forward."""
    assert isinstance(nq, int) and 2 <= nq <= 100
    gap = mx - mn
    assert gap > 0
    a = (nq - 1) / gap

    def kernel(x_ref, lab_ref, ap_ref):
        x = x_ref[...].astype(jnp.float32)        # (bn, M)
        lab = lab_ref[...].astype(jnp.float32)    # (bn, M)
        if euc:
            x = 1.0 - jnp.sqrt(2.001 - 2.0 * x)
        rows, m = x.shape

        # Bin coordinate t in [0, nq-1]; the clamp makes the closed-form cumulative hat
        # below exact for out-of-range inputs too (matches the conv quantizer's special
        # first/last rows with w=0, b=1).
        t = jnp.clip(jnp.float32(a) * x - jnp.float32(a * mn),
                     0.0, jnp.float32(nq - 1))                        # (bn, M)

        ones8 = jnp.ones((8, m), jnp.float32)     # hoisted MXU reduction operand
        dn = (((1,), (1,)), ((), ()))             # contract M of both -> (8, rows)

        prev_rec = jnp.zeros((8, rows), jnp.float32)   # cumulative recall mass
        ap_num = jnp.zeros((8, rows), jnp.float32)

        # Static unroll over quantization bins (nq <= 100).  For bin c:
        #   qcum = sum_{c'<=c} hat_{c'}(x) = clamp(t + c + 2 - nq, 0, 1)   (bn, M)
        #   cum_nbs_c = sum_m qcum          (MXU reduction, lane-dense (8, bn))
        #   cum_rec_c = sum_m qcum * label
        #   prec_c = cum_rec_c / (1e-16 + cum_nbs_c);  rec_c = cum_rec_c - cum_rec_{c-1}
        for c in range(nq):
            qcum = jnp.clip(t + jnp.float32(c + 2 - nq), 0.0, 1.0)    # (bn, M)
            cum_nbs = lax.dot_general(ones8, qcum, dn,
                                      preferred_element_type=jnp.float32)
            cum_rec = lax.dot_general(ones8, qcum * lab, dn,
                                      preferred_element_type=jnp.float32)
            rec_c = cum_rec - prev_rec
            ap_num = ap_num + rec_c * (cum_rec / (1e-16 + cum_nbs))
            prev_rec = cum_rec

        # prev_rec is now the total recall mass.  Rows with no positives (and padded
        # rows) give 0/0 = NaN, matching the PyTorch reference; padded rows are sliced
        # away in the wrapper.  All 8 sublanes are identical copies; wrapper keeps row 0.
        ap_ref[0] = ap_num / prev_rec

    def forward(x, label):
        assert x.shape == label.shape and x.ndim == 2
        N, M = x.shape

        # Row tile: multiple of 8, <= requested bn, capped so one f32 input block is
        # <= ~0.5 MiB, and never larger than needed for small N.
        cap = max(8, ((512 * 1024 // 4) // max(M, 1)) // 8 * 8)
        bn_eff = max(8, min(max(8, (bn // 8) * 8), cap, ((N + 7) // 8) * 8))

        pad = (-N) % bn_eff
        if pad:
            x = jnp.pad(x, ((0, pad), (0, 0)))
            label = jnp.pad(label, ((0, pad), (0, 0)))
        G = (N + pad) // bn_eff

        out = pl.pallas_call(
            kernel,
            out_shape=jax.ShapeDtypeStruct((G, 8, bn_eff), jnp.float32),
            grid_spec=pltpu.PrefetchScalarGridSpec(
                num_scalar_prefetch=0,
                grid=(G,),
                in_specs=[
                    pl.BlockSpec((bn_eff, M), lambda i: (i, 0)),
                    pl.BlockSpec((bn_eff, M), lambda i: (i, 0)),
                ],
                out_specs=pl.BlockSpec((1, 8, bn_eff), lambda i: (i, 0, 0)),
            ),
            compiler_params=pltpu.CompilerParams(
                dimension_semantics=("parallel",),
                vmem_limit_bytes=48 * 1024 * 1024,
            ),
        )(x, label)
        return out[:, 0, :].reshape(-1)[:N]

    return forward


def ap_loss_ref(x, label, nq=25, mn=0.0, mx=1.0, euc=False):
    """Pure-JAX reference mirroring APLoss.compute_AP exactly (verification only)."""
    w_np, b_np = make_quantizer_params(nq, mn, mx)
    x = x.astype(jnp.float32)
    label = label.astype(jnp.float32)
    if euc:
        x = 1.0 - jnp.sqrt(2.001 - 2.0 * x)
    q = w_np[None, :, None] * x[:, None, :] + b_np[None, :, None]     # (N, 2nq, M)
    q = jnp.clip(jnp.minimum(q[:, :nq], q[:, nq:]), 0.0, None)        # (N, nq, M)
    nbs = q.sum(-1)                                                   # (N, nq)
    rec = (q * label[:, None, :]).sum(-1)                             # (N, nq)
    prec = jnp.cumsum(rec, -1) / (1e-16 + jnp.cumsum(nbs, -1))
    rec = rec / rec.sum(-1, keepdims=True)
    return (prec * rec).sum(-1)                                       # (N,)


if __name__ == "__main__":
    nq = 25
    key = jax.random.PRNGKey(0)

    # Case 1: default config (euc=False), single row block.
    N1, M1 = 24, 256
    k1, k2, k3, k4 = jax.random.split(key, 4)
    x1 = jax.random.uniform(k1, (N1, M1), dtype=jnp.float32)
    l1 = jax.random.bernoulli(k2, 0.5, (N1, M1)).astype(jnp.float32)
    fwd1 = make_ap_loss(nq=nq, mn=0.0, mx=1.0, euc=False)
    ap1 = jax.block_until_ready(fwd1(x1, l1))
    ref1 = np.asarray(ap_loss_ref(x1, l1, nq=nq, euc=False))
    assert ap1.shape == (N1,)
    assert np.allclose(np.asarray(ap1), ref1, rtol=1e-4, atol=1e-4), (ap1, ref1)

    # Case 2: euclidean mode + padding + multi-block grid (small bn on purpose).
    N2, M2 = 40, 128
    x2 = jax.random.uniform(k3, (N2, M2), dtype=jnp.float32)
    l2 = jax.random.bernoulli(k4, 0.5, (N2, M2)).astype(jnp.float32)
    fwd2 = make_ap_loss(nq=nq, mn=0.0, mx=1.0, euc=True, bn=16)
    ap2 = jax.block_until_ready(fwd2(x2, l2))
    ref2 = np.asarray(ap_loss_ref(x2, l2, nq=nq, euc=True))
    assert ap2.shape == (N2,)
    assert np.allclose(np.asarray(ap2), ref2, rtol=1e-4, atol=1e-4), (ap2, ref2)

    print("KERNEL_OK")
</pallas_src>

<mosaic_0001>
module attributes {stable_mosaic.version = 11 : i64} {
  func.func @kernel(%arg0: i32, %arg1: memref<24x256xf32, #tpu.memory_space<vmem>>, %arg2: memref<24x256xf32, #tpu.memory_space<vmem>>, %arg3: memref<1x8x24xf32, #tpu.memory_space<vmem>>) attributes {dimension_semantics = [#tpu.dimension_semantics<parallel>], iteration_bounds = array<i64: 1>, scalar_prefetch = 0 : i64, scratch_operands = 0 : i64, tpu.core_type = #tpu.core_type<tc>, window_params = [{transform_indices = @transform_0, window_bounds = array<i64: 24, 256>}, {transform_indices = @transform_1, window_bounds = array<i64: 24, 256>}, {transform_indices = @transform_2, window_bounds = array<i64: 1, 8, 24>}]} {
    %c0 = arith.constant 0 : index
    %c0_0 = arith.constant 0 : index
    %0 = vector.load %arg1[%c0, %c0_0] : memref<24x256xf32, #tpu.memory_space<vmem>>, vector<24x256xf32>
    %c0_1 = arith.constant 0 : index
    %c0_2 = arith.constant 0 : index
    %1 = vector.load %arg2[%c0_1, %c0_2] : memref<24x256xf32, #tpu.memory_space<vmem>>, vector<24x256xf32>
    %cst = arith.constant 2.400000e+01 : f32
    %2 = vector.broadcast %cst : f32 to vector<24x256xf32>
    %3 = arith.mulf %2, %0 : vector<24x256xf32>
    %cst_3 = arith.constant 0.000000e+00 : f32
    %4 = vector.broadcast %cst_3 : f32 to vector<24x256xf32>
    %5 = arith.subf %3, %4 : vector<24x256xf32>
    %cst_4 = arith.constant 0.000000e+00 : f32
    %cst_5 = arith.constant 2.400000e+01 : f32
    %6 = vector.broadcast %cst_4 : f32 to vector<24x256xf32>
    %7 = arith.maximumf %6, %5 : vector<24x256xf32>
    %8 = vector.broadcast %cst_5 : f32 to vector<24x256xf32>
    %9 = arith.minimumf %8, %7 : vector<24x256xf32>
    %cst_6 = arith.constant 1.000000e+00 : f32
    %10 = vector.broadcast %cst_6 : f32 to vector<8x256xf32>
    %cst_7 = arith.constant 0.000000e+00 : f32
    %11 = vector.broadcast %cst_7 : f32 to vector<8x24xf32>
    %cst_8 = arith.constant 0.000000e+00 : f32
    %12 = vector.broadcast %cst_8 : f32 to vector<8x24xf32>
    %cst_9 = arith.constant -2.300000e+01 : f32
    %13 = vector.broadcast %cst_9 : f32 to vector<24x256xf32>
    %14 = arith.addf %9, %13 : vector<24x256xf32>
    %cst_10 = arith.constant 0.000000e+00 : f32
    %cst_11 = arith.constant 1.000000e+00 : f32
    %15 = vector.broadcast %cst_10 : f32 to vector<24x256xf32>
    %16 = arith.maximumf %15, %14 : vector<24x256xf32>
    %17 = vector.broadcast %cst_11 : f32 to vector<24x256xf32>
    %18 = arith.minimumf %17, %16 : vector<24x256xf32>
    %cst_12 = arith.constant dense<0.000000e+00> : vector<8x24xf32>
    %19 = tpu.matmul %10, %18, %cst_12 {dimension_numbers = #tpu.dot_dimension_numbers<[1], [1], [0], [0], [0, 0, 1, 0], [], []>} : vector<8x256xf32>, vector<24x256xf32>, vector<8x24xf32> -> vector<8x24xf32>
    %20 = arith.mulf %18, %1 : vector<24x256xf32>
    %cst_13 = arith.constant dense<0.000000e+00> : vector<8x24xf32>
    %21 = tpu.matmul %10, %20, %cst_13 {dimension_numbers = #tpu.dot_dimension_numbers<[1], [1], [0], [0], [0, 0, 1, 0], [], []>} : vector<8x256xf32>, vector<24x256xf32>, vector<8x24xf32> -> vector<8x24xf32>
    %22 = arith.subf %21, %11 : vector<8x24xf32>
    %cst_14 = arith.constant 1.000000e-16 : f32
    %23 = vector.broadcast %cst_14 : f32 to vector<8x24xf32>
    %24 = arith.addf %23, %19 : vector<8x24xf32>
    %25 = arith.divf %21, %24 : vector<8x24xf32>
    %26 = arith.mulf %22, %25 : vector<8x24xf32>
    %27 = arith.addf %12, %26 : vector<8x24xf32>
    %cst_15 = arith.constant -2.200000e+01 : f32
    %28 = vector.broadcast %cst_15 : f32 to vector<24x256xf32>
    %29 = arith.addf %9, %28 : vector<24x256xf32>
    %cst_16 = arith.constant 0.000000e+00 : f32
    %cst_17 = arith.constant 1.000000e+00 : f32
    %30 = vector.broadcast %cst_16 : f32 to vector<24x256xf32>
    %31 = arith.maximumf %30, %29 : vector<24x256xf32>
    %32 = vector.broadcast %cst_17 : f32 to vector<24x256xf32>
    %33 = arith.minimumf %32, %31 : vector<24x256xf32>
    %cst_18 = arith.constant dense<0.000000e+00> : vector<8x24xf32>
    %34 = tpu.matmul %10, %33, %cst_18 {dimension_numbers = #tpu.dot_dimension_numbers<[1], [1], [0], [0], [0, 0, 1, 0], [], []>} : vector<8x256xf32>, vector<24x256xf32>, vector<8x24xf32> -> vector<8x24xf32>
    %35 = arith.mulf %33, %1 : vector<24x256xf32>
    %cst_19 = arith.constant dense<0.000000e+00> : vector<8x24xf32>
    %36 = tpu.matmul %10, %35, %cst_19 {dimension_numbers = #tpu.dot_dimension_numbers<[1], [1], [0], [0], [0, 0, 1, 0], [], []>} : vector<8x256xf32>, vector<24x256xf32>, vector<8x24xf32> -> vector<8x24xf32>
    %37 = arith.subf %36, %21 : vector<8x24xf32>
    %cst_20 = arith.constant 1.000000e-16 : f32
    %38 = vector.broadcast %cst_20 : f32 to vector<8x24xf32>
    %39 = arith.addf %38, %34 : vector<8x24xf32>
    %40 = arith.divf %36, %39 : vector<8x24xf32>
    %41 = arith.mulf %37, %40 : vector<8x24xf32>
    %42 = arith.addf %27, %41 : vector<8x24xf32>
    %cst_21 = arith.constant -2.100000e+01 : f32
    %43 = vector.broadcast %cst_21 : f32 to vector<24x256xf32>
    %44 = arith.addf %9, %43 : vector<24x256xf32>
    %cst_22 = arith.constant 0.000000e+00 : f32
    %cst_23 = arith.constant 1.000000e+00 : f32
    %45 = vector.broadcast %cst_22 : f32 to vector<24x256xf32>
    %46 = arith.maximumf %45, %44 : vector<24x256xf32>
    %47 = vector.broadcast %cst_23 : f32 to vector<24x256xf32>
    %48 = arith.minimumf %47, %46 : vector<24x256xf32>
    %cst_24 = arith.constant dense<0.000000e+00> : vector<8x24xf32>
    %49 = tpu.matmul %10, %48, %cst_24 {dimension_numbers = #tpu.dot_dimension_numbers<[1], [1], [0], [0], [0, 0, 1, 0], [], []>} : vector<8x256xf32>, vector<24x256xf32>, vector<8x24xf32> -> vector<8x24xf32>
    %50 = arith.mulf %48, %1 : vector<24x256xf32>
    %cst_25 = arith.constant dense<0.000000e+00> : vector<8x24xf32>
    %51 = tpu.matmul %10, %50, %cst_25 {dimension_numbers = #tpu.dot_dimension_numbers<[1], [1], [0], [0], [0, 0, 1, 0], [], []>} : vector<8x256xf32>, vector<24x256xf32>, vector<8x24xf32> -> vector<8x24xf32>
    %52 = arith.subf %51, %36 : vector<8x24xf32>
    %cst_26 = arith.constant 1.000000e-16 : f32
    %53 = vector.broadcast %cst_26 : f32 to vector<8x24xf32>
    %54 = arith.addf %53, %49 : vector<8x24xf32>
    %55 = arith.divf %51, %54 : vector<8x24xf32>
    %56 = arith.mulf %52, %55 : vector<8x24xf32>
    %57 = arith.addf %42, %56 : vector<8x24xf32>
    %cst_27 = arith.constant -2.000000e+01 : f32
    %58 = vector.broadcast %cst_27 : f32 to vector<24x256xf32>
    %59 = arith.addf %9, %58 : vector<24x256xf32>
    %cst_28 = arith.constant 0.000000e+00 : f32
    %cst_29 = arith.constant 1.000000e+00 : f32
    %60 = vector.broadcast %cst_28 : f32 to vector<24x256xf32>
    %61 = arith.maximumf %60, %59 : vector<24x256xf32>
    %62 = vector.broadcast %cst_29 : f32 to vector<24x256xf32>
    %63 = arith.minimumf %62, %61 : vector<24x256xf32>
    %cst_30 = arith.constant dense<0.000000e+00> : vector<8x24xf32>
    %64 = tpu.matmul %10, %63, %cst_30 {dimension_numbers = #tpu.dot_dimension_numbers<[1], [1], [0], [0], [0, 0, 1, 0], [], []>} : vector<8x256xf32>, vector<24x256xf32>, vector<8x24xf32> -> vector<8x24xf32>
    %65 = arith.mulf %63, %1 : vector<24x256xf32>
    %cst_31 = arith.constant dense<0.000000e+00> : vector<8x24xf32>
    %66 = tpu.matmul %10, %65, %cst_31 {dimension_numbers = #tpu.dot_dimension_numbers<[1], [1], [0], [0], [0, 0, 1, 0], [], []>} : vector<8x256xf32>, vector<24x256xf32>, vector<8x24xf32> -> vector<8x24xf32>
    %67 = arith.subf %66, %51 : vector<8x24xf32>
    %cst_32 = arith.constant 1.000000e-16 : f32
    %68 = vector.broadcast %cst_32 : f32 to vector<8x24xf32>
    %69 = arith.addf %68, %64 : vector<8x24xf32>
    %70 = arith.divf %66, %69 : vector<8x24xf32>
    %71 = arith.mulf %67, %70 : vector<8x24xf32>
    %72 = arith.addf %57, %71 : vector<8x24xf32>
    %cst_33 = arith.constant -1.900000e+01 : f32
    %73 = vector.broadcast %cst_33 : f32 to vector<24x256xf32>
    %74 = arith.addf %9, %73 : vector<24x256xf32>
    %cst_34 = arith.constant 0.000000e+00 : f32
    %cst_35 = arith.constant 1.000000e+00 : f32
    %75 = vector.broadcast %cst_34 : f32 to vector<24x256xf32>
    %76 = arith.maximumf %75, %74 : vector<24x256xf32>
    %77 = vector.broadcast %cst_35 : f32 to vector<24x256xf32>
    %78 = arith.minimumf %77, %76 : vector<24x256xf32>
    %cst_36 = arith.constant dense<0.000000e+00> : vector<8x24xf32>
    %79 = tpu.matmul %10, %78, %cst_36 {dimension_numbers = #tpu.dot_dimension_numbers<[1], [1], [0], [0], [0, 0, 1, 0], [], []>} : vector<8x256xf32>, vector<24x256xf32>, vector<8x24xf32> -> vector<8x24xf32>
    %80 = arith.mulf %78, %1 : vector<24x256xf32>
    %cst_37 = arith.constant dense<0.000000e+00> : vector<8x24xf32>
    %81 = tpu.matmul %10, %80, %cst_37 {dimension_numbers = #tpu.dot_dimension_numbers<[1], [1], [0], [0], [0, 0, 1, 0], [], []>} : vector<8x256xf32>, vector<24x256xf32>, vector<8x24xf32> -> vector<8x24xf32>
    %82 = arith.subf %81, %66 : vector<8x24xf32>
    %cst_38 = arith.constant 1.000000e-16 : f32
    %83 = vector.broadcast %cst_38 : f32 to vector<8x24xf32>
    %84 = arith.addf %83, %79 : vector<8x24xf32>
    %85 = arith.divf %81, %84 : vector<8x24xf32>
    %86 = arith.mulf %82, %85 : vector<8x24xf32>
    %87 = arith.addf %72, %86 : vector<8x24xf32>
    %cst_39 = arith.constant -1.800000e+01 : f32
    %88 = vector.broadcast %cst_39 : f32 to vector<24x256xf32>
    %89 = arith.addf %9, %88 : vector<24x256xf32>
    %cst_40 = arith.constant 0.000000e+00 : f32
    %cst_41 = arith.constant 1.000000e+00 : f32
    %90 = vector.broadcast %cst_40 : f32 to vector<24x256xf32>
    %91 = arith.maximumf %90, %89 : vector<24x256xf32>
    %92 = vector.broadcast %cst_41 : f32 to vector<24x256xf32>
    %93 = arith.minimumf %92, %91 : vector<24x256xf32>
    %cst_42 = arith.constant dense<0.000000e+00> : vector<8x24xf32>
    %94 = tpu.matmul %10, %93, %cst_42 {dimension_numbers = #tpu.dot_dimension_numbers<[1], [1], [0], [0], [0, 0, 1, 0], [], []>} : vector<8x256xf32>, vector<24x256xf32>, vector<8x24xf32> -> vector<8x24xf32>
    %95 = arith.mulf %93, %1 : vector<24x256xf32>
    %cst_43 = arith.constant dense<0.000000e+00> : vector<8x24xf32>
    %96 = tpu.matmul %10, %95, %cst_43 {dimension_numbers = #tpu.dot_dimension_numbers<[1], [1], [0], [0], [0, 0, 1, 0], [], []>} : vector<8x256xf32>, vector<24x256xf32>, vector<8x24xf32> -> vector<8x24xf32>
    %97 = arith.subf %96, %81 : vector<8x24xf32>
    %cst_44 = arith.constant 1.000000e-16 : f32
    %98 = vector.broadcast %cst_44 : f32 to vector<8x24xf32>
    %99 = arith.addf %98, %94 : vector<8x24xf32>
    %100 = arith.divf %96, %99 : vector<8x24xf32>
    %101 = arith.mulf %97, %100 : vector<8x24xf32>
    %102 = arith.addf %87, %101 : vector<8x24xf32>
    %cst_45 = arith.constant -1.700000e+01 : f32
    %103 = vector.broadcast %cst_45 : f32 to vector<24x256xf32>
    %104 = arith.addf %9, %103 : vector<24x256xf32>
    %cst_46 = arith.constant 0.000000e+00 : f32
    %cst_47 = arith.constant 1.000000e+00 : f32
    %105 = vector.broadcast %cst_46 : f32 to vector<24x256xf32>
    %106 = arith.maximumf %105, %104 : vector<24x256xf32>
    %107 = vector.broadcast %cst_47 : f32 to vector<24x256xf32>
    %108 = arith.minimumf %107, %106 : vector<24x256xf32>
    %cst_48 = arith.constant dense<0.000000e+00> : vector<8x24xf32>
    %109 = tpu.matmul %10, %108, %cst_48 {dimension_numbers = #tpu.dot_dimension_numbers<[1], [1], [0], [0], [0, 0, 1, 0], [], []>} : vector<8x256xf32>, vector<24x256xf32>, vector<8x24xf32> -> vector<8x24xf32>
    %110 = arith.mulf %108, %1 : vector<24x256xf32>
    %cst_49 = arith.constant dense<0.000000e+00> : vector<8x24xf32>
    %111 = tpu.matmul %10, %110, %cst_49 {dimension_numbers = #tpu.dot_dimension_numbers<[1], [1], [0], [0], [0, 0, 1, 0], [], []>} : vector<8x256xf32>, vector<24x256xf32>, vector<8x24xf32> -> vector<8x24xf32>
    %112 = arith.subf %111, %96 : vector<8x24xf32>
    %cst_50 = arith.constant 1.000000e-16 : f32
    %113 = vector.broadcast %cst_50 : f32 to vector<8x24xf32>
    %114 = arith.addf %113, %109 : vector<8x24xf32>
    %115 = arith.divf %111, %114 : vector<8x24xf32>
    %116 = arith.mulf %112, %115 : vector<8x24xf32>
    %117 = arith.addf %102, %116 : vector<8x24xf32>
    %cst_51 = arith.constant -1.600000e+01 : f32
    %118 = vector.broadcast %cst_51 : f32 to vector<24x256xf32>
    %119 = arith.addf %9, %118 : vector<24x256xf32>
    %cst_52 = arith.constant 0.000000e+00 : f32
    %cst_53 = arith.constant 1.000000e+00 : f32
    %120 = vector.broadcast %cst_52 : f32 to vector<24x256xf32>
    %121 = arith.maximumf %120, %119 : vector<24x256xf32>
    %122 = vector.broadcast %cst_53 : f32 to vector<24x256xf32>
    %123 = arith.minimumf %122, %121 : vector<24x256xf32>
    %cst_54 = arith.constant dense<0.000000e+00> : vector<8x24xf32>
    %124 = tpu.matmul %10, %123, %cst_54 {dimension_numbers = #tpu.dot_dimension_numbers<[1], [1], [0], [0], [0, 0, 1, 0], [], []>} : vector<8x256xf32>, vector<24x256xf32>, vector<8x24xf32> -> vector<8x24xf32>
    %125 = arith.mulf %123, %1 : vector<24x256xf32>
    %cst_55 = arith.constant dense<0.000000e+00> : vector<8x24xf32>
    %126 = tpu.matmul %10, %125, %cst_55 {dimension_numbers = #tpu.dot_dimension_numbers<[1], [1], [0], [0], [0, 0, 1, 0], [], []>} : vector<8x256xf32>, vector<24x256xf32>, vector<8x24xf32> -> vector<8x24xf32>
    %127 = arith.subf %126, %111 : vector<8x24xf32>
    %cst_56 = arith.constant 1.000000e-16 : f32
    %128 = vector.broadcast %cst_56 : f32 to vector<8x24xf32>
    %129 = arith.addf %128, %124 : vector<8x24xf32>
    %130 = arith.divf %126, %129 : vector<8x24xf32>
    %131 = arith.mulf %127, %130 : vector<8x24xf32>
    %132 = arith.addf %117, %131 : vector<8x24xf32>
    %cst_57 = arith.constant -1.500000e+01 : f32
    %133 = vector.broadcast %cst_57 : f32 to vector<24x256xf32>
    %134 = arith.addf %9, %133 : vector<24x256xf32>
    %cst_58 = arith.constant 0.000000e+00 : f32
    %cst_59 = arith.constant 1.000000e+00 : f32
    %135 = vector.broadcast %cst_58 : f32 to vector<24x256xf32>
    %136 = arith.maximumf %135, %134 : vector<24x256xf32>
    %137 = vector.broadcast %cst_59 : f32 to vector<24x256xf32>
    %138 = arith.minimumf %137, %136 : vector<24x256xf32>
    %cst_60 = arith.constant dense<0.000000e+00> : vector<8x24xf32>
    %139 = tpu.matmul %10, %138, %cst_60 {dimension_numbers = #tpu.dot_dimension_numbers<[1], [1], [0], [0], [0, 0, 1, 0], [], []>} : vector<8x256xf32>, vector<24x256xf32>, vector<8x24xf32> -> vector<8x24xf32>
    %140 = arith.mulf %138, %1 : vector<24x256xf32>
    %cst_61 = arith.constant dense<0.000000e+00> : vector<8x24xf32>
    %141 = tpu.matmul %10, %140, %cst_61 {dimension_numbers = #tpu.dot_dimension_numbers<[1], [1], [0], [0], [0, 0, 1, 0], [], []>} : vector<8x256xf32>, vector<24x256xf32>, vector<8x24xf32> -> vector<8x24xf32>
    %142 = arith.subf %141, %126 : vector<8x24xf32>
    %cst_62 = arith.constant 1.000000e-16 : f32
    %143 = vector.broadcast %cst_62 : f32 to vector<8x24xf32>
    %144 = arith.addf %143, %139 : vector<8x24xf32>
    %145 = arith.divf %141, %144 : vector<8x24xf32>
    %146 = arith.mulf %142, %145 : vector<8x24xf32>
    %147 = arith.addf %132, %146 : vector<8x24xf32>
    %cst_63 = arith.constant -1.400000e+01 : f32
    %148 = vector.broadcast %cst_63 : f32 to vector<24x256xf32>
    %149 = arith.addf %9, %148 : vector<24x256xf32>
    %cst_64 = arith.constant 0.000000e+00 : f32
    %cst_65 = arith.constant 1.000000e+00 : f32
    %150 = vector.broadcast %cst_64 : f32 to vector<24x256xf32>
    %151 = arith.maximumf %150, %149 : vector<24x256xf32>
    %152 = vector.broadcast %cst_65 : f32 to vector<24x256xf32>
    %153 = arith.minimumf %152, %151 : vector<24x256xf32>
    %cst_66 = arith.constant dense<0.000000e+00> : vector<8x24xf32>
    %154 = tpu.matmul %10, %153, %cst_66 {dimension_numbers = #tpu.dot_dimension_numbers<[1], [1], [0], [0], [0, 0, 1, 0], [], []>} : vector<8x256xf32>, vector<24x256xf32>, vector<8x24xf32> -> vector<8x24xf32>
    %155 = arith.mulf %153, %1 : vector<24x256xf32>
    %cst_67 = arith.constant dense<0.000000e+00> : vector<8x24xf32>
    %156 = tpu.matmul %10, %155, %cst_67 {dimension_numbers = #tpu.dot_dimension_numbers<[1], [1], [0], [0], [0, 0, 1, 0], [], []>} : vector<8x256xf32>, vector<24x256xf32>, vector<8x24xf32> -> vector<8x24xf32>
    %157 = arith.subf %156, %141 : vector<8x24xf32>
    %cst_68 = arith.constant 1.000000e-16 : f32
    %158 = vector.broadcast %cst_68 : f32 to vector<8x24xf32>
    %159 = arith.addf %158, %154 : vector<8x24xf32>
    %160 = arith.divf %156, %159 : vector<8x24xf32>
    %161 = arith.mulf %157, %160 : vector<8x24xf32>
    %162 = arith.addf %147, %161 : vector<8x24xf32>
    %cst_69 = arith.constant -1.300000e+01 : f32
    %163 = vector.broadcast %cst_69 : f32 to vector<24x256xf32>
    %164 = arith.addf %9, %163 : vector<24x256xf32>
    %cst_70 = arith.constant 0.000000e+00 : f32
    %cst_71 = arith.constant 1.000000e+00 : f32
    %165 = vector.broadcast %cst_70 : f32 to vector<24x256xf32>
    %166 = arith.maximumf %165, %164 : vector<24x256xf32>
    %167 = vector.broadcast %cst_71 : f32 to vector<24x256xf32>
    %168 = arith.minimumf %167, %166 : vector<24x256xf32>
    %cst_72 = arith.constant dense<0.000000e+00> : vector<8x24xf32>
    %169 = tpu.matmul %10, %168, %cst_72 {dimension_numbers = #tpu.dot_dimension_numbers<[1], [1], [0], [0], [0, 0, 1, 0], [], []>} : vector<8x256xf32>, vector<24x256xf32>, vector<8x24xf32> -> vector<8x24xf32>
    %170 = arith.mulf %168, %1 : vector<24x256xf32>
    %cst_73 = arith.constant dense<0.000000e+00> : vector<8x24xf32>
    %171 = tpu.matmul %10, %170, %cst_73 {dimension_numbers = #tpu.dot_dimension_numbers<[1], [1], [0], [0], [0, 0, 1, 0], [], []>} : vector<8x256xf32>, vector<24x256xf32>, vector<8x24xf32> -> vector<8x24xf32>
    %172 = arith.subf %171, %156 : vector<8x24xf32>
    %cst_74 = arith.constant 1.000000e-16 : f32
    %173 = vector.broadcast %cst_74 : f32 to vector<8x24xf32>
    %174 = arith.addf %173, %169 : vector<8x24xf32>
    %175 = arith.divf %171, %174 : vector<8x24xf32>
    %176 = arith.mulf %172, %175 : vector<8x24xf32>
    %177 = arith.addf %162, %176 : vector<8x24xf32>
    %cst_75 = arith.constant -1.200000e+01 : f32
    %178 = vector.broadcast %cst_75 : f32 to vector<24x256xf32>
    %179 = arith.addf %9, %178 : vector<24x256xf32>
    %cst_76 = arith.constant 0.000000e+00 : f32
    %cst_77 = arith.constant 1.000000e+00 : f32
    %180 = vector.broadcast %cst_76 : f32 to vector<24x256xf32>
    %181 = arith.maximumf %180, %179 : vector<24x256xf32>
    %182 = vector.broadcast %cst_77 : f32 to vector<24x256xf32>
    %183 = arith.minimumf %182, %181 : vector<24x256xf32>
    %cst_78 = arith.constant dense<0.000000e+00> : vector<8x24xf32>
    %184 = tpu.matmul %10, %183, %cst_78 {dimension_numbers = #tpu.dot_dimension_numbers<[1], [1], [0], [0], [0, 0, 1, 0], [], []>} : vector<8x256xf32>, vector<24x256xf32>, vector<8x24xf32> -> vector<8x24xf32>
    %185 = arith.mulf %183, %1 : vector<24x256xf32>
    %cst_79 = arith.constant dense<0.000000e+00> : vector<8x24xf32>
    %186 = tpu.matmul %10, %185, %cst_79 {dimension_numbers = #tpu.dot_dimension_numbers<[1], [1], [0], [0], [0, 0, 1, 0], [], []>} : vector<8x256xf32>, vector<24x256xf32>, vector<8x24xf32> -> vector<8x24xf32>
    %187 = arith.subf %186, %171 : vector<8x24xf32>
    %cst_80 = arith.constant 1.000000e-16 : f32
    %188 = vector.broadcast %cst_80 : f32 to vector<8x24xf32>
    %189 = arith.addf %188, %184 : vector<8x24xf32>
    %190 = arith.divf %186, %189 : vector<8x24xf32>
    %191 = arith.mulf %187, %190 : vector<8x24xf32>
    %192 = arith.addf %177, %191 : vector<8x24xf32>
    %cst_81 = arith.constant -1.100000e+01 : f32
    %193 = vector.broadcast %cst_81 : f32 to vector<24x256xf32>
    %194 = arith.addf %9, %193 : vector<24x256xf32>
    %cst_82 = arith.constant 0.000000e+00 : f32
    %cst_83 = arith.constant 1.000000e+00 : f32
    %195 = vector.broadcast %cst_82 : f32 to vector<24x256xf32>
    %196 = arith.maximumf %195, %194 : vector<24x256xf32>
    %197 = vector.broadcast %cst_83 : f32 to vector<24x256xf32>
    %198 = arith.minimumf %197, %196 : vector<24x256xf32>
    %cst_84 = arith.constant dense<0.000000e+00> : vector<8x24xf32>
    %199 = tpu.matmul %10, %198, %cst_84 {dimension_numbers = #tpu.dot_dimension_numbers<[1], [1], [0], [0], [0, 0, 1, 0], [], []>} : vector<8x256xf32>, vector<24x256xf32>, vector<8x24xf32> -> vector<8x24xf32>
    %200 = arith.mulf %198, %1 : vector<24x256xf32>
    %cst_85 = arith.constant dense<0.000000e+00> : vector<8x24xf32>
    %201 = tpu.matmul %10, %200, %cst_85 {dimension_numbers = #tpu.dot_dimension_numbers<[1], [1], [0], [0], [0, 0, 1, 0], [], []>} : vector<8x256xf32>, vector<24x256xf32>, vector<8x24xf32> -> vector<8x24xf32>
    %202 = arith.subf %201, %186 : vector<8x24xf32>
    %cst_86 = arith.constant 1.000000e-16 : f32
    %203 = vector.broadcast %cst_86 : f32 to vector<8x24xf32>
    %204 = arith.addf %203, %199 : vector<8x24xf32>
    %205 = arith.divf %201, %204 : vector<8x24xf32>
    %206 = arith.mulf %202, %205 : vector<8x24xf32>
    %207 = arith.addf %192, %206 : vector<8x24xf32>
    %cst_87 = arith.constant -1.000000e+01 : f32
    %208 = vector.broadcast %cst_87 : f32 to vector<24x256xf32>
    %209 = arith.addf %9, %208 : vector<24x256xf32>
    %cst_88 = arith.constant 0.000000e+00 : f32
    %cst_89 = arith.constant 1.000000e+00 : f32
    %210 = vector.broadcast %cst_88 : f32 to vector<24x256xf32>
    %211 = arith.maximumf %210, %209 : vector<24x256xf32>
    %212 = vector.broadcast %cst_89 : f32 to vector<24x256xf32>
    %213 = arith.minimumf %212, %211 : vector<24x256xf32>
    %cst_90 = arith.constant dense<0.000000e+00> : vector<8x24xf32>
    %214 = tpu.matmul %10, %213, %cst_90 {dimension_numbers = #tpu.dot_dimension_numbers<[1], [1], [0], [0], [0, 0, 1, 0], [], []>} : vector<8x256xf32>, vector<24x256xf32>, vector<8x24xf32> -> vector<8x24xf32>
    %215 = arith.mulf %213, %1 : vector<24x256xf32>
    %cst_91 = arith.constant dense<0.000000e+00> : vector<8x24xf32>
    %216 = tpu.matmul %10, %215, %cst_91 {dimension_numbers = #tpu.dot_dimension_numbers<[1], [1], [0], [0], [0, 0, 1, 0], [], []>} : vector<8x256xf32>, vector<24x256xf32>, vector<8x24xf32> -> vector<8x24xf32>
    %217 = arith.subf %216, %201 : vector<8x24xf32>
    %cst_92 = arith.constant 1.000000e-16 : f32
    %218 = vector.broadcast %cst_92 : f32 to vector<8x24xf32>
    %219 = arith.addf %218, %214 : vector<8x24xf32>
    %220 = arith.divf %216, %219 : vector<8x24xf32>
    %221 = arith.mulf %217, %220 : vector<8x24xf32>
    %222 = arith.addf %207, %221 : vector<8x24xf32>
    %cst_93 = arith.constant -9.000000e+00 : f32
    %223 = vector.broadcast %cst_93 : f32 to vector<24x256xf32>
    %224 = arith.addf %9, %223 : vector<24x256xf32>
    %cst_94 = arith.constant 0.000000e+00 : f32
    %cst_95 = arith.constant 1.000000e+00 : f32
    %225 = vector.broadcast %cst_94 : f32 to vector<24x256xf32>
    %226 = arith.maximumf %225, %224 : vector<24x256xf32>
    %227 = vector.broadcast %cst_95 : f32 to vector<24x256xf32>
    %228 = arith.minimumf %227, %226 : vector<24x256xf32>
    %cst_96 = arith.constant dense<0.000000e+00> : vector<8x24xf32>
    %229 = tpu.matmul %10, %228, %cst_96 {dimension_numbers = #tpu.dot_dimension_numbers<[1], [1], [0], [0], [0, 0, 1, 0], [], []>} : vector<8x256xf32>, vector<24x256xf32>, vector<8x24xf32> -> vector<8x24xf32>
    %230 = arith.mulf %228, %1 : vector<24x256xf32>
    %cst_97 = arith.constant dense<0.000000e+00> : vector<8x24xf32>
    %231 = tpu.matmul %10, %230, %cst_97 {dimension_numbers = #tpu.dot_dimension_numbers<[1], [1], [0], [0], [0, 0, 1, 0], [], []>} : vector<8x256xf32>, vector<24x256xf32>, vector<8x24xf32> -> vector<8x24xf32>
    %232 = arith.subf %231, %216 : vector<8x24xf32>
    %cst_98 = arith.constant 1.000000e-16 : f32
    %233 = vector.broadcast %cst_98 : f32 to vector<8x24xf32>
    %234 = arith.addf %233, %229 : vector<8x24xf32>
    %235 = arith.divf %231, %234 : vector<8x24xf32>
    %236 = arith.mulf %232, %235 : vector<8x24xf32>
    %237 = arith.addf %222, %236 : vector<8x24xf32>
    %cst_99 = arith.constant -8.000000e+00 : f32
    %238 = vector.broadcast %cst_99 : f32 to vector<24x256xf32>
    %239 = arith.addf %9, %238 : vector<24x256xf32>
    %cst_100 = arith.constant 0.000000e+00 : f32
    %cst_101 = arith.constant 1.000000e+00 : f32
    %240 = vector.broadcast %cst_100 : f32 to vector<24x256xf32>
    %241 = arith.maximumf %240, %239 : vector<24x256xf32>
    %242 = vector.broadcast %cst_101 : f32 to vector<24x256xf32>
    %243 = arith.minimumf %242, %241 : vector<24x256xf32>
    %cst_102 = arith.constant dense<0.000000e+00> : vector<8x24xf32>
    %244 = tpu.matmul %10, %243, %cst_102 {dimension_numbers = #tpu.dot_dimension_numbers<[1], [1], [0], [0], [0, 0, 1, 0], [], []>} : vector<8x256xf32>, vector<24x256xf32>, vector<8x24xf32> -> vector<8x24xf32>
    %245 = arith.mulf %243, %1 : vector<24x256xf32>
    %cst_103 = arith.constant dense<0.000000e+00> : vector<8x24xf32>
    %246 = tpu.matmul %10, %245, %cst_103 {dimension_numbers = #tpu.dot_dimension_numbers<[1], [1], [0], [0], [0, 0, 1, 0], [], []>} : vector<8x256xf32>, vector<24x256xf32>, vector<8x24xf32> -> vector<8x24xf32>
    %247 = arith.subf %246, %231 : vector<8x24xf32>
    %cst_104 = arith.constant 1.000000e-16 : f32
    %248 = vector.broadcast %cst_104 : f32 to vector<8x24xf32>
    %249 = arith.addf %248, %244 : vector<8x24xf32>
    %250 = arith.divf %246, %249 : vector<8x24xf32>
    %251 = arith.mulf %247, %250 : vector<8x24xf32>
    %252 = arith.addf %237, %251 : vector<8x24xf32>
    %cst_105 = arith.constant -7.000000e+00 : f32
    %253 = vector.broadcast %cst_105 : f32 to vector<24x256xf32>
    %254 = arith.addf %9, %253 : vector<24x256xf32>
    %cst_106 = arith.constant 0.000000e+00 : f32
    %cst_107 = arith.constant 1.000000e+00 : f32
    %255 = vector.broadcast %cst_106 : f32 to vector<24x256xf32>
    %256 = arith.maximumf %255, %254 : vector<24x256xf32>
    %257 = vector.broadcast %cst_107 : f32 to vector<24x256xf32>
    %258 = arith.minimumf %257, %256 : vector<24x256xf32>
    %cst_108 = arith.constant dense<0.000000e+00> : vector<8x24xf32>
    %259 = tpu.matmul %10, %258, %cst_108 {dimension_numbers = #tpu.dot_dimension_numbers<[1], [1], [0], [0], [0, 0, 1, 0], [], []>} : vector<8x256xf32>, vector<24x256xf32>, vector<8x24xf32> -> vector<8x24xf32>
    %260 = arith.mulf %258, %1 : vector<24x256xf32>
    %cst_109 = arith.constant dense<0.000000e+00> : vector<8x24xf32>
    %261 = tpu.matmul %10, %260, %cst_109 {dimension_numbers = #tpu.dot_dimension_numbers<[1], [1], [0], [0], [0, 0, 1, 0], [], []>} : vector<8x256xf32>, vector<24x256xf32>, vector<8x24xf32> -> vector<8x24xf32>
    %262 = arith.subf %261, %246 : vector<8x24xf32>
    %cst_110 = arith.constant 1.000000e-16 : f32
    %263 = vector.broadcast %cst_110 : f32 to vector<8x24xf32>
    %264 = arith.addf %263, %259 : vector<8x24xf32>
    %265 = arith.divf %261, %264 : vector<8x24xf32>
    %266 = arith.mulf %262, %265 : vector<8x24xf32>
    %267 = arith.addf %252, %266 : vector<8x24xf32>
    %cst_111 = arith.constant -6.000000e+00 : f32
    %268 = vector.broadcast %cst_111 : f32 to vector<24x256xf32>
    %269 = arith.addf %9, %268 : vector<24x256xf32>
    %cst_112 = arith.constant 0.000000e+00 : f32
    %cst_113 = arith.constant 1.000000e+00 : f32
    %270 = vector.broadcast %cst_112 : f32 to vector<24x256xf32>
    %271 = arith.maximumf %270, %269 : vector<24x256xf32>
    %272 = vector.broadcast %cst_113 : f32 to vector<24x256xf32>
    %273 = arith.minimumf %272, %271 : vector<24x256xf32>
    %cst_114 = arith.constant dense<0.000000e+00> : vector<8x24xf32>
    %274 = tpu.matmul %10, %273, %cst_114 {dimension_numbers = #tpu.dot_dimension_numbers<[1], [1], [0], [0], [0, 0, 1, 0], [], []>} : vector<8x256xf32>, vector<24x256xf32>, vector<8x24xf32> -> vector<8x24xf32>
    %275 = arith.mulf %273, %1 : vector<24x256xf32>
    %cst_115 = arith.constant dense<0.000000e+00> : vector<8x24xf32>
    %276 = tpu.matmul %10, %275, %cst_115 {dimension_numbers = #tpu.dot_dimension_numbers<[1], [1], [0], [0], [0, 0, 1, 0], [], []>} : vector<8x256xf32>, vector<24x256xf32>, vector<8x24xf32> -> vector<8x24xf32>
    %277 = arith.subf %276, %261 : vector<8x24xf32>
    %cst_116 = arith.constant 1.000000e-16 : f32
    %278 = vector.broadcast %cst_116 : f32 to vector<8x24xf32>
    %279 = arith.addf %278, %274 : vector<8x24xf32>
    %280 = arith.divf %276, %279 : vector<8x24xf32>
    %281 = arith.mulf %277, %280 : vector<8x24xf32>
    %282 = arith.addf %267, %281 : vector<8x24xf32>
    %cst_117 = arith.constant -5.000000e+00 : f32
    %283 = vector.broadcast %cst_117 : f32 to vector<24x256xf32>
    %284 = arith.addf %9, %283 : vector<24x256xf32>
    %cst_118 = arith.constant 0.000000e+00 : f32
    %cst_119 = arith.constant 1.000000e+00 : f32
    %285 = vector.broadcast %cst_118 : f32 to vector<24x256xf32>
    %286 = arith.maximumf %285, %284 : vector<24x256xf32>
    %287 = vector.broadcast %cst_119 : f32 to vector<24x256xf32>
    %288 = arith.minimumf %287, %286 : vector<24x256xf32>
    %cst_120 = arith.constant dense<0.000000e+00> : vector<8x24xf32>
    %289 = tpu.matmul %10, %288, %cst_120 {dimension_numbers = #tpu.dot_dimension_numbers<[1], [1], [0], [0], [0, 0, 1, 0], [], []>} : vector<8x256xf32>, vector<24x256xf32>, vector<8x24xf32> -> vector<8x24xf32>
    %290 = arith.mulf %288, %1 : vector<24x256xf32>
    %cst_121 = arith.constant dense<0.000000e+00> : vector<8x24xf32>
    %291 = tpu.matmul %10, %290, %cst_121 {dimension_numbers = #tpu.dot_dimension_numbers<[1], [1], [0], [0], [0, 0, 1, 0], [], []>} : vector<8x256xf32>, vector<24x256xf32>, vector<8x24xf32> -> vector<8x24xf32>
    %292 = arith.subf %291, %276 : vector<8x24xf32>
    %cst_122 = arith.constant 1.000000e-16 : f32
    %293 = vector.broadcast %cst_122 : f32 to vector<8x24xf32>
    %294 = arith.addf %293, %289 : vector<8x24xf32>
    %295 = arith.divf %291, %294 : vector<8x24xf32>
    %296 = arith.mulf %292, %295 : vector<8x24xf32>
    %297 = arith.addf %282, %296 : vector<8x24xf32>
    %cst_123 = arith.constant -4.000000e+00 : f32
    %298 = vector.broadcast %cst_123 : f32 to vector<24x256xf32>
    %299 = arith.addf %9, %298 : vector<24x256xf32>
    %cst_124 = arith.constant 0.000000e+00 : f32
    %cst_125 = arith.constant 1.000000e+00 : f32
    %300 = vector.broadcast %cst_124 : f32 to vector<24x256xf32>
    %301 = arith.maximumf %300, %299 : vector<24x256xf32>
    %302 = vector.broadcast %cst_125 : f32 to vector<24x256xf32>
    %303 = arith.minimumf %302, %301 : vector<24x256xf32>
    %cst_126 = arith.constant dense<0.000000e+00> : vector<8x24xf32>
    %304 = tpu.matmul %10, %303, %cst_126 {dimension_numbers = #tpu.dot_dimension_numbers<[1], [1], [0], [0], [0, 0, 1, 0], [], []>} : vector<8x256xf32>, vector<24x256xf32>, vector<8x24xf32> -> vector<8x24xf32>
    %305 = arith.mulf %303, %1 : vector<24x256xf32>
    %cst_127 = arith.constant dense<0.000000e+00> : vector<8x24xf32>
    %306 = tpu.matmul %10, %305, %cst_127 {dimension_numbers = #tpu.dot_dimension_numbers<[1], [1], [0], [0], [0, 0, 1, 0], [], []>} : vector<8x256xf32>, vector<24x256xf32>, vector<8x24xf32> -> vector<8x24xf32>
    %307 = arith.subf %306, %291 : vector<8x24xf32>
    %cst_128 = arith.constant 1.000000e-16 : f32
    %308 = vector.broadcast %cst_128 : f32 to vector<8x24xf32>
    %309 = arith.addf %308, %304 : vector<8x24xf32>
    %310 = arith.divf %306, %309 : vector<8x24xf32>
    %311 = arith.mulf %307, %310 : vector<8x24xf32>
    %312 = arith.addf %297, %311 : vector<8x24xf32>
    %cst_129 = arith.constant -3.000000e+00 : f32
    %313 = vector.broadcast %cst_129 : f32 to vector<24x256xf32>
    %314 = arith.addf %9, %313 : vector<24x256xf32>
    %cst_130 = arith.constant 0.000000e+00 : f32
    %cst_131 = arith.constant 1.000000e+00 : f32
    %315 = vector.broadcast %cst_130 : f32 to vector<24x256xf32>
    %316 = arith.maximumf %315, %314 : vector<24x256xf32>
    %317 = vector.broadcast %cst_131 : f32 to vector<24x256xf32>
    %318 = arith.minimumf %317, %316 : vector<24x256xf32>
    %cst_132 = arith.constant dense<0.000000e+00> : vector<8x24xf32>
    %319 = tpu.matmul %10, %318, %cst_132 {dimension_numbers = #tpu.dot_dimension_numbers<[1], [1], [0], [0], [0, 0, 1, 0], [], []>} : vector<8x256xf32>, vector<24x256xf32>, vector<8x24xf32> -> vector<8x24xf32>
    %320 = arith.mulf %318, %1 : vector<24x256xf32>
    %cst_133 = arith.constant dense<0.000000e+00> : vector<8x24xf32>
    %321 = tpu.matmul %10, %320, %cst_133 {dimension_numbers = #tpu.dot_dimension_numbers<[1], [1], [0], [0], [0, 0, 1, 0], [], []>} : vector<8x256xf32>, vector<24x256xf32>, vector<8x24xf32> -> vector<8x24xf32>
    %322 = arith.subf %321, %306 : vector<8x24xf32>
    %cst_134 = arith.constant 1.000000e-16 : f32
    %323 = vector.broadcast %cst_134 : f32 to vector<8x24xf32>
    %324 = arith.addf %323, %319 : vector<8x24xf32>
    %325 = arith.divf %321, %324 : vector<8x24xf32>
    %326 = arith.mulf %322, %325 : vector<8x24xf32>
    %327 = arith.addf %312, %326 : vector<8x24xf32>
    %cst_135 = arith.constant -2.000000e+00 : f32
    %328 = vector.broadcast %cst_135 : f32 to vector<24x256xf32>
    %329 = arith.addf %9, %328 : vector<24x256xf32>
    %cst_136 = arith.constant 0.000000e+00 : f32
    %cst_137 = arith.constant 1.000000e+00 : f32
    %330 = vector.broadcast %cst_136 : f32 to vector<24x256xf32>
    %331 = arith.maximumf %330, %329 : vector<24x256xf32>
    %332 = vector.broadcast %cst_137 : f32 to vector<24x256xf32>
    %333 = arith.minimumf %332, %331 : vector<24x256xf32>
    %cst_138 = arith.constant dense<0.000000e+00> : vector<8x24xf32>
    %334 = tpu.matmul %10, %333, %cst_138 {dimension_numbers = #tpu.dot_dimension_numbers<[1], [1], [0], [0], [0, 0, 1, 0], [], []>} : vector<8x256xf32>, vector<24x256xf32>, vector<8x24xf32> -> vector<8x24xf32>
    %335 = arith.mulf %333, %1 : vector<24x256xf32>
    %cst_139 = arith.constant dense<0.000000e+00> : vector<8x24xf32>
    %336 = tpu.matmul %10, %335, %cst_139 {dimension_numbers = #tpu.dot_dimension_numbers<[1], [1], [0], [0], [0, 0, 1, 0], [], []>} : vector<8x256xf32>, vector<24x256xf32>, vector<8x24xf32> -> vector<8x24xf32>
    %337 = arith.subf %336, %321 : vector<8x24xf32>
    %cst_140 = arith.constant 1.000000e-16 : f32
    %338 = vector.broadcast %cst_140 : f32 to vector<8x24xf32>
    %339 = arith.addf %338, %334 : vector<8x24xf32>
    %340 = arith.divf %336, %339 : vector<8x24xf32>
    %341 = arith.mulf %337, %340 : vector<8x24xf32>
    %342 = arith.addf %327, %341 : vector<8x24xf32>
    %cst_141 = arith.constant -1.000000e+00 : f32
    %343 = vector.broadcast %cst_141 : f32 to vector<24x256xf32>
    %344 = arith.addf %9, %343 : vector<24x256xf32>
    %cst_142 = arith.constant 0.000000e+00 : f32
    %cst_143 = arith.constant 1.000000e+00 : f32
    %345 = vector.broadcast %cst_142 : f32 to vector<24x256xf32>
    %346 = arith.maximumf %345, %344 : vector<24x256xf32>
    %347 = vector.broadcast %cst_143 : f32 to vector<24x256xf32>
    %348 = arith.minimumf %347, %346 : vector<24x256xf32>
    %cst_144 = arith.constant dense<0.000000e+00> : vector<8x24xf32>
    %349 = tpu.matmul %10, %348, %cst_144 {dimension_numbers = #tpu.dot_dimension_numbers<[1], [1], [0], [0], [0, 0, 1, 0], [], []>} : vector<8x256xf32>, vector<24x256xf32>, vector<8x24xf32> -> vector<8x24xf32>
    %350 = arith.mulf %348, %1 : vector<24x256xf32>
    %cst_145 = arith.constant dense<0.000000e+00> : vector<8x24xf32>
    %351 = tpu.matmul %10, %350, %cst_145 {dimension_numbers = #tpu.dot_dimension_numbers<[1], [1], [0], [0], [0, 0, 1, 0], [], []>} : vector<8x256xf32>, vector<24x256xf32>, vector<8x24xf32> -> vector<8x24xf32>
    %352 = arith.subf %351, %336 : vector<8x24xf32>
    %cst_146 = arith.constant 1.000000e-16 : f32
    %353 = vector.broadcast %cst_146 : f32 to vector<8x24xf32>
    %354 = arith.addf %353, %349 : vector<8x24xf32>
    %355 = arith.divf %351, %354 : vector<8x24xf32>
    %356 = arith.mulf %352, %355 : vector<8x24xf32>
    %357 = arith.addf %342, %356 : vector<8x24xf32>
    %cst_147 = arith.constant 0.000000e+00 : f32
    %358 = vector.broadcast %cst_147 : f32 to vector<24x256xf32>
    %359 = arith.addf %9, %358 : vector<24x256xf32>
    %cst_148 = arith.constant 0.000000e+00 : f32
    %cst_149 = arith.constant 1.000000e+00 : f32
    %360 = vector.broadcast %cst_148 : f32 to vector<24x256xf32>
    %361 = arith.maximumf %360, %359 : vector<24x256xf32>
    %362 = vector.broadcast %cst_149 : f32 to vector<24x256xf32>
    %363 = arith.minimumf %362, %361 : vector<24x256xf32>
    %cst_150 = arith.constant dense<0.000000e+00> : vector<8x24xf32>
    %364 = tpu.matmul %10, %363, %cst_150 {dimension_numbers = #tpu.dot_dimension_numbers<[1], [1], [0], [0], [0, 0, 1, 0], [], []>} : vector<8x256xf32>, vector<24x256xf32>, vector<8x24xf32> -> vector<8x24xf32>
    %365 = arith.mulf %363, %1 : vector<24x256xf32>
    %cst_151 = arith.constant dense<0.000000e+00> : vector<8x24xf32>
    %366 = tpu.matmul %10, %365, %cst_151 {dimension_numbers = #tpu.dot_dimension_numbers<[1], [1], [0], [0], [0, 0, 1, 0], [], []>} : vector<8x256xf32>, vector<24x256xf32>, vector<8x24xf32> -> vector<8x24xf32>
    %367 = arith.subf %366, %351 : vector<8x24xf32>
    %cst_152 = arith.constant 1.000000e-16 : f32
    %368 = vector.broadcast %cst_152 : f32 to vector<8x24xf32>
    %369 = arith.addf %368, %364 : vector<8x24xf32>
    %370 = arith.divf %366, %369 : vector<8x24xf32>
    %371 = arith.mulf %367, %370 : vector<8x24xf32>
    %372 = arith.addf %357, %371 : vector<8x24xf32>
    %cst_153 = arith.constant 1.000000e+00 : f32
    %373 = vector.broadcast %cst_153 : f32 to vector<24x256xf32>
    %374 = arith.addf %9, %373 : vector<24x256xf32>
    %cst_154 = arith.constant 0.000000e+00 : f32
    %cst_155 = arith.constant 1.000000e+00 : f32
    %375 = vector.broadcast %cst_154 : f32 to vector<24x256xf32>
    %376 = arith.maximumf %375, %374 : vector<24x256xf32>
    %377 = vector.broadcast %cst_155 : f32 to vector<24x256xf32>
    %378 = arith.minimumf %377, %376 : vector<24x256xf32>
    %cst_156 = arith.constant dense<0.000000e+00> : vector<8x24xf32>
    %379 = tpu.matmul %10, %378, %cst_156 {dimension_numbers = #tpu.dot_dimension_numbers<[1], [1], [0], [0], [0, 0, 1, 0], [], []>} : vector<8x256xf32>, vector<24x256xf32>, vector<8x24xf32> -> vector<8x24xf32>
    %380 = arith.mulf %378, %1 : vector<24x256xf32>
    %cst_157 = arith.constant dense<0.000000e+00> : vector<8x24xf32>
    %381 = tpu.matmul %10, %380, %cst_157 {dimension_numbers = #tpu.dot_dimension_numbers<[1], [1], [0], [0], [0, 0, 1, 0], [], []>} : vector<8x256xf32>, vector<24x256xf32>, vector<8x24xf32> -> vector<8x24xf32>
    %382 = arith.subf %381, %366 : vector<8x24xf32>
    %cst_158 = arith.constant 1.000000e-16 : f32
    %383 = vector.broadcast %cst_158 : f32 to vector<8x24xf32>
    %384 = arith.addf %383, %379 : vector<8x24xf32>
    %385 = arith.divf %381, %384 : vector<8x24xf32>
    %386 = arith.mulf %382, %385 : vector<8x24xf32>
    %387 = arith.addf %372, %386 : vector<8x24xf32>
    %388 = arith.divf %387, %381 : vector<8x24xf32>
    %c0_159 = arith.constant 0 : index
    %c0_160 = arith.constant 0 : index
    %c0_161 = arith.constant 0 : index
    %389 = vector.load %arg3[%c0_159, %c0_160, %c0_161] : memref<1x8x24xf32, #tpu.memory_space<vmem>>, vector<1x8x24xf32>
    %390 = vector.shape_cast %389 : vector<1x8x24xf32> to vector<8x24xf32>
    %391 = vector.shape_cast %388 : vector<8x24xf32> to vector<1x8x24xf32>
    tpu.vector_store %arg3[%c0_159, %c0_160, %c0_161], %391 {strides = array<i32>} : memref<1x8x24xf32, #tpu.memory_space<vmem>>, vector<1x8x24xf32>,
    return
  }
  func.func @transform_0(%arg0: i32) -> (i32, i32) {
    %c0_i32 = arith.constant 0 : i32
    %c0_i32_0 = arith.constant 0 : i32
    return %arg0, %c0_i32 : i32, i32
  }
  func.func @transform_1(%arg0: i32) -> (i32, i32) {
    %c0_i32 = arith.constant 0 : i32
    %c0_i32_0 = arith.constant 0 : i32
    return %arg0, %c0_i32 : i32, i32
  }
  func.func @transform_2(%arg0: i32) -> (i32, i32, i32) {
    %c0_i32 = arith.constant 0 : i32
    %c0_i32_0 = arith.constant 0 : i32
    %c0_i32_1 = arith.constant 0 : i32
    return %arg0, %c0_i32, %c0_i32_0 : i32, i32, i32
  }
}

</mosaic_0001>

<llo_original>
// kernel: tpu_custom_call.1
$region0: #{tpu_custom_call.1}
  #allocation0 [shape = 'u32[]', space=smem, size = 0x4, offset = 0x4, fixed_abs, tag = 'smem constant byte address 0x4 - core index']
  #allocation1 [shape = 'u32[72,128]{1,0:T(1,128)}', space=vmem, size = 0x9000, scoped, tag = 'internal scratch']
  %s0 = inlined_call_operand.hbm [shape: f32[24,256], index: 0, kind: input, shape index: {}]
  %s1 = inlined_call_operand.hbm [shape: f32[24,256], index: 1, kind: input, shape index: {}]
  %s2 = inlined_call_operand.hbm [shape: f32[1,8,24], index: 2, kind: output, shape index: {}]
  %s3 = sld [smem:[#allocation0]]
  $region26: #{tpu_custom_call.1} parent=0
    _
  %s5 = ssub.s32 1, %s3
  %s6 = scalar_select 0, %s5, %s3
  $region1: #{tpu_custom_call.1} parent=0
    #allocation2 [shape = 'u8[24576]{0}', space=vmem, size = 0x6000, scoped, tag = 'input window, operand 0, single buffered']
    #allocation3 [shape = 's32[1]{0}', space=sflag, size = 0x4, scoped, tag = 'scoped memory for tpu_custom_call.1']
    #allocation4 [shape = 's32[1]{0}', space=sflag, size = 0x4, scoped, tag = 'scoped memory for tpu_custom_call.1']
    #allocation5 [shape = 'u8[24576]{0}', space=vmem, size = 0x6000, scoped, tag = 'input window, operand 1, single buffered']
    #allocation6 [shape = 's32[1]{0}', space=sflag, size = 0x4, scoped, tag = 'scoped memory for tpu_custom_call.1']
    #allocation7 [shape = 'u8[4096]{0}', space=vmem, size = 0x1000, scoped, tag = 'output window, operand 0, single buffered']
    %7 = vsyncpa [#allocation3], 0
    %8 = vsyncpa [#allocation6], 0
    %9 = vsyncpa [#allocation4], 0
    // Predicated region
    $region2: #{tpu_custom_call.1} parent=1 // pred_check
      _
    $region3: #{tpu_custom_call.1} parent=1 // pred_check_branch
      %11 = sbr.rel (0) target = $region5
    $region4: #{tpu_custom_call.1} parent=1 // pred_region
      %13 = vsyncadd [#allocation3], 0
      %s14 = sshll.u32 %s0, 4
      %s15 = int_to_ptr.hbm [resolvable:$true] %s14
      %s16 = sshll.u32 [#allocation2], 4
      %s17 = int_to_ptr.vmem [resolvable:$true] %s16
      %22 = dma.hbm_to_vmem [thread:$0]  %s15, 768, %s17, [#allocation3], 256, 256, 16
    $region5: #{tpu_custom_call.1} parent=1 // pred_fallthru
      _
    // Predicated region
    $region6: #{tpu_custom_call.1} parent=1 // pred_check
      _
    $region7: #{tpu_custom_call.1} parent=1 // pred_check_branch
      %24 = sbr.rel (0) target = $region9
    $region8: #{tpu_custom_call.1} parent=1 // pred_region
      %26 = vsyncadd [#allocation6], 0
      %s27 = sshll.u32 %s1, 4
      %s28 = int_to_ptr.hbm [resolvable:$true] %s27
      %s29 = sshll.u32 [#allocation5], 4
      %s30 = int_to_ptr.vmem [resolvable:$true] %s29
      %35 = dma.hbm_to_vmem [thread:$0]  %s28, 768, %s30, [#allocation6], 256, 256, 16
    $region9: #{tpu_custom_call.1} parent=1 // pred_fallthru
      _
    // Predicated region
    $region10: #{tpu_custom_call.1} parent=1 // pred_check
      _
    $region11: #{tpu_custom_call.1} parent=1 // pred_check_branch
      %37 = sbr.rel (0) target = $region13
    $region12: #{tpu_custom_call.1} parent=1 // pred_region
      %39 = dma.done [#allocation3], 768
    $region13: #{tpu_custom_call.1} parent=1 // pred_fallthru
      _
    // Predicated region
    $region14: #{tpu_custom_call.1} parent=1 // pred_check
      _
    $region15: #{tpu_custom_call.1} parent=1 // pred_check_branch
      %41 = sbr.rel (0) target = $region17
    $region16: #{tpu_custom_call.1} parent=1 // pred_region
      %43 = dma.done [#allocation6], 768
    $region17: #{tpu_custom_call.1} parent=1 // pred_fallthru
      _
    %v44 = vld [vmem:[#allocation2] sm:$0xff]
    %v45 = vld [vmem:[#allocation2 + $0x8] sm:$0xff]
    %v46 = vld [vmem:[#allocation2 + $0x10] sm:$0xff]
    %v47 = vld [vmem:[#allocation2 + $0x18] sm:$0xff]
    %v48 = vld [vmem:[#allocation2 + $0x20] sm:$0xff]
    %v49 = vld [vmem:[#allocation2 + $0x28] sm:$0xff]
    %v50 = vld [vmem:[#allocation5] sm:$0xff]
    %v51 = vld [vmem:[#allocation5 + $0x8] sm:$0xff]
    %v52 = vld [vmem:[#allocation5 + $0x10] sm:$0xff]
    %v53 = vld [vmem:[#allocation5 + $0x18] sm:$0xff]
    %v54 = vld [vmem:[#allocation5 + $0x20] sm:$0xff]
    %v55 = vld [vmem:[#allocation5 + $0x28] sm:$0xff]
    %v56 = vmul.f32 %v44, 24.0
    %v57 = vmul.f32 %v45, 24.0
    %v58 = vmul.f32 %v46, 24.0
    %v59 = vmul.f32 %v47, 24.0
    %v60 = vmul.f32 %v48, 24.0
    %v61 = vmul.f32 %v49, 24.0
    %v62 = vmax.f32 %v56, 0.0
    %v63 = vmax.f32 %v57, 0.0
    %v64 = vmax.f32 %v58, 0.0
    %v65 = vmax.f32 %v59, 0.0
    %v66 = vmax.f32 %v60, 0.0
    %v67 = vmax.f32 %v61, 0.0
    %v68 = vmin.f32 %v62, 24.0
    %v69 = vmin.f32 %v63, 24.0
    %v70 = vmin.f32 %v64, 24.0
    %v71 = vmin.f32 %v65, 24.0
    %v72 = vmin.f32 %v66, 24.0
    %v73 = vmin.f32 %v67, 24.0
    %v74 = vadd.f32 %v68, -23.0
    %v75 = vadd.f32 %v69, -23.0
    %v76 = vadd.f32 %v70, -23.0
    %v77 = vadd.f32 %v71, -23.0
    %v78 = vadd.f32 %v72, -23.0
    %v79 = vadd.f32 %v73, -23.0
    %v80 = vmax.f32 %v74, 0.0
    %v81 = vmax.f32 %v75, 0.0
    %v82 = vmax.f32 %v76, 0.0
    %v83 = vmax.f32 %v77, 0.0
    %v84 = vmax.f32 %v78, 0.0
    %v85 = vmax.f32 %v79, 0.0
    %v86 = vmin.f32 %v80, 1.0
    %v87 = vmin.f32 %v81, 1.0
    %v88 = vmin.f32 %v82, 1.0
    %v89 = vmin.f32 %v83, 1.0
    %v90 = vmin.f32 %v84, 1.0
    %v91 = vmin.f32 %v85, 1.0
    %v92 = vmul.f32 %v86, %v50
    %v93 = vmul.f32 %v87, %v51
    %v94 = vmul.f32 %v88, %v52
    %v95 = vmul.f32 %v89, %v53
    %v96 = vmul.f32 %v90, %v54
    %v97 = vmul.f32 %v91, %v55
    %98 = vmatpush.xpose.msra.mxu0 0.0
    %99 = vmatpush.xpose.msra.mxu0 0.0
    %100 = vmatpush.xpose.msra.mxu0 0.0
    %101 = vmatpush.xpose.msra.mxu0 0.0
    %102 = vmatpush.xpose.msra.mxu0 0.0
    %103 = vmatpush.xpose.msra.mxu0 0.0
    %104 = vmatpush.xpose.msra.mxu0 0.0
    %105 = vmatpush.xpose.msra.mxu0 0.0
    %106 = vmatpush.xpose.msra.mxu0 0.0
    %107 = vmatpush.xpose.msra.mxu0 0.0
    %108 = vmatpush.xpose.msra.mxu0 0.0
    %109 = vmatpush.xpose.msra.mxu0 0.0
    %110 = vmatpush.xpose.msra.mxu0 0.0
    %111 = vmatpush.xpose.msra.mxu0 %v96
    %112 = vmatpush.xpose.msra.mxu0 %v94
    %113 = vmatpush.xpose.msra.mxu0 %v92
    %114 = vmatmul.f32.gmra.mxu0 1.0
    %v115 = vpop.f32.mrf.mxu0
    %v116 = vadd.f32 0.0, %v115
    %117 = vdwg.mxu0
    %118 = vmatpush.xpose.msra.mxu0 0.0
    %119 = vmatpush.xpose.msra.mxu0 0.0
    %120 = vmatpush.xpose.msra.mxu0 0.0
    %121 = vmatpush.xpose.msra.mxu0 0.0
    %122 = vmatpush.xpose.msra.mxu0 0.0
    %123 = vmatpush.xpose.msra.mxu0 0.0
    %124 = vmatpush.xpose.msra.mxu0 0.0
    %125 = vmatpush.xpose.msra.mxu0 0.0
    %126 = vmatpush.xpose.msra.mxu0 0.0
    %127 = vmatpush.xpose.msra.mxu0 0.0
    %128 = vmatpush.xpose.msra.mxu0 0.0
    %129 = vmatpush.xpose.msra.mxu0 0.0
    %130 = vmatpush.xpose.msra.mxu0 0.0
    %131 = vmatpush.xpose.msra.mxu0 %v97
    %132 = vmatpush.xpose.msra.mxu0 %v95
    %133 = vmatpush.xpose.msra.mxu0 %v93
    %134 = vmatmul.f32.gmra.mxu0 1.0
    %v135 = vpop.f32.mrf.mxu0
    %v136 = vadd.f32 %v116, %v135
    %137 = vdwg.mxu0
    %138 = vmatpush.xpose.msra.mxu0 0.0
    %139 = vmatpush.xpose.msra.mxu0 0.0
    %140 = vmatpush.xpose.msra.mxu0 0.0
    %141 = vmatpush.xpose.msra.mxu0 0.0
    %142 = vmatpush.xpose.msra.mxu0 0.0
    %143 = vmatpush.xpose.msra.mxu0 0.0
    %144 = vmatpush.xpose.msra.mxu0 0.0
    %145 = vmatpush.xpose.msra.mxu0 0.0
    %146 = vmatpush.xpose.msra.mxu0 0.0
    %147 = vmatpush.xpose.msra.mxu0 0.0
    %148 = vmatpush.xpose.msra.mxu0 0.0
    %149 = vmatpush.xpose.msra.mxu0 0.0
    %150 = vmatpush.xpose.msra.mxu0 0.0
    %151 = vmatpush.xpose.msra.mxu0 %v90
    %152 = vmatpush.xpose.msra.mxu0 %v88
    %153 = vmatpush.xpose.msra.mxu0 %v86
    %154 = vmatmul.f32.gmra.mxu0 1.0
    %v155 = vpop.f32.mrf.mxu0
    %v156 = vadd.f32 1e-16, %v155
    %157 = vdwg.mxu0
    %158 = vmatpush.xpose.msra.mxu0 0.0
    %159 = vmatpush.xpose.msra.mxu0 0.0
    %160 = vmatpush.xpose.msra.mxu0 0.0
    %161 = vmatpush.xpose.msra.mxu0 0.0
    %162 = vmatpush.xpose.msra.mxu0 0.0
    %163 = vmatpush.xpose.msra.mxu0 0.0
    %164 = vmatpush.xpose.msra.mxu0 0.0
    %165 = vmatpush.xpose.msra.mxu0 0.0
    %166 = vmatpush.xpose.msra.mxu0 0.0
    %167 = vmatpush.xpose.msra.mxu0 0.0
    %168 = vmatpush.xpose.msra.mxu0 0.0
    %169 = vmatpush.xpose.msra.mxu0 0.0
    %170 = vmatpush.xpose.msra.mxu0 0.0
    %171 = vmatpush.xpose.msra.mxu0 %v91
    %172 = vmatpush.xpose.msra.mxu0 %v89
    %173 = vmatpush.xpose.msra.mxu0 %v87
    %174 = vmatmul.f32.gmra.mxu0 1.0
    %v175 = vpop.f32.mrf.mxu0
    %v176 = vadd.f32 %v156, %v175
    %177 = vdwg.mxu0
    %v178 = vrcp.pop %v176
    %v179 = vmul.f32 %v176, %v178
    %v180 = vsub.f32 1.0, %v179
    %v181 = vmul.f32 %v178, %v180
    %v182 = vadd.f32 %v178, %v181
    %vm183 = vweird.f32 %v176
    %vm184 = vweird.f32 %v178
    %vm185 = vmor %vm183, %vm184
    %v186 = vsel %vm185, %v178, %v182
    %v187 = vand.u32 2147483647, %v176
    %vm188 = vcmp.eq.f32.partialorder %v187, 8.507059e+37
    %v189 = vand.u32 %v176, 2147483648
    %v190 = vor.u32 1.1754944e-38, %v189
    %v191 = vsel %vm188, %v190, %v186
    %v192 = vmul.f32 %v136, %v191
    %v193 = vmul.f32 %v136, %v192
    %v194 = vadd.f32 %v193, 0.0
    %v195 = vadd.f32 %v68, -22.0
    %v196 = vadd.f32 %v69, -22.0
    %v197 = vadd.f32 %v70, -22.0
    %v198 = vadd.f32 %v71, -22.0
    %v199 = vadd.f32 %v72, -22.0
    %v200 = vadd.f32 %v73, -22.0
    %v201 = vmax.f32 %v195, 0.0
    %v202 = vmax.f32 %v196, 0.0
    %v203 = vmax.f32 %v197, 0.0
    %v204 = vmax.f32 %v198, 0.0
    %v205 = vmax.f32 %v199, 0.0
    %v206 = vmax.f32 %v200, 0.0
    %v207 = vmin.f32 %v201, 1.0
    %v208 = vmin.f32 %v202, 1.0
    %v209 = vmin.f32 %v203, 1.0
    %v210 = vmin.f32 %v204, 1.0
    %v211 = vmin.f32 %v205, 1.0
    %v212 = vmin.f32 %v206, 1.0
    %v213 = vmul.f32 %v207, %v50
    %v214 = vmul.f32 %v208, %v51
    %v215 = vmul.f32 %v209, %v52
    %v216 = vmul.f32 %v210, %v53
    %v217 = vmul.f32 %v211, %v54
    %v218 = vmul.f32 %v212, %v55
    %219 = vmatpush.xpose.msra.mxu0 0.0
    %220 = vmatpush.xpose.msra.mxu0 0.0
    %221 = vmatpush.xpose.msra.mxu0 0.0
    %222 = vmatpush.xpose.msra.mxu0 0.0
    %223 = vmatpush.xpose.msra.mxu0 0.0
    %224 = vmatpush.xpose.msra.mxu0 0.0
    %225 = vmatpush.xpose.msra.mxu0 0.0
    %226 = vmatpush.xpose.msra.mxu0 0.0
    %227 = vmatpush.xpose.msra.mxu0 0.0
    %228 = vmatpush.xpose.msra.mxu0 0.0
    %229 = vmatpush.xpose.msra.mxu0 0.0
    %230 = vmatpush.xpose.msra.mxu0 0.0
    %231 = vmatpush.xpose.msra.mxu0 0.0
    %232 = vmatpush.xpose.msra.mxu0 %v217
    %233 = vmatpush.xpose.msra.mxu0 %v215
    %234 = vmatpush.xpose.msra.mxu0 %v213
    %235 = vmatmul.f32.gmra.mxu0 1.0
    %v236 = vpop.f32.mrf.mxu0
    %v237 = vadd.f32 0.0, %v236
    %238 = vdwg.mxu0
    %239 = vmatpush.xpose.msra.mxu0 0.0
    %240 = vmatpush.xpose.msra.mxu0 0.0
    %241 = vmatpush.xpose.msra.mxu0 0.0
    %242 = vmatpush.xpose.msra.mxu0 0.0
    %243 = vmatpush.xpose.msra.mxu0 0.0
    %244 = vmatpush.xpose.msra.mxu0 0.0
    %245 = vmatpush.xpose.msra.mxu0 0.0
    %246 = vmatpush.xpose.msra.mxu0 0.0
    %247 = vmatpush.xpose.msra.mxu0 0.0
    %248 = vmatpush.xpose.msra.mxu0 0.0
    %249 = vmatpush.xpose.msra.mxu0 0.0
    %250 = vmatpush.xpose.msra.mxu0 0.0
    %251 = vmatpush.xpose.msra.mxu0 0.0
    %252 = vmatpush.xpose.msra.mxu0 %v218
    %253 = vmatpush.xpose.msra.mxu0 %v216
    %254 = vmatpush.xpose.msra.mxu0 %v214
    %255 = vmatmul.f32.gmra.mxu0 1.0
    %v256 = vpop.f32.mrf.mxu0
    %v257 = vadd.f32 %v237, %v256
    %258 = vdwg.mxu0
    %v259 = vsub.f32 %v257, %v136
    %260 = vmatpush.xpose.msra.mxu0 0.0
    %261 = vmatpush.xpose.msra.mxu0 0.0
    %262 = vmatpush.xpose.msra.mxu0 0.0
    %263 = vmatpush.xpose.msra.mxu0 0.0
    %264 = vmatpush.xpose.msra.mxu0 0.0
    %265 = vmatpush.xpose.msra.mxu0 0.0
    %266 = vmatpush.xpose.msra.mxu0 0.0
    %267 = vmatpush.xpose.msra.mxu0 0.0
    %268 = vmatpush.xpose.msra.mxu0 0.0
    %269 = vmatpush.xpose.msra.mxu0 0.0
    %270 = vmatpush.xpose.msra.mxu0 0.0
    %271 = vmatpush.xpose.msra.mxu0 0.0
    %272 = vmatpush.xpose.msra.mxu0 0.0
    %273 = vmatpush.xpose.msra.mxu0 %v211
    %274 = vmatpush.xpose.msra.mxu0 %v209
    %275 = vmatpush.xpose.msra.mxu0 %v207
    %276 = vmatmul.f32.gmra.mxu0 1.0
    %v277 = vpop.f32.mrf.mxu0
    %v278 = vadd.f32 1e-16, %v277
    %279 = vdwg.mxu0
    %280 = vmatpush.xpose.msra.mxu0 0.0
    %281 = vmatpush.xpose.msra.mxu0 0.0
    %282 = vmatpush.xpose.msra.mxu0 0.0
    %283 = vmatpush.xpose.msra.mxu0 0.0
    %284 = vmatpush.xpose.msra.mxu0 0.0
    %285 = vmatpush.xpose.msra.mxu0 0.0
    %286 = vmatpush.xpose.msra.mxu0 0.0
    %287 = vmatpush.xpose.msra.mxu0 0.0
    %288 = vmatpush.xpose.msra.mxu0 0.0
    %289 = vmatpush.xpose.msra.mxu0 0.0
    %290 = vmatpush.xpose.msra.mxu0 0.0
    %291 = vmatpush.xpose.msra.mxu0 0.0
    %292 = vmatpush.xpose.msra.mxu0 0.0
    %293 = vmatpush.xpose.msra.mxu0 %v212
    %294 = vmatpush.xpose.msra.mxu0 %v210
    %295 = vmatpush.xpose.msra.mxu0 %v208
    %296 = vmatmul.f32.gmra.mxu0 1.0
    %v297 = vpop.f32.mrf.mxu0
    %v298 = vadd.f32 %v278, %v297
    %299 = vdwg.mxu0
    %v300 = vrcp.pop %v298
    %v301 = vmul.f32 %v298, %v300
    %v302 = vsub.f32 1.0, %v301
    %v303 = vmul.f32 %v300, %v302
    %v304 = vadd.f32 %v300, %v303
    %vm305 = vweird.f32 %v298
    %vm306 = vweird.f32 %v300
    %vm307 = vmor %vm305, %vm306
    %v308 = vsel %vm307, %v300, %v304
    %v309 = vand.u32 2147483647, %v298
    %vm310 = vcmp.eq.f32.partialorder %v309, 8.507059e+37
    %v311 = vand.u32 %v298, 2147483648
    %v312 = vor.u32 1.1754944e-38, %v311
    %v313 = vsel %vm310, %v312, %v308
    %v314 = vmul.f32 %v257, %v313
    %v315 = vmul.f32 %v259, %v314
    %v316 = vadd.f32 %v194, %v315
    %v317 = vadd.f32 %v68, -21.0
    %v318 = vadd.f32 %v69, -21.0
    %v319 = vadd.f32 %v70, -21.0
    %v320 = vadd.f32 %v71, -21.0
    %v321 = vadd.f32 %v72, -21.0
    %v322 = vadd.f32 %v73, -21.0
    %v323 = vmax.f32 %v317, 0.0
    %v324 = vmax.f32 %v318, 0.0
    %v325 = vmax.f32 %v319, 0.0
    %v326 = vmax.f32 %v320, 0.0
    %v327 = vmax.f32 %v321, 0.0
    %v328 = vmax.f32 %v322, 0.0
    %v329 = vmin.f32 %v323, 1.0
    %v330 = vmin.f32 %v324, 1.0
    %v331 = vmin.f32 %v325, 1.0
    %v332 = vmin.f32 %v326, 1.0
    %v333 = vmin.f32 %v327, 1.0
    %v334 = vmin.f32 %v328, 1.0
    %v335 = vmul.f32 %v329, %v50
    %v336 = vmul.f32 %v330, %v51
    %v337 = vmul.f32 %v331, %v52
    %v338 = vmul.f32 %v332, %v53
    %v339 = vmul.f32 %v333, %v54
    %v340 = vmul.f32 %v334, %v55
    %341 = vmatpush.xpose.msra.mxu0 0.0
    %342 = vmatpush.xpose.msra.mxu0 0.0
    %343 = vmatpush.xpose.msra.mxu0 0.0
    %344 = vmatpush.xpose.msra.mxu0 0.0
    %345 = vmatpush.xpose.msra.mxu0 0.0
    %346 = vmatpush.xpose.msra.mxu0 0.0
    %347 = vmatpush.xpose.msra.mxu0 0.0
    %348 = vmatpush.xpose.msra.mxu0 0.0
    %349 = vmatpush.xpose.msra.mxu0 0.0
    %350 = vmatpush.xpose.msra.mxu0 0.0
    %351 = vmatpush.xpose.msra.mxu0 0.0
    %352 = vmatpush.xpose.msra.mxu0 0.0
    %353 = vmatpush.xpose.msra.mxu0 0.0
    %354 = vmatpush.xpose.msra.mxu0 %v339
    %355 = vmatpush.xpose.msra.mxu0 %v337
    %356 = vmatpush.xpose.msra.mxu0 %v335
    %357 = vmatmul.f32.gmra.mxu0 1.0
    %v358 = vpop.f32.mrf.mxu0
    %v359 = vadd.f32 0.0, %v358
    %360 = vdwg.mxu0
    %361 = vmatpush.xpose.msra.mxu0 0.0
    %362 = vmatpush.xpose.msra.mxu0 0.0
    %363 = vmatpush.xpose.msra.mxu0 0.0
    %364 = vmatpush.xpose.msra.mxu0 0.0
    %365 = vmatpush.xpose.msra.mxu0 0.0
    %366 = vmatpush.xpose.msra.mxu0 0.0
    %367 = vmatpush.xpose.msra.mxu0 0.0
    %368 = vmatpush.xpose.msra.mxu0 0.0
    %369 = vmatpush.xpose.msra.mxu0 0.0
    %370 = vmatpush.xpose.msra.mxu0 0.0
    %371 = vmatpush.xpose.msra.mxu0 0.0
    %372 = vmatpush.xpose.msra.mxu0 0.0
    %373 = vmatpush.xpose.msra.mxu0 0.0
    %374 = vmatpush.xpose.msra.mxu0 %v340
    %375 = vmatpush.xpose.msra.mxu0 %v338
    %376 = vmatpush.xpose.msra.mxu0 %v336
    %377 = vmatmul.f32.gmra.mxu0 1.0
    %v378 = vpop.f32.mrf.mxu0
    %v379 = vadd.f32 %v359, %v378
    %380 = vdwg.mxu0
    %v381 = vsub.f32 %v379, %v257
    %382 = vmatpush.xpose.msra.mxu0 0.0
    %383 = vmatpush.xpose.msra.mxu0 0.0
    %384 = vmatpush.xpose.msra.mxu0 0.0
    %385 = vmatpush.xpose.msra.mxu0 0.0
    %386 = vmatpush.xpose.msra.mxu0 0.0
    %387 = vmatpush.xpose.msra.mxu0 0.0
    %388 = vmatpush.xpose.msra.mxu0 0.0
    %389 = vmatpush.xpose.msra.mxu0 0.0
    %390 = vmatpush.xpose.msra.mxu0 0.0
    %391 = vmatpush.xpose.msra.mxu0 0.0
    %392 = vmatpush.xpose.msra.mxu0 0.0
    %393 = vmatpush.xpose.msra.mxu0 0.0
    %394 = vmatpush.xpose.msra.mxu0 0.0
    %395 = vmatpush.xpose.msra.mxu0 %v333
    %396 = vmatpush.xpose.msra.mxu0 %v331
    %397 = vmatpush.xpose.msra.mxu0 %v329
    %398 = vmatmul.f32.gmra.mxu0 1.0
    %v399 = vpop.f32.mrf.mxu0
    %v400 = vadd.f32 1e-16, %v399
    %401 = vdwg.mxu0
    %402 = vmatpush.xpose.msra.mxu0 0.0
    %403 = vmatpush.xpose.msra.mxu0 0.0
    %404 = vmatpush.xpose.msra.mxu0 0.0
    %405 = vmatpush.xpose.msra.mxu0 0.0
    %406 = vmatpush.xpose.msra.mxu0 0.0
    %407 = vmatpush.xpose.msra.mxu0 0.0
    %408 = vmatpush.xpose.msra.mxu0 0.0
    %409 = vmatpush.xpose.msra.mxu0 0.0
    %410 = vmatpush.xpose.msra.mxu0 0.0
    %411 = vmatpush.xpose.msra.mxu0 0.0
    %412 = vmatpush.xpose.msra.mxu0 0.0
    %413 = vmatpush.xpose.msra.mxu0 0.0
    %414 = vmatpush.xpose.msra.mxu0 0.0
    %415 = vmatpush.xpose.msra.mxu0 %v334
    %416 = vmatpush.xpose.msra.mxu0 %v332
    %417 = vmatpush.xpose.msra.mxu0 %v330
    %418 = vmatmul.f32.gmra.mxu0 1.0
    %v419 = vpop.f32.mrf.mxu0
    %v420 = vadd.f32 %v400, %v419
    %421 = vdwg.mxu0
    %v422 = vrcp.pop %v420
    %v423 = vmul.f32 %v420, %v422
    %v424 = vsub.f32 1.0, %v423
    %v425 = vmul.f32 %v422, %v424
    %v426 = vadd.f32 %v422, %v425
    %vm427 = vweird.f32 %v420
    %vm428 = vweird.f32 %v422
    %vm429 = vmor %vm427, %vm428
    %v430 = vsel %vm429, %v422, %v426
    %v431 = vand.u32 2147483647, %v420
    %vm432 = vcmp.eq.f32.partialorder %v431, 8.507059e+37
    %v433 = vand.u32 %v420, 2147483648
    %v434 = vor.u32 1.1754944e-38, %v433
    %v435 = vsel %vm432, %v434, %v430
    %v436 = vmul.f32 %v379, %v435
    %v437 = vmul.f32 %v381, %v436
    %v438 = vadd.f32 %v316, %v437
    %v439 = vadd.f32 %v68, -20.0
    %v440 = vadd.f32 %v69, -20.0
    %v441 = vadd.f32 %v70, -20.0
    %v442 = vadd.f32 %v71, -20.0
    %v443 = vadd.f32 %v72, -20.0
    %v444 = vadd.f32 %v73, -20.0
    %v445 = vmax.f32 %v439, 0.0
    %v446 = vmax.f32 %v440, 0.0
    %v447 = vmax.f32 %v441, 0.0
    %v448 = vmax.f32 %v442, 0.0
    %v449 = vmax.f32 %v443, 0.0
    %v450 = vmax.f32 %v444, 0.0
    %v451 = vmin.f32 %v445, 1.0
    %v452 = vmin.f32 %v446, 1.0
    %v453 = vmin.f32 %v447, 1.0
    %v454 = vmin.f32 %v448, 1.0
    %v455 = vmin.f32 %v449, 1.0
    %v456 = vmin.f32 %v450, 1.0
    %v457 = vmul.f32 %v451, %v50
    %v458 = vmul.f32 %v452, %v51
    %v459 = vmul.f32 %v453, %v52
    %v460 = vmul.f32 %v454, %v53
    %v461 = vmul.f32 %v455, %v54
    %v462 = vmul.f32 %v456, %v55
    %463 = vmatpush.xpose.msra.mxu0 0.0
    %464 = vmatpush.xpose.msra.mxu0 0.0
    %465 = vmatpush.xpose.msra.mxu0 0.0
    %466 = vmatpush.xpose.msra.mxu0 0.0
    %467 = vmatpush.xpose.msra.mxu0 0.0
    %468 = vmatpush.xpose.msra.mxu0 0.0
    %469 = vmatpush.xpose.msra.mxu0 0.0
    %470 = vmatpush.xpose.msra.mxu0 0.0
    %471 = vmatpush.xpose.msra.mxu0 0.0
    %472 = vmatpush.xpose.msra.mxu0 0.0
    %473 = vmatpush.xpose.msra.mxu0 0.0
    %474 = vmatpush.xpose.msra.mxu0 0.0
    %475 = vmatpush.xpose.msra.mxu0 0.0
    %476 = vmatpush.xpose.msra.mxu0 %v461
    %477 = vmatpush.xpose.msra.mxu0 %v459
    %478 = vmatpush.xpose.msra.mxu0 %v457
    %479 = vmatmul.f32.gmra.mxu0 1.0
    %v480 = vpop.f32.mrf.mxu0
    %v481 = vadd.f32 0.0, %v480
    %482 = vdwg.mxu0
    %483 = vmatpush.xpose.msra.mxu0 0.0
    %484 = vmatpush.xpose.msra.mxu0 0.0
    %485 = vmatpush.xpose.msra.mxu0 0.0
    %486 = vmatpush.xpose.msra.mxu0 0.0
    %487 = vmatpush.xpose.msra.mxu0 0.0
    %488 = vmatpush.xpose.msra.mxu0 0.0
    %489 = vmatpush.xpose.msra.mxu0 0.0
    %490 = vmatpush.xpose.msra.mxu0 0.0
    %491 = vmatpush.xpose.msra.mxu0 0.0
    %492 = vmatpush.xpose.msra.mxu0 0.0
    %493 = vmatpush.xpose.msra.mxu0 0.0
    %494 = vmatpush.xpose.msra.mxu0 0.0
    %495 = vmatpush.xpose.msra.mxu0 0.0
    %496 = vmatpush.xpose.msra.mxu0 %v462
    %497 = vmatpush.xpose.msra.mxu0 %v460
    %498 = vmatpush.xpose.msra.mxu0 %v458
    %499 = vmatmul.f32.gmra.mxu0 1.0
    %v500 = vpop.f32.mrf.mxu0
    %v501 = vadd.f32 %v481, %v500
    %502 = vdwg.mxu0
    %v503 = vsub.f32 %v501, %v379
    %504 = vmatpush.xpose.msra.mxu0 0.0
    %505 = vmatpush.xpose.msra.mxu0 0.0
    %506 = vmatpush.xpose.msra.mxu0 0.0
    %507 = vmatpush.xpose.msra.mxu0 0.0
    %508 = vmatpush.xpose.msra.mxu0 0.0
    %509 = vmatpush.xpose.msra.mxu0 0.0
    %510 = vmatpush.xpose.msra.mxu0 0.0
    %511 = vmatpush.xpose.msra.mxu0 0.0
    %512 = vmatpush.xpose.msra.mxu0 0.0
    %513 = vmatpush.xpose.msra.mxu0 0.0
    %514 = vmatpush.xpose.msra.mxu0 0.0
    %515 = vmatpush.xpose.msra.mxu0 0.0
    %516 = vmatpush.xpose.msra.mxu0 0.0
    %517 = vmatpush.xpose.msra.mxu0 %v455
    %518 = vmatpush.xpose.msra.mxu0 %v453
    %519 = vmatpush.xpose.msra.mxu0 %v451
    %520 = vmatmul.f32.gmra.mxu0 1.0
    %v521 = vpop.f32.mrf.mxu0
    %v522 = vadd.f32 1e-16, %v521
    %523 = vdwg.mxu0
    %524 = vmatpush.xpose.msra.mxu0 0.0
    %525 = vmatpush.xpose.msra.mxu0 0.0
    %526 = vmatpush.xpose.msra.mxu0 0.0
    %527 = vmatpush.xpose.msra.mxu0 0.0
    %528 = vmatpush.xpose.msra.mxu0 0.0
    %529 = vmatpush.xpose.msra.mxu0 0.0
    %530 = vmatpush.xpose.msra.mxu0 0.0
    %531 = vmatpush.xpose.msra.mxu0 0.0
    %532 = vmatpush.xpose.msra.mxu0 0.0
    %533 = vmatpush.xpose.msra.mxu0 0.0
    %534 = vmatpush.xpose.msra.mxu0 0.0
    %535 = vmatpush.xpose.msra.mxu0 0.0
    %536 = vmatpush.xpose.msra.mxu0 0.0
    %537 = vmatpush.xpose.msra.mxu0 %v456
    %538 = vmatpush.xpose.msra.mxu0 %v454
    %539 = vmatpush.xpose.msra.mxu0 %v452
    %540 = vmatmul.f32.gmra.mxu0 1.0
    %v541 = vpop.f32.mrf.mxu0
    %v542 = vadd.f32 %v522, %v541
    %543 = vdwg.mxu0
    %v544 = vrcp.pop %v542
    %v545 = vmul.f32 %v542, %v544
    %v546 = vsub.f32 1.0, %v545
    %v547 = vmul.f32 %v544, %v546
    %v548 = vadd.f32 %v544, %v547
    %vm549 = vweird.f32 %v542
    %vm550 = vweird.f32 %v544
    %vm551 = vmor %vm549, %vm550
    %v552 = vsel %vm551, %v544, %v548
    %v553 = vand.u32 2147483647, %v542
    %vm554 = vcmp.eq.f32.partialorder %v553, 8.507059e+37
    %v555 = vand.u32 %v542, 2147483648
    %v556 = vor.u32 1.1754944e-38, %v555
    %v557 = vsel %vm554, %v556, %v552
    %v558 = vmul.f32 %v501, %v557
    %v559 = vmul.f32 %v503, %v558
    %v560 = vadd.f32 %v438, %v559
    %v561 = vadd.f32 %v68, -19.0
    %v562 = vadd.f32 %v69, -19.0
    %v563 = vadd.f32 %v70, -19.0
    %v564 = vadd.f32 %v71, -19.0
    %v565 = vadd.f32 %v72, -19.0
    %v566 = vadd.f32 %v73, -19.0
    %v567 = vmax.f32 %v561, 0.0
    %v568 = vmax.f32 %v562, 0.0
    %v569 = vmax.f32 %v563, 0.0
    %v570 = vmax.f32 %v564, 0.0
    %v571 = vmax.f32 %v565, 0.0
    %v572 = vmax.f32 %v566, 0.0
    %v573 = vmin.f32 %v567, 1.0
    %v574 = vmin.f32 %v568, 1.0
    %v575 = vmin.f32 %v569, 1.0
    %v576 = vmin.f32 %v570, 1.0
    %v577 = vmin.f32 %v571, 1.0
    %v578 = vmin.f32 %v572, 1.0
    %v579 = vmul.f32 %v573, %v50
    %v580 = vmul.f32 %v574, %v51
    %v581 = vmul.f32 %v575, %v52
    %v582 = vmul.f32 %v576, %v53
    %v583 = vmul.f32 %v577, %v54
    %v584 = vmul.f32 %v578, %v55
    %585 = vmatpush.xpose.msra.mxu0 0.0
    %586 = vmatpush.xpose.msra.mxu0 0.0
    %587 = vmatpush.xpose.msra.mxu0 0.0
    %588 = vmatpush.xpose.msra.mxu0 0.0
    %589 = vmatpush.xpose.msra.mxu0 0.0
    %590 = vmatpush.xpose.msra.mxu0 0.0
    %591 = vmatpush.xpose.msra.mxu0 0.0
    %592 = vmatpush.xpose.msra.mxu0 0.0
    %593 = vmatpush.xpose.msra.mxu0 0.0
    %594 = vmatpush.xpose.msra.mxu0 0.0
    %595 = vmatpush.xpose.msra.mxu0 0.0
    %596 = vmatpush.xpose.msra.mxu0 0.0
    %597 = vmatpush.xpose.msra.mxu0 0.0
    %598 = vmatpush.xpose.msra.mxu0 %v583
    %599 = vmatpush.xpose.msra.mxu0 %v581
    %600 = vmatpush.xpose.msra.mxu0 %v579
    %601 = vmatmul.f32.gmra.mxu0 1.0
    %v602 = vpop.f32.mrf.mxu0
    %v603 = vadd.f32 0.0, %v602
    %604 = vdwg.mxu0
    %605 = vmatpush.xpose.msra.mxu0 0.0
    %606 = vmatpush.xpose.msra.mxu0 0.0
    %607 = vmatpush.xpose.msra.mxu0 0.0
    %608 = vmatpush.xpose.msra.mxu0 0.0
    %609 = vmatpush.xpose.msra.mxu0 0.0
    %610 = vmatpush.xpose.msra.mxu0 0.0
    %611 = vmatpush.xpose.msra.mxu0 0.0
    %612 = vmatpush.xpose.msra.mxu0 0.0
    %613 = vmatpush.xpose.msra.mxu0 0.0
    %614 = vmatpush.xpose.msra.mxu0 0.0
    %615 = vmatpush.xpose.msra.mxu0 0.0
    %616 = vmatpush.xpose.msra.mxu0 0.0
    %617 = vmatpush.xpose.msra.mxu0 0.0
    %618 = vmatpush.xpose.msra.mxu0 %v584
    %619 = vmatpush.xpose.msra.mxu0 %v582
    %620 = vmatpush.xpose.msra.mxu0 %v580
    %621 = vmatmul.f32.gmra.mxu0 1.0
    %v622 = vpop.f32.mrf.mxu0
    %v623 = vadd.f32 %v603, %v622
    %624 = vdwg.mxu0
    %v625 = vsub.f32 %v623, %v501
    %626 = vmatpush.xpose.msra.mxu0 0.0
    %627 = vmatpush.xpose.msra.mxu0 0.0
    %628 = vmatpush.xpose.msra.mxu0 0.0
    %629 = vmatpush.xpose.msra.mxu0 0.0
    %630 = vmatpush.xpose.msra.mxu0 0.0
    %631 = vmatpush.xpose.msra.mxu0 0.0
    %632 = vmatpush.xpose.msra.mxu0 0.0
    %633 = vmatpush.xpose.msra.mxu0 0.0
    %634 = vmatpush.xpose.msra.mxu0 0.0
    %635 = vmatpush.xpose.msra.mxu0 0.0
    %636 = vmatpush.xpose.msra.mxu0 0.0
    %637 = vmatpush.xpose.msra.mxu0 0.0
    %638 = vmatpush.xpose.msra.mxu0 0.0
    %639 = vmatpush.xpose.msra.mxu0 %v577
    %640 = vmatpush.xpose.msra.mxu0 %v575
    %641 = vmatpush.xpose.msra.mxu0 %v573
    %642 = vmatmul.f32.gmra.mxu0 1.0
    %v643 = vpop.f32.mrf.mxu0
    %v644 = vadd.f32 1e-16, %v643
    %645 = vdwg.mxu0
    %646 = vmatpush.xpose.msra.mxu0 0.0
    %647 = vmatpush.xpose.msra.mxu0 0.0
    %648 = vmatpush.xpose.msra.mxu0 0.0
    %649 = vmatpush.xpose.msra.mxu0 0.0
    %650 = vmatpush.xpose.msra.mxu0 0.0
    %651 = vmatpush.xpose.msra.mxu0 0.0
    %652 = vmatpush.xpose.msra.mxu0 0.0
    %653 = vmatpush.xpose.msra.mxu0 0.0
    %654 = vmatpush.xpose.msra.mxu0 0.0
    %655 = vmatpush.xpose.msra.mxu0 0.0
    %656 = vmatpush.xpose.msra.mxu0 0.0
    %657 = vmatpush.xpose.msra.mxu0 0.0
    %658 = vmatpush.xpose.msra.mxu0 0.0
    %659 = vmatpush.xpose.msra.mxu0 %v578
    %660 = vmatpush.xpose.msra.mxu0 %v576
    %661 = vmatpush.xpose.msra.mxu0 %v574
    %662 = vmatmul.f32.gmra.mxu0 1.0
    %v663 = vpop.f32.mrf.mxu0
    %v664 = vadd.f32 %v644, %v663
    %665 = vdwg.mxu0
    %v666 = vrcp.pop %v664
    %v667 = vmul.f32 %v664, %v666
    %v668 = vsub.f32 1.0, %v667
    %v669 = vmul.f32 %v666, %v668
    %v670 = vadd.f32 %v666, %v669
    %vm671 = vweird.f32 %v664
    %vm672 = vweird.f32 %v666
    %vm673 = vmor %vm671, %vm672
    %v674 = vsel %vm673, %v666, %v670
    %v675 = vand.u32 2147483647, %v664
    %vm676 = vcmp.eq.f32.partialorder %v675, 8.507059e+37
    %v677 = vand.u32 %v664, 2147483648
    %v678 = vor.u32 1.1754944e-38, %v677
    %v679 = vsel %vm676, %v678, %v674
    %v680 = vmul.f32 %v623, %v679
    %v681 = vmul.f32 %v625, %v680
    %v682 = vadd.f32 %v560, %v681
    %v683 = vadd.f32 %v68, -18.0
    %v684 = vadd.f32 %v69, -18.0
    %v685 = vadd.f32 %v70, -18.0
    %v686 = vadd.f32 %v71, -18.0
    %v687 = vadd.f32 %v72, -18.0
    %v688 = vadd.f32 %v73, -18.0
    %v689 = vmax.f32 %v683, 0.0
    %v690 = vmax.f32 %v684, 0.0
    %v691 = vmax.f32 %v685, 0.0
    %v692 = vmax.f32 %v686, 0.0
    %v693 = vmax.f32 %v687, 0.0
    %v694 = vmax.f32 %v688, 0.0
    %v695 = vmin.f32 %v689, 1.0
    %v696 = vmin.f32 %v690, 1.0
    %v697 = vmin.f32 %v691, 1.0
    %v698 = vmin.f32 %v692, 1.0
    %v699 = vmin.f32 %v693, 1.0
    %v700 = vmin.f32 %v694, 1.0
    %v701 = vmul.f32 %v695, %v50
    %v702 = vmul.f32 %v696, %v51
    %v703 = vmul.f32 %v697, %v52
    %v704 = vmul.f32 %v698, %v53
    %v705 = vmul.f32 %v699, %v54
    %v706 = vmul.f32 %v700, %v55
    %707 = vmatpush.xpose.msra.mxu0 0.0
    %708 = vmatpush.xpose.msra.mxu0 0.0
    %709 = vmatpush.xpose.msra.mxu0 0.0
    %710 = vmatpush.xpose.msra.mxu0 0.0
    %711 = vmatpush.xpose.msra.mxu0 0.0
    %712 = vmatpush.xpose.msra.mxu0 0.0
    %713 = vmatpush.xpose.msra.mxu0 0.0
    %714 = vmatpush.xpose.msra.mxu0 0.0
    %715 = vmatpush.xpose.msra.mxu0 0.0
    %716 = vmatpush.xpose.msra.mxu0 0.0
    %717 = vmatpush.xpose.msra.mxu0 0.0
    %718 = vmatpush.xpose.msra.mxu0 0.0
    %719 = vmatpush.xpose.msra.mxu0 0.0
    %720 = vmatpush.xpose.msra.mxu0 %v705
    %721 = vmatpush.xpose.msra.mxu0 %v703
    %722 = vmatpush.xpose.msra.mxu0 %v701
    %723 = vmatmul.f32.gmra.mxu0 1.0
    %v724 = vpop.f32.mrf.mxu0
    %v725 = vadd.f32 0.0, %v724
    %726 = vdwg.mxu0
    %727 = vmatpush.xpose.msra.mxu0 0.0
    %728 = vmatpush.xpose.msra.mxu0 0.0
    %729 = vmatpush.xpose.msra.mxu0 0.0
    %730 = vmatpush.xpose.msra.mxu0 0.0
    %731 = vmatpush.xpose.msra.mxu0 0.0
    %732 = vmatpush.xpose.msra.mxu0 0.0
    %733 = vmatpush.xpose.msra.mxu0 0.0
    %734 = vmatpush.xpose.msra.mxu0 0.0
    %735 = vmatpush.xpose.msra.mxu0 0.0
    %736 = vmatpush.xpose.msra.mxu0 0.0
    %737 = vmatpush.xpose.msra.mxu0 0.0
    %738 = vmatpush.xpose.msra.mxu0 0.0
    %739 = vmatpush.xpose.msra.mxu0 0.0
    %740 = vmatpush.xpose.msra.mxu0 %v706
    %741 = vmatpush.xpose.msra.mxu0 %v704
    %742 = vmatpush.xpose.msra.mxu0 %v702
    %743 = vmatmul.f32.gmra.mxu0 1.0
    %v744 = vpop.f32.mrf.mxu0
    %v745 = vadd.f32 %v725, %v744
    %746 = vdwg.mxu0
    %v747 = vsub.f32 %v745, %v623
    %748 = vmatpush.xpose.msra.mxu0 0.0
    %749 = vmatpush.xpose.msra.mxu0 0.0
    %750 = vmatpush.xpose.msra.mxu0 0.0
    %751 = vmatpush.xpose.msra.mxu0 0.0
    %752 = vmatpush.xpose.msra.mxu0 0.0
    %753 = vmatpush.xpose.msra.mxu0 0.0
    %754 = vmatpush.xpose.msra.mxu0 0.0
    %755 = vmatpush.xpose.msra.mxu0 0.0
    %756 = vmatpush.xpose.msra.mxu0 0.0
    %757 = vmatpush.xpose.msra.mxu0 0.0
    %758 = vmatpush.xpose.msra.mxu0 0.0
    %759 = vmatpush.xpose.msra.mxu0 0.0
    %760 = vmatpush.xpose.msra.mxu0 0.0
    %761 = vmatpush.xpose.msra.mxu0 %v699
    %762 = vmatpush.xpose.msra.mxu0 %v697
    %763 = vmatpush.xpose.msra.mxu0 %v695
    %764 = vmatmul.f32.gmra.mxu0 1.0
    %v765 = vpop.f32.mrf.mxu0
    %v766 = vadd.f32 1e-16, %v765
    %767 = vdwg.mxu0
    %768 = vmatpush.xpose.msra.mxu0 0.0
    %769 = vmatpush.xpose.msra.mxu0 0.0
    %770 = vmatpush.xpose.msra.mxu0 0.0
    %771 = vmatpush.xpose.msra.mxu0 0.0
    %772 = vmatpush.xpose.msra.mxu0 0.0
    %773 = vmatpush.xpose.msra.mxu0 0.0
    %774 = vmatpush.xpose.msra.mxu0 0.0
    %775 = vmatpush.xpose.msra.mxu0 0.0
    %776 = vmatpush.xpose.msra.mxu0 0.0
    %777 = vmatpush.xpose.msra.mxu0 0.0
    %778 = vmatpush.xpose.msra.mxu0 0.0
    %779 = vmatpush.xpose.msra.mxu0 0.0
    %780 = vmatpush.xpose.msra.mxu0 0.0
    %781 = vmatpush.xpose.msra.mxu0 %v700
    %782 = vmatpush.xpose.msra.mxu0 %v698
    %783 = vmatpush.xpose.msra.mxu0 %v696
    %784 = vmatmul.f32.gmra.mxu0 1.0
    %v785 = vpop.f32.mrf.mxu0
    %v786 = vadd.f32 %v766, %v785
    %787 = vdwg.mxu0
    %v788 = vrcp.pop %v786
    %v789 = vmul.f32 %v786, %v788
    %v790 = vsub.f32 1.0, %v789
    %v791 = vmul.f32 %v788, %v790
    %v792 = vadd.f32 %v788, %v791
    %vm793 = vweird.f32 %v786
    %vm794 = vweird.f32 %v788
    %vm795 = vmor %vm793, %vm794
    %v796 = vsel %vm795, %v788, %v792
    %v797 = vand.u32 2147483647, %v786
    %vm798 = vcmp.eq.f32.partialorder %v797, 8.507059e+37
    %v799 = vand.u32 %v786, 2147483648
    %v800 = vor.u32 1.1754944e-38, %v799
    %v801 = vsel %vm798, %v800, %v796
    %v802 = vmul.f32 %v745, %v801
    %v803 = vmul.f32 %v747, %v802
    %v804 = vadd.f32 %v682, %v803
    %v805 = vadd.f32 %v68, -17.0
    %v806 = vadd.f32 %v69, -17.0
    %v807 = vadd.f32 %v70, -17.0
    %v808 = vadd.f32 %v71, -17.0
    %v809 = vadd.f32 %v72, -17.0
    %v810 = vadd.f32 %v73, -17.0
    %v811 = vmax.f32 %v805, 0.0
    %v812 = vmax.f32 %v806, 0.0
    %v813 = vmax.f32 %v807, 0.0
    %v814 = vmax.f32 %v808, 0.0
    %v815 = vmax.f32 %v809, 0.0
    %v816 = vmax.f32 %v810, 0.0
    %v817 = vmin.f32 %v811, 1.0
    %v818 = vmin.f32 %v812, 1.0
    %v819 = vmin.f32 %v813, 1.0
    %v820 = vmin.f32 %v814, 1.0
    %v821 = vmin.f32 %v815, 1.0
    %v822 = vmin.f32 %v816, 1.0
    %v823 = vmul.f32 %v817, %v50
    %v824 = vmul.f32 %v818, %v51
    %v825 = vmul.f32 %v819, %v52
    %v826 = vmul.f32 %v820, %v53
    %v827 = vmul.f32 %v821, %v54
    %v828 = vmul.f32 %v822, %v55
    %829 = vmatpush.xpose.msra.mxu0 0.0
    %830 = vmatpush.xpose.msra.mxu0 0.0
    %831 = vmatpush.xpose.msra.mxu0 0.0
    %832 = vmatpush.xpose.msra.mxu0 0.0
    %833 = vmatpush.xpose.msra.mxu0 0.0
    %834 = vmatpush.xpose.msra.mxu0 0.0
    %835 = vmatpush.xpose.msra.mxu0 0.0
    %836 = vmatpush.xpose.msra.mxu0 0.0
    %837 = vmatpush.xpose.msra.mxu0 0.0
    %838 = vmatpush.xpose.msra.mxu0 0.0
    %839 = vmatpush.xpose.msra.mxu0 0.0
    %840 = vmatpush.xpose.msra.mxu0 0.0
    %841 = vmatpush.xpose.msra.mxu0 0.0
    %842 = vmatpush.xpose.msra.mxu0 %v827
    %843 = vmatpush.xpose.msra.mxu0 %v825
    %844 = vmatpush.xpose.msra.mxu0 %v823
    %845 = vmatmul.f32.gmra.mxu0 1.0
    %v846 = vpop.f32.mrf.mxu0
    %v847 = vadd.f32 0.0, %v846
    %848 = vdwg.mxu0
    %849 = vmatpush.xpose.msra.mxu0 0.0
    %850 = vmatpush.xpose.msra.mxu0 0.0
    %851 = vmatpush.xpose.msra.mxu0 0.0
    %852 = vmatpush.xpose.msra.mxu0 0.0
    %853 = vmatpush.xpose.msra.mxu0 0.0
    %854 = vmatpush.xpose.msra.mxu0 0.0
    %855 = vmatpush.xpose.msra.mxu0 0.0
    %856 = vmatpush.xpose.msra.mxu0 0.0
    %857 = vmatpush.xpose.msra.mxu0 0.0
    %858 = vmatpush.xpose.msra.mxu0 0.0
    %859 = vmatpush.xpose.msra.mxu0 0.0
    %860 = vmatpush.xpose.msra.mxu0 0.0
    %861 = vmatpush.xpose.msra.mxu0 0.0
    %862 = vmatpush.xpose.msra.mxu0 %v828
    %863 = vmatpush.xpose.msra.mxu0 %v826
    %864 = vmatpush.xpose.msra.mxu0 %v824
    %865 = vmatmul.f32.gmra.mxu0 1.0
    %v866 = vpop.f32.mrf.mxu0
    %v867 = vadd.f32 %v847, %v866
    %868 = vdwg.mxu0
    %v869 = vsub.f32 %v867, %v745
    %870 = vmatpush.xpose.msra.mxu0 0.0
    %871 = vmatpush.xpose.msra.mxu0 0.0
    %872 = vmatpush.xpose.msra.mxu0 0.0
    %873 = vmatpush.xpose.msra.mxu0 0.0
    %874 = vmatpush.xpose.msra.mxu0 0.0
    %875 = vmatpush.xpose.msra.mxu0 0.0
    %876 = vmatpush.xpose.msra.mxu0 0.0
    %877 = vmatpush.xpose.msra.mxu0 0.0
    %878 = vmatpush.xpose.msra.mxu0 0.0
    %879 = vmatpush.xpose.msra.mxu0 0.0
    %880 = vmatpush.xpose.msra.mxu0 0.0
    %881 = vmatpush.xpose.msra.mxu0 0.0
    %882 = vmatpush.xpose.msra.mxu0 0.0
    %883 = vmatpush.xpose.msra.mxu0 %v821
    %884 = vmatpush.xpose.msra.mxu0 %v819
    %885 = vmatpush.xpose.msra.mxu0 %v817
    %886 = vmatmul.f32.gmra.mxu0 1.0
    %v887 = vpop.f32.mrf.mxu0
    %v888 = vadd.f32 1e-16, %v887
    %889 = vdwg.mxu0
    %890 = vmatpush.xpose.msra.mxu0 0.0
    %891 = vmatpush.xpose.msra.mxu0 0.0
    %892 = vmatpush.xpose.msra.mxu0 0.0
    %893 = vmatpush.xpose.msra.mxu0 0.0
    %894 = vmatpush.xpose.msra.mxu0 0.0
    %895 = vmatpush.xpose.msra.mxu0 0.0
    %896 = vmatpush.xpose.msra.mxu0 0.0
    %897 = vmatpush.xpose.msra.mxu0 0.0
    %898 = vmatpush.xpose.msra.mxu0 0.0
    %899 = vmatpush.xpose.msra.mxu0 0.0
    %900 = vmatpush.xpose.msra.mxu0 0.0
    %901 = vmatpush.xpose.msra.mxu0 0.0
    %902 = vmatpush.xpose.msra.mxu0 0.0
    %903 = vmatpush.xpose.msra.mxu0 %v822
    %904 = vmatpush.xpose.msra.mxu0 %v820
    %905 = vmatpush.xpose.msra.mxu0 %v818
    %906 = vmatmul.f32.gmra.mxu0 1.0
    %v907 = vpop.f32.mrf.mxu0
    %v908 = vadd.f32 %v888, %v907
    %909 = vdwg.mxu0
    %v910 = vrcp.pop %v908
    %v911 = vmul.f32 %v908, %v910
    %v912 = vsub.f32 1.0, %v911
    %v913 = vmul.f32 %v910, %v912
    %v914 = vadd.f32 %v910, %v913
    %vm915 = vweird.f32 %v908
    %vm916 = vweird.f32 %v910
    %vm917 = vmor %vm915, %vm916
    %v918 = vsel %vm917, %v910, %v914
    %v919 = vand.u32 2147483647, %v908
    %vm920 = vcmp.eq.f32.partialorder %v919, 8.507059e+37
    %v921 = vand.u32 %v908, 2147483648
    %v922 = vor.u32 1.1754944e-38, %v921
    %v923 = vsel %vm920, %v922, %v918
    %v924 = vmul.f32 %v867, %v923
    %v925 = vmul.f32 %v869, %v924
    %v926 = vadd.f32 %v804, %v925
    %v927 = vadd.f32 %v68, -16.0
    %v928 = vadd.f32 %v69, -16.0
    %v929 = vadd.f32 %v70, -16.0
    %v930 = vadd.f32 %v71, -16.0
    %v931 = vadd.f32 %v72, -16.0
    %v932 = vadd.f32 %v73, -16.0
    %v933 = vmax.f32 %v927, 0.0
    %v934 = vmax.f32 %v928, 0.0
    %v935 = vmax.f32 %v929, 0.0
    %v936 = vmax.f32 %v930, 0.0
    %v937 = vmax.f32 %v931, 0.0
    %v938 = vmax.f32 %v932, 0.0
    %v939 = vmin.f32 %v933, 1.0
    %v940 = vmin.f32 %v934, 1.0
    %v941 = vmin.f32 %v935, 1.0
    %v942 = vmin.f32 %v936, 1.0
    %v943 = vmin.f32 %v937, 1.0
    %v944 = vmin.f32 %v938, 1.0
    %v945 = vmul.f32 %v939, %v50
    %v946 = vmul.f32 %v940, %v51
    %v947 = vmul.f32 %v941, %v52
    %v948 = vmul.f32 %v942, %v53
    %v949 = vmul.f32 %v943, %v54
    %v950 = vmul.f32 %v944, %v55
    %951 = vmatpush.xpose.msra.mxu0 0.0
    %952 = vmatpush.xpose.msra.mxu0 0.0
    %953 = vmatpush.xpose.msra.mxu0 0.0
    %954 = vmatpush.xpose.msra.mxu0 0.0
    %955 = vmatpush.xpose.msra.mxu0 0.0
    %956 = vmatpush.xpose.msra.mxu0 0.0
    %957 = vmatpush.xpose.msra.mxu0 0.0
    %958 = vmatpush.xpose.msra.mxu0 0.0
    %959 = vmatpush.xpose.msra.mxu0 0.0
    %960 = vmatpush.xpose.msra.mxu0 0.0
    %961 = vmatpush.xpose.msra.mxu0 0.0
    %962 = vmatpush.xpose.msra.mxu0 0.0
    %963 = vmatpush.xpose.msra.mxu0 0.0
    %964 = vmatpush.xpose.msra.mxu0 %v949
    %965 = vmatpush.xpose.msra.mxu0 %v947
    %966 = vmatpush.xpose.msra.mxu0 %v945
    %967 = vmatmul.f32.gmra.mxu0 1.0
    %v968 = vpop.f32.mrf.mxu0
    %v969 = vadd.f32 0.0, %v968
    %970 = vdwg.mxu0
    %971 = vmatpush.xpose.msra.mxu0 0.0
    %972 = vmatpush.xpose.msra.mxu0 0.0
    %973 = vmatpush.xpose.msra.mxu0 0.0
    %974 = vmatpush.xpose.msra.mxu0 0.0
    %975 = vmatpush.xpose.msra.mxu0 0.0
    %976 = vmatpush.xpose.msra.mxu0 0.0
    %977 = vmatpush.xpose.msra.mxu0 0.0
    %978 = vmatpush.xpose.msra.mxu0 0.0
    %979 = vmatpush.xpose.msra.mxu0 0.0
    %980 = vmatpush.xpose.msra.mxu0 0.0
    %981 = vmatpush.xpose.msra.mxu0 0.0
    %982 = vmatpush.xpose.msra.mxu0 0.0
    %983 = vmatpush.xpose.msra.mxu0 0.0
    %984 = vmatpush.xpose.msra.mxu0 %v950
    %985 = vmatpush.xpose.msra.mxu0 %v948
    %986 = vmatpush.xpose.msra.mxu0 %v946
    %987 = vmatmul.f32.gmra.mxu0 1.0
    %v988 = vpop.f32.mrf.mxu0
    %v989 = vadd.f32 %v969, %v988
    %990 = vdwg.mxu0
    %v991 = vsub.f32 %v989, %v867
    %992 = vmatpush.xpose.msra.mxu0 0.0
    %993 = vmatpush.xpose.msra.mxu0 0.0
    %994 = vmatpush.xpose.msra.mxu0 0.0
    %995 = vmatpush.xpose.msra.mxu0 0.0
    %996 = vmatpush.xpose.msra.mxu0 0.0
    %997 = vmatpush.xpose.msra.mxu0 0.0
    %998 = vmatpush.xpose.msra.mxu0 0.0
    %999 = vmatpush.xpose.msra.mxu0 0.0
    %1000 = vmatpush.xpose.msra.mxu0 0.0
    %1001 = vmatpush.xpose.msra.mxu0 0.0
    %1002 = vmatpush.xpose.msra.mxu0 0.0
    %1003 = vmatpush.xpose.msra.mxu0 0.0
    %1004 = vmatpush.xpose.msra.mxu0 0.0
    %1005 = vmatpush.xpose.msra.mxu0 %v943
    %1006 = vmatpush.xpose.msra.mxu0 %v941
    %1007 = vmatpush.xpose.msra.mxu0 %v939
    %1008 = vmatmul.f32.gmra.mxu0 1.0
    %v1009 = vpop.f32.mrf.mxu0
    %v1010 = vadd.f32 1e-16, %v1009
    %1011 = vdwg.mxu0
    %1012 = vmatpush.xpose.msra.mxu0 0.0
    %1013 = vmatpush.xpose.msra.mxu0 0.0
    %1014 = vmatpush.xpose.msra.mxu0 0.0
    %1015 = vmatpush.xpose.msra.mxu0 0.0
    %1016 = vmatpush.xpose.msra.mxu0 0.0
    %1017 = vmatpush.xpose.msra.mxu0 0.0
    %1018 = vmatpush.xpose.msra.mxu0 0.0
    %1019 = vmatpush.xpose.msra.mxu0 0.0
    %1020 = vmatpush.xpose.msra.mxu0 0.0
    %1021 = vmatpush.xpose.msra.mxu0 0.0
    %1022 = vmatpush.xpose.msra.mxu0 0.0
    %1023 = vmatpush.xpose.msra.mxu0 0.0
    %1024 = vmatpush.xpose.msra.mxu0 0.0
    %1025 = vmatpush.xpose.msra.mxu0 %v944
    %1026 = vmatpush.xpose.msra.mxu0 %v942
    %1027 = vmatpush.xpose.msra.mxu0 %v940
    %1028 = vmatmul.f32.gmra.mxu0 1.0
    %v1029 = vpop.f32.mrf.mxu0
    %v1030 = vadd.f32 %v1010, %v1029
    %1031 = vdwg.mxu0
    %v1032 = vrcp.pop %v1030
    %v1033 = vmul.f32 %v1030, %v1032
    %v1034 = vsub.f32 1.0, %v1033
    %v1035 = vmul.f32 %v1032, %v1034
    %v1036 = vadd.f32 %v1032, %v1035
    %vm1037 = vweird.f32 %v1030
    %vm1038 = vweird.f32 %v1032
    %vm1039 = vmor %vm1037, %vm1038
    %v1040 = vsel %vm1039, %v1032, %v1036
    %v1041 = vand.u32 2147483647, %v1030
    %vm1042 = vcmp.eq.f32.partialorder %v1041, 8.507059e+37
    %v1043 = vand.u32 %v1030, 2147483648
    %v1044 = vor.u32 1.1754944e-38, %v1043
    %v1045 = vsel %vm1042, %v1044, %v1040
    %v1046 = vmul.f32 %v989, %v1045
    %v1047 = vmul.f32 %v991, %v1046
    %v1048 = vadd.f32 %v926, %v1047
    %v1049 = vadd.f32 %v68, -15.0
    %v1050 = vadd.f32 %v69, -15.0
    %v1051 = vadd.f32 %v70, -15.0
    %v1052 = vadd.f32 %v71, -15.0
    %v1053 = vadd.f32 %v72, -15.0
    %v1054 = vadd.f32 %v73, -15.0
    %v1055 = vmax.f32 %v1049, 0.0
    %v1056 = vmax.f32 %v1050, 0.0
    %v1057 = vmax.f32 %v1051, 0.0
    %v1058 = vmax.f32 %v1052, 0.0
    %v1059 = vmax.f32 %v1053, 0.0
    %v1060 = vmax.f32 %v1054, 0.0
    %v1061 = vmin.f32 %v1055, 1.0
    %v1062 = vmin.f32 %v1056, 1.0
    %v1063 = vmin.f32 %v1057, 1.0
    %v1064 = vmin.f32 %v1058, 1.0
    %v1065 = vmin.f32 %v1059, 1.0
    %v1066 = vmin.f32 %v1060, 1.0
    %v1067 = vmul.f32 %v1061, %v50
    %v1068 = vmul.f32 %v1062, %v51
    %v1069 = vmul.f32 %v1063, %v52
    %v1070 = vmul.f32 %v1064, %v53
    %v1071 = vmul.f32 %v1065, %v54
    %v1072 = vmul.f32 %v1066, %v55
    %1073 = vmatpush.xpose.msra.mxu0 0.0
    %1074 = vmatpush.xpose.msra.mxu0 0.0
    %1075 = vmatpush.xpose.msra.mxu0 0.0
    %1076 = vmatpush.xpose.msra.mxu0 0.0
    %1077 = vmatpush.xpose.msra.mxu0 0.0
    %1078 = vmatpush.xpose.msra.mxu0 0.0
    %1079 = vmatpush.xpose.msra.mxu0 0.0
    %1080 = vmatpush.xpose.msra.mxu0 0.0
    %1081 = vmatpush.xpose.msra.mxu0 0.0
    %1082 = vmatpush.xpose.msra.mxu0 0.0
    %1083 = vmatpush.xpose.msra.mxu0 0.0
    %1084 = vmatpush.xpose.msra.mxu0 0.0
    %1085 = vmatpush.xpose.msra.mxu0 0.0
    %1086 = vmatpush.xpose.msra.mxu0 %v1071
    %1087 = vmatpush.xpose.msra.mxu0 %v1069
    %1088 = vmatpush.xpose.msra.mxu0 %v1067
    %1089 = vmatmul.f32.gmra.mxu0 1.0
    %v1090 = vpop.f32.mrf.mxu0
    %v1091 = vadd.f32 0.0, %v1090
    %1092 = vdwg.mxu0
    %1093 = vmatpush.xpose.msra.mxu0 0.0
    %1094 = vmatpush.xpose.msra.mxu0 0.0
    %1095 = vmatpush.xpose.msra.mxu0 0.0
    %1096 = vmatpush.xpose.msra.mxu0 0.0
    %1097 = vmatpush.xpose.msra.mxu0 0.0
    %1098 = vmatpush.xpose.msra.mxu0 0.0
    %1099 = vmatpush.xpose.msra.mxu0 0.0
    %1100 = vmatpush.xpose.msra.mxu0 0.0
    %1101 = vmatpush.xpose.msra.mxu0 0.0
    %1102 = vmatpush.xpose.msra.mxu0 0.0
    %1103 = vmatpush.xpose.msra.mxu0 0.0
    %1104 = vmatpush.xpose.msra.mxu0 0.0
    %1105 = vmatpush.xpose.msra.mxu0 0.0
    %1106 = vmatpush.xpose.msra.mxu0 %v1072
    %1107 = vmatpush.xpose.msra.mxu0 %v1070
    %1108 = vmatpush.xpose.msra.mxu0 %v1068
    %1109 = vmatmul.f32.gmra.mxu0 1.0
    %v1110 = vpop.f32.mrf.mxu0
    %v1111 = vadd.f32 %v1091, %v1110
    %1112 = vdwg.mxu0
    %v1113 = vsub.f32 %v1111, %v989
    %1114 = vmatpush.xpose.msra.mxu0 0.0
    %1115 = vmatpush.xpose.msra.mxu0 0.0
    %1116 = vmatpush.xpose.msra.mxu0 0.0
    %1117 = vmatpush.xpose.msra.mxu0 0.0
    %1118 = vmatpush.xpose.msra.mxu0 0.0
    %1119 = vmatpush.xpose.msra.mxu0 0.0
    %1120 = vmatpush.xpose.msra.mxu0 0.0
    %1121 = vmatpush.xpose.msra.mxu0 0.0
    %1122 = vmatpush.xpose.msra.mxu0 0.0
    %1123 = vmatpush.xpose.msra.mxu0 0.0
    %1124 = vmatpush.xpose.msra.mxu0 0.0
    %1125 = vmatpush.xpose.msra.mxu0 0.0
    %1126 = vmatpush.xpose.msra.mxu0 0.0
    %1127 = vmatpush.xpose.msra.mxu0 %v1065
    %1128 = vmatpush.xpose.msra.mxu0 %v1063
    %1129 = vmatpush.xpose.msra.mxu0 %v1061
    %1130 = vmatmul.f32.gmra.mxu0 1.0
    %v1131 = vpop.f32.mrf.mxu0
    %v1132 = vadd.f32 1e-16, %v1131
    %1133 = vdwg.mxu0
    %1134 = vmatpush.xpose.msra.mxu0 0.0
    %1135 = vmatpush.xpose.msra.mxu0 0.0
    %1136 = vmatpush.xpose.msra.mxu0 0.0
    %1137 = vmatpush.xpose.msra.mxu0 0.0
    %1138 = vmatpush.xpose.msra.mxu0 0.0
    %1139 = vmatpush.xpose.msra.mxu0 0.0
    %1140 = vmatpush.xpose.msra.mxu0 0.0
    %1141 = vmatpush.xpose.msra.mxu0 0.0
    %1142 = vmatpush.xpose.msra.mxu0 0.0
    %1143 = vmatpush.xpose.msra.mxu0 0.0
    %1144 = vmatpush.xpose.msra.mxu0 0.0
    %1145 = vmatpush.xpose.msra.mxu0 0.0
    %1146 = vmatpush.xpose.msra.mxu0 0.0
    %1147 = vmatpush.xpose.msra.mxu0 %v1066
    %1148 = vmatpush.xpose.msra.mxu0 %v1064
    %1149 = vmatpush.xpose.msra.mxu0 %v1062
    %1150 = vmatmul.f32.gmra.mxu0 1.0
    %v1151 = vpop.f32.mrf.mxu0
    %v1152 = vadd.f32 %v1132, %v1151
    %1153 = vdwg.mxu0
    %v1154 = vrcp.pop %v1152
    %v1155 = vmul.f32 %v1152, %v1154
    %v1156 = vsub.f32 1.0, %v1155
    %v1157 = vmul.f32 %v1154, %v1156
    %v1158 = vadd.f32 %v1154, %v1157
    %vm1159 = vweird.f32 %v1152
    %vm1160 = vweird.f32 %v1154
    %vm1161 = vmor %vm1159, %vm1160
    %v1162 = vsel %vm1161, %v1154, %v1158
    %v1163 = vand.u32 2147483647, %v1152
    %vm1164 = vcmp.eq.f32.partialorder %v1163, 8.507059e+37
    %v1165 = vand.u32 %v1152, 2147483648
    %v1166 = vor.u32 1.1754944e-38, %v1165
    %v1167 = vsel %vm1164, %v1166, %v1162
    %v1168 = vmul.f32 %v1111, %v1167
    %v1169 = vmul.f32 %v1113, %v1168
    %v1170 = vadd.f32 %v1048, %v1169
    %v1171 = vadd.f32 %v68, -14.0
    %v1172 = vadd.f32 %v69, -14.0
    %v1173 = vadd.f32 %v70, -14.0
    %v1174 = vadd.f32 %v71, -14.0
    %v1175 = vadd.f32 %v72, -14.0
    %v1176 = vadd.f32 %v73, -14.0
    %v1177 = vmax.f32 %v1171, 0.0
    %v1178 = vmax.f32 %v1172, 0.0
    %v1179 = vmax.f32 %v1173, 0.0
    %v1180 = vmax.f32 %v1174, 0.0
    %v1181 = vmax.f32 %v1175, 0.0
    %v1182 = vmax.f32 %v1176, 0.0
    %v1183 = vmin.f32 %v1177, 1.0
    %v1184 = vmin.f32 %v1178, 1.0
    %v1185 = vmin.f32 %v1179, 1.0
    %v1186 = vmin.f32 %v1180, 1.0
    %v1187 = vmin.f32 %v1181, 1.0
    %v1188 = vmin.f32 %v1182, 1.0
    %v1189 = vmul.f32 %v1183, %v50
    %v1190 = vmul.f32 %v1184, %v51
    %v1191 = vmul.f32 %v1185, %v52
    %v1192 = vmul.f32 %v1186, %v53
    %v1193 = vmul.f32 %v1187, %v54
    %v1194 = vmul.f32 %v1188, %v55
    %1195 = vmatpush.xpose.msra.mxu0 0.0
    %1196 = vmatpush.xpose.msra.mxu0 0.0
    %1197 = vmatpush.xpose.msra.mxu0 0.0
    %1198 = vmatpush.xpose.msra.mxu0 0.0
    %1199 = vmatpush.xpose.msra.mxu0 0.0
    %1200 = vmatpush.xpose.msra.mxu0 0.0
    %1201 = vmatpush.xpose.msra.mxu0 0.0
    %1202 = vmatpush.xpose.msra.mxu0 0.0
    %1203 = vmatpush.xpose.msra.mxu0 0.0
    %1204 = vmatpush.xpose.msra.mxu0 0.0
    %1205 = vmatpush.xpose.msra.mxu0 0.0
    %1206 = vmatpush.xpose.msra.mxu0 0.0
    %1207 = vmatpush.xpose.msra.mxu0 0.0
    %1208 = vmatpush.xpose.msra.mxu0 %v1193
    %1209 = vmatpush.xpose.msra.mxu0 %v1191
    %1210 = vmatpush.xpose.msra.mxu0 %v1189
    %1211 = vmatmul.f32.gmra.mxu0 1.0
    %v1212 = vpop.f32.mrf.mxu0
    %v1213 = vadd.f32 0.0, %v1212
    %1214 = vdwg.mxu0
    %1215 = vmatpush.xpose.msra.mxu0 0.0
    %1216 = vmatpush.xpose.msra.mxu0 0.0
    %1217 = vmatpush.xpose.msra.mxu0 0.0
    %1218 = vmatpush.xpose.msra.mxu0 0.0
    %1219 = vmatpush.xpose.msra.mxu0 0.0
    %1220 = vmatpush.xpose.msra.mxu0 0.0
    %1221 = vmatpush.xpose.msra.mxu0 0.0
    %1222 = vmatpush.xpose.msra.mxu0 0.0
    %1223 = vmatpush.xpose.msra.mxu0 0.0
    %1224 = vmatpush.xpose.msra.mxu0 0.0
    %1225 = vmatpush.xpose.msra.mxu0 0.0
    %1226 = vmatpush.xpose.msra.mxu0 0.0
    %1227 = vmatpush.xpose.msra.mxu0 0.0
    %1228 = vmatpush.xpose.msra.mxu0 %v1194
    %1229 = vmatpush.xpose.msra.mxu0 %v1192
    %1230 = vmatpush.xpose.msra.mxu0 %v1190
    %1231 = vmatmul.f32.gmra.mxu0 1.0
    %v1232 = vpop.f32.mrf.mxu0
    %v1233 = vadd.f32 %v1213, %v1232
    %1234 = vdwg.mxu0
    %v1235 = vsub.f32 %v1233, %v1111
    %1236 = vmatpush.xpose.msra.mxu0 0.0
    %1237 = vmatpush.xpose.msra.mxu0 0.0
    %1238 = vmatpush.xpose.msra.mxu0 0.0
    %1239 = vmatpush.xpose.msra.mxu0 0.0
    %1240 = vmatpush.xpose.msra.mxu0 0.0
    %1241 = vmatpush.xpose.msra.mxu0 0.0
    %1242 = vmatpush.xpose.msra.mxu0 0.0
    %1243 = vmatpush.xpose.msra.mxu0 0.0
    %1244 = vmatpush.xpose.msra.mxu0 0.0
    %1245 = vmatpush.xpose.msra.mxu0 0.0
    %1246 = vmatpush.xpose.msra.mxu0 0.0
    %1247 = vmatpush.xpose.msra.mxu0 0.0
    %1248 = vmatpush.xpose.msra.mxu0 0.0
    %1249 = vmatpush.xpose.msra.mxu0 %v1187
    %1250 = vmatpush.xpose.msra.mxu0 %v1185
    %1251 = vmatpush.xpose.msra.mxu0 %v1183
    %1252 = vmatmul.f32.gmra.mxu0 1.0
    %v1253 = vpop.f32.mrf.mxu0
    %v1254 = vadd.f32 1e-16, %v1253
    %1255 = vdwg.mxu0
    %1256 = vmatpush.xpose.msra.mxu0 0.0
    %1257 = vmatpush.xpose.msra.mxu0 0.0
    %1258 = vmatpush.xpose.msra.mxu0 0.0
    %1259 = vmatpush.xpose.msra.mxu0 0.0
    %1260 = vmatpush.xpose.msra.mxu0 0.0
    %1261 = vmatpush.xpose.msra.mxu0 0.0
    %1262 = vmatpush.xpose.msra.mxu0 0.0
    %1263 = vmatpush.xpose.msra.mxu0 0.0
    %1264 = vmatpush.xpose.msra.mxu0 0.0
    %1265 = vmatpush.xpose.msra.mxu0 0.0
    %1266 = vmatpush.xpose.msra.mxu0 0.0
    %1267 = vmatpush.xpose.msra.mxu0 0.0
    %1268 = vmatpush.xpose.msra.mxu0 0.0
    %1269 = vmatpush.xpose.msra.mxu0 %v1188
    %1270 = vmatpush.xpose.msra.mxu0 %v1186
    %1271 = vmatpush.xpose.msra.mxu0 %v1184
    %1272 = vmatmul.f32.gmra.mxu0 1.0
    %v1273 = vpop.f32.mrf.mxu0
    %v1274 = vadd.f32 %v1254, %v1273
    %1275 = vdwg.mxu0
    %v1276 = vrcp.pop %v1274
    %v1277 = vmul.f32 %v1274, %v1276
    %v1278 = vsub.f32 1.0, %v1277
    %v1279 = vmul.f32 %v1276, %v1278
    %v1280 = vadd.f32 %v1276, %v1279
    %vm1281 = vweird.f32 %v1274
    %vm1282 = vweird.f32 %v1276
    %vm1283 = vmor %vm1281, %vm1282
    %v1284 = vsel %vm1283, %v1276, %v1280
    %v1285 = vand.u32 2147483647, %v1274
    %vm1286 = vcmp.eq.f32.partialorder %v1285, 8.507059e+37
    %v1287 = vand.u32 %v1274, 2147483648
    %v1288 = vor.u32 1.1754944e-38, %v1287
    %v1289 = vsel %vm1286, %v1288, %v1284
    %v1290 = vmul.f32 %v1233, %v1289
    %v1291 = vmul.f32 %v1235, %v1290
    %v1292 = vadd.f32 %v1170, %v1291
    %v1293 = vadd.f32 %v68, -13.0
    %v1294 = vadd.f32 %v69, -13.0
    %v1295 = vadd.f32 %v70, -13.0
    %v1296 = vadd.f32 %v71, -13.0
    %v1297 = vadd.f32 %v72, -13.0
    %v1298 = vadd.f32 %v73, -13.0
    %v1299 = vmax.f32 %v1293, 0.0
    %v1300 = vmax.f32 %v1294, 0.0
    %v1301 = vmax.f32 %v1295, 0.0
    %v1302 = vmax.f32 %v1296, 0.0
    %v1303 = vmax.f32 %v1297, 0.0
    %v1304 = vmax.f32 %v1298, 0.0
    %v1305 = vmin.f32 %v1299, 1.0
    %v1306 = vmin.f32 %v1300, 1.0
    %v1307 = vmin.f32 %v1301, 1.0
    %v1308 = vmin.f32 %v1302, 1.0
    %v1309 = vmin.f32 %v1303, 1.0
    %v1310 = vmin.f32 %v1304, 1.0
    %v1311 = vmul.f32 %v1305, %v50
    %v1312 = vmul.f32 %v1306, %v51
    %v1313 = vmul.f32 %v1307, %v52
    %v1314 = vmul.f32 %v1308, %v53
    %v1315 = vmul.f32 %v1309, %v54
    %v1316 = vmul.f32 %v1310, %v55
    %1317 = vmatpush.xpose.msra.mxu0 0.0
    %1318 = vmatpush.xpose.msra.mxu0 0.0
    %1319 = vmatpush.xpose.msra.mxu0 0.0
    %1320 = vmatpush.xpose.msra.mxu0 0.0
    %1321 = vmatpush.xpose.msra.mxu0 0.0
    %1322 = vmatpush.xpose.msra.mxu0 0.0
    %1323 = vmatpush.xpose.msra.mxu0 0.0
    %1324 = vmatpush.xpose.msra.mxu0 0.0
    %1325 = vmatpush.xpose.msra.mxu0 0.0
    %1326 = vmatpush.xpose.msra.mxu0 0.0
    %1327 = vmatpush.xpose.msra.mxu0 0.0
    %1328 = vmatpush.xpose.msra.mxu0 0.0
    %1329 = vmatpush.xpose.msra.mxu0 0.0
    %1330 = vmatpush.xpose.msra.mxu0 %v1315
    %1331 = vmatpush.xpose.msra.mxu0 %v1313
    %1332 = vmatpush.xpose.msra.mxu0 %v1311
    %1333 = vmatmul.f32.gmra.mxu0 1.0
    %v1334 = vpop.f32.mrf.mxu0
    %v1335 = vadd.f32 0.0, %v1334
    %1336 = vdwg.mxu0
    %1337 = vmatpush.xpose.msra.mxu0 0.0
    %1338 = vmatpush.xpose.msra.mxu0 0.0
    %1339 = vmatpush.xpose.msra.mxu0 0.0
    %1340 = vmatpush.xpose.msra.mxu0 0.0
    %1341 = vmatpush.xpose.msra.mxu0 0.0
    %1342 = vmatpush.xpose.msra.mxu0 0.0
    %1343 = vmatpush.xpose.msra.mxu0 0.0
    %1344 = vmatpush.xpose.msra.mxu0 0.0
    %1345 = vmatpush.xpose.msra.mxu0 0.0
    %1346 = vmatpush.xpose.msra.mxu0 0.0
    %1347 = vmatpush.xpose.msra.mxu0 0.0
    %1348 = vmatpush.xpose.msra.mxu0 0.0
    %1349 = vmatpush.xpose.msra.mxu0 0.0
    %1350 = vmatpush.xpose.msra.mxu0 %v1316
    %1351 = vmatpush.xpose.msra.mxu0 %v1314
    %1352 = vmatpush.xpose.msra.mxu0 %v1312
    %1353 = vmatmul.f32.gmra.mxu0 1.0
    %v1354 = vpop.f32.mrf.mxu0
    %v1355 = vadd.f32 %v1335, %v1354
    %1356 = vdwg.mxu0
    %v1357 = vsub.f32 %v1355, %v1233
    %1358 = vmatpush.xpose.msra.mxu0 0.0
    %1359 = vmatpush.xpose.msra.mxu0 0.0
    %1360 = vmatpush.xpose.msra.mxu0 0.0
    %1361 = vmatpush.xpose.msra.mxu0 0.0
    %1362 = vmatpush.xpose.msra.mxu0 0.0
    %1363 = vmatpush.xpose.msra.mxu0 0.0
    %1364 = vmatpush.xpose.msra.mxu0 0.0
    %1365 = vmatpush.xpose.msra.mxu0 0.0
    %1366 = vmatpush.xpose.msra.mxu0 0.0
    %1367 = vmatpush.xpose.msra.mxu0 0.0
    %1368 = vmatpush.xpose.msra.mxu0 0.0
    %1369 = vmatpush.xpose.msra.mxu0 0.0
    %1370 = vmatpush.xpose.msra.mxu0 0.0
    %1371 = vmatpush.xpose.msra.mxu0 %v1309
    %1372 = vmatpush.xpose.msra.mxu0 %v1307
    %1373 = vmatpush.xpose.msra.mxu0 %v1305
    %1374 = vmatmul.f32.gmra.mxu0 1.0
    %v1375 = vpop.f32.mrf.mxu0
    %v1376 = vadd.f32 1e-16, %v1375
    %1377 = vdwg.mxu0
    %1378 = vmatpush.xpose.msra.mxu0 0.0
    %1379 = vmatpush.xpose.msra.mxu0 0.0
    %1380 = vmatpush.xpose.msra.mxu0 0.0
    %1381 = vmatpush.xpose.msra.mxu0 0.0
    %1382 = vmatpush.xpose.msra.mxu0 0.0
    %1383 = vmatpush.xpose.msra.mxu0 0.0
    %1384 = vmatpush.xpose.msra.mxu0 0.0
    %1385 = vmatpush.xpose.msra.mxu0 0.0
    %1386 = vmatpush.xpose.msra.mxu0 0.0
    %1387 = vmatpush.xpose.msra.mxu0 0.0
    %1388 = vmatpush.xpose.msra.mxu0 0.0
    %1389 = vmatpush.xpose.msra.mxu0 0.0
    %1390 = vmatpush.xpose.msra.mxu0 0.0
    %1391 = vmatpush.xpose.msra.mxu0 %v1310
    %1392 = vmatpush.xpose.msra.mxu0 %v1308
    %1393 = vmatpush.xpose.msra.mxu0 %v1306
    %1394 = vmatmul.f32.gmra.mxu0 1.0
    %v1395 = vpop.f32.mrf.mxu0
    %v1396 = vadd.f32 %v1376, %v1395
    %1397 = vdwg.mxu0
    %v1398 = vrcp.pop %v1396
    %v1399 = vmul.f32 %v1396, %v1398
    %v1400 = vsub.f32 1.0, %v1399
    %v1401 = vmul.f32 %v1398, %v1400
    %v1402 = vadd.f32 %v1398, %v1401
    %vm1403 = vweird.f32 %v1396
    %vm1404 = vweird.f32 %v1398
    %vm1405 = vmor %vm1403, %vm1404
    %v1406 = vsel %vm1405, %v1398, %v1402
    %v1407 = vand.u32 2147483647, %v1396
    %vm1408 = vcmp.eq.f32.partialorder %v1407, 8.507059e+37
    %v1409 = vand.u32 %v1396, 2147483648
    %v1410 = vor.u32 1.1754944e-38, %v1409
    %v1411 = vsel %vm1408, %v1410, %v1406
    %v1412 = vmul.f32 %v1355, %v1411
    %v1413 = vmul.f32 %v1357, %v1412
    %v1414 = vadd.f32 %v1292, %v1413
    %v1415 = vadd.f32 %v68, -12.0
    %v1416 = vadd.f32 %v69, -12.0
    %v1417 = vadd.f32 %v70, -12.0
    %v1418 = vadd.f32 %v71, -12.0
    %v1419 = vadd.f32 %v72, -12.0
    %v1420 = vadd.f32 %v73, -12.0
    %v1421 = vmax.f32 %v1415, 0.0
    %v1422 = vmax.f32 %v1416, 0.0
    %v1423 = vmax.f32 %v1417, 0.0
    %v1424 = vmax.f32 %v1418, 0.0
    %v1425 = vmax.f32 %v1419, 0.0
    %v1426 = vmax.f32 %v1420, 0.0
    %v1427 = vmin.f32 %v1421, 1.0
    %v1428 = vmin.f32 %v1422, 1.0
    %v1429 = vmin.f32 %v1423, 1.0
    %v1430 = vmin.f32 %v1424, 1.0
    %v1431 = vmin.f32 %v1425, 1.0
    %v1432 = vmin.f32 %v1426, 1.0
    %v1433 = vmul.f32 %v1427, %v50
    %v1434 = vmul.f32 %v1428, %v51
    %v1435 = vmul.f32 %v1429, %v52
    %v1436 = vmul.f32 %v1430, %v53
    %v1437 = vmul.f32 %v1431, %v54
    %v1438 = vmul.f32 %v1432, %v55
    %1439 = vmatpush.xpose.msra.mxu0 0.0
    %1440 = vmatpush.xpose.msra.mxu0 0.0
    %1441 = vmatpush.xpose.msra.mxu0 0.0
    %1442 = vmatpush.xpose.msra.mxu0 0.0
    %1443 = vmatpush.xpose.msra.mxu0 0.0
    %1444 = vmatpush.xpose.msra.mxu0 0.0
    %1445 = vmatpush.xpose.msra.mxu0 0.0
    %1446 = vmatpush.xpose.msra.mxu0 0.0
    %1447 = vmatpush.xpose.msra.mxu0 0.0
    %1448 = vmatpush.xpose.msra.mxu0 0.0
    %1449 = vmatpush.xpose.msra.mxu0 0.0
    %1450 = vmatpush.xpose.msra.mxu0 0.0
    %1451 = vmatpush.xpose.msra.mxu0 0.0
    %1452 = vmatpush.xpose.msra.mxu0 %v1437
    %1453 = vmatpush.xpose.msra.mxu0 %v1435
    %1454 = vmatpush.xpose.msra.mxu0 %v1433
    %1455 = vmatmul.f32.gmra.mxu0 1.0
    %v1456 = vpop.f32.mrf.mxu0
    %v1457 = vadd.f32 0.0, %v1456
    %1458 = vdwg.mxu0
    %1459 = vmatpush.xpose.msra.mxu0 0.0
    %1460 = vmatpush.xpose.msra.mxu0 0.0
    %1461 = vmatpush.xpose.msra.mxu0 0.0
    %1462 = vmatpush.xpose.msra.mxu0 0.0
    %1463 = vmatpush.xpose.msra.mxu0 0.0
    %1464 = vmatpush.xpose.msra.mxu0 0.0
    %1465 = vmatpush.xpose.msra.mxu0 0.0
    %1466 = vmatpush.xpose.msra.mxu0 0.0
    %1467 = vmatpush.xpose.msra.mxu0 0.0
    %1468 = vmatpush.xpose.msra.mxu0 0.0
    %1469 = vmatpush.xpose.msra.mxu0 0.0
    %1470 = vmatpush.xpose.msra.mxu0 0.0
    %1471 = vmatpush.xpose.msra.mxu0 0.0
    %1472 = vmatpush.xpose.msra.mxu0 %v1438
    %1473 = vmatpush.xpose.msra.mxu0 %v1436
    %1474 = vmatpush.xpose.msra.mxu0 %v1434
    %1475 = vmatmul.f32.gmra.mxu0 1.0
    %v1476 = vpop.f32.mrf.mxu0
    %v1477 = vadd.f32 %v1457, %v1476
    %1478 = vdwg.mxu0
    %v1479 = vsub.f32 %v1477, %v1355
    %1480 = vmatpush.xpose.msra.mxu0 0.0
    %1481 = vmatpush.xpose.msra.mxu0 0.0
    %1482 = vmatpush.xpose.msra.mxu0 0.0
    %1483 = vmatpush.xpose.msra.mxu0 0.0
    %1484 = vmatpush.xpose.msra.mxu0 0.0
    %1485 = vmatpush.xpose.msra.mxu0 0.0
    %1486 = vmatpush.xpose.msra.mxu0 0.0
    %1487 = vmatpush.xpose.msra.mxu0 0.0
    %1488 = vmatpush.xpose.msra.mxu0 0.0
    %1489 = vmatpush.xpose.msra.mxu0 0.0
    %1490 = vmatpush.xpose.msra.mxu0 0.0
    %1491 = vmatpush.xpose.msra.mxu0 0.0
    %1492 = vmatpush.xpose.msra.mxu0 0.0
    %1493 = vmatpush.xpose.msra.mxu0 %v1431
    %1494 = vmatpush.xpose.msra.mxu0 %v1429
    %1495 = vmatpush.xpose.msra.mxu0 %v1427
    %1496 = vmatmul.f32.gmra.mxu0 1.0
    %v1497 = vpop.f32.mrf.mxu0
    %v1498 = vadd.f32 1e-16, %v1497
    %1499 = vdwg.mxu0
    %1500 = vmatpush.xpose.msra.mxu0 0.0
    %1501 = vmatpush.xpose.msra.mxu0 0.0
    %1502 = vmatpush.xpose.msra.mxu0 0.0
    %1503 = vmatpush.xpose.msra.mxu0 0.0
    %1504 = vmatpush.xpose.msra.mxu0 0.0
    %1505 = vmatpush.xpose.msra.mxu0 0.0
    %1506 = vmatpush.xpose.msra.mxu0 0.0
    %1507 = vmatpush.xpose.msra.mxu0 0.0
    %1508 = vmatpush.xpose.msra.mxu0 0.0
    %1509 = vmatpush.xpose.msra.mxu0 0.0
    %1510 = vmatpush.xpose.msra.mxu0 0.0
    %1511 = vmatpush.xpose.msra.mxu0 0.0
    %1512 = vmatpush.xpose.msra.mxu0 0.0
    %1513 = vmatpush.xpose.msra.mxu0 %v1432
    %1514 = vmatpush.xpose.msra.mxu0 %v1430
    %1515 = vmatpush.xpose.msra.mxu0 %v1428
    %1516 = vmatmul.f32.gmra.mxu0 1.0
    %v1517 = vpop.f32.mrf.mxu0
    %v1518 = vadd.f32 %v1498, %v1517
    %1519 = vdwg.mxu0
    %v1520 = vrcp.pop %v1518
    %v1521 = vmul.f32 %v1518, %v1520
    %v1522 = vsub.f32 1.0, %v1521
    %v1523 = vmul.f32 %v1520, %v1522
    %v1524 = vadd.f32 %v1520, %v1523
    %vm1525 = vweird.f32 %v1518
    %vm1526 = vweird.f32 %v1520
    %vm1527 = vmor %vm1525, %vm1526
    %v1528 = vsel %vm1527, %v1520, %v1524
    %v1529 = vand.u32 2147483647, %v1518
    %vm1530 = vcmp.eq.f32.partialorder %v1529, 8.507059e+37
    %v1531 = vand.u32 %v1518, 2147483648
    %v1532 = vor.u32 1.1754944e-38, %v1531
    %v1533 = vsel %vm1530, %v1532, %v1528
    %v1534 = vmul.f32 %v1477, %v1533
    %v1535 = vmul.f32 %v1479, %v1534
    %v1536 = vadd.f32 %v1414, %v1535
    %v1537 = vadd.f32 %v68, -11.0
    %v1538 = vadd.f32 %v69, -11.0
    %v1539 = vadd.f32 %v70, -11.0
    %v1540 = vadd.f32 %v71, -11.0
    %v1541 = vadd.f32 %v72, -11.0
    %v1542 = vadd.f32 %v73, -11.0
    %v1543 = vmax.f32 %v1537, 0.0
    %v1544 = vmax.f32 %v1538, 0.0
    %v1545 = vmax.f32 %v1539, 0.0
    %v1546 = vmax.f32 %v1540, 0.0
    %v1547 = vmax.f32 %v1541, 0.0
    %v1548 = vmax.f32 %v1542, 0.0
    %v1549 = vmin.f32 %v1543, 1.0
    %v1550 = vmin.f32 %v1544, 1.0
    %v1551 = vmin.f32 %v1545, 1.0
    %v1552 = vmin.f32 %v1546, 1.0
    %v1553 = vmin.f32 %v1547, 1.0
    %v1554 = vmin.f32 %v1548, 1.0
    %v1555 = vmul.f32 %v1549, %v50
    %v1556 = vmul.f32 %v1550, %v51
    %v1557 = vmul.f32 %v1551, %v52
    %v1558 = vmul.f32 %v1552, %v53
    %v1559 = vmul.f32 %v1553, %v54
    %v1560 = vmul.f32 %v1554, %v55
    %1561 = vmatpush.xpose.msra.mxu0 0.0
    %1562 = vmatpush.xpose.msra.mxu0 0.0
    %1563 = vmatpush.xpose.msra.mxu0 0.0
    %1564 = vmatpush.xpose.msra.mxu0 0.0
    %1565 = vmatpush.xpose.msra.mxu0 0.0
    %1566 = vmatpush.xpose.msra.mxu0 0.0
    %1567 = vmatpush.xpose.msra.mxu0 0.0
    %1568 = vmatpush.xpose.msra.mxu0 0.0
    %1569 = vmatpush.xpose.msra.mxu0 0.0
    %1570 = vmatpush.xpose.msra.mxu0 0.0
    %1571 = vmatpush.xpose.msra.mxu0 0.0
    %1572 = vmatpush.xpose.msra.mxu0 0.0
    %1573 = vmatpush.xpose.msra.mxu0 0.0
    %1574 = vmatpush.xpose.msra.mxu0 %v1559
    %1575 = vmatpush.xpose.msra.mxu0 %v1557
    %1576 = vmatpush.xpose.msra.mxu0 %v1555
    %1577 = vmatmul.f32.gmra.mxu0 1.0
    %v1578 = vpop.f32.mrf.mxu0
    %v1579 = vadd.f32 0.0, %v1578
    %1580 = vdwg.mxu0
    %1581 = vmatpush.xpose.msra.mxu0 0.0
    %1582 = vmatpush.xpose.msra.mxu0 0.0
    %1583 = vmatpush.xpose.msra.mxu0 0.0
    %1584 = vmatpush.xpose.msra.mxu0 0.0
    %1585 = vmatpush.xpose.msra.mxu0 0.0
    %1586 = vmatpush.xpose.msra.mxu0 0.0
    %1587 = vmatpush.xpose.msra.mxu0 0.0
    %1588 = vmatpush.xpose.msra.mxu0 0.0
    %1589 = vmatpush.xpose.msra.mxu0 0.0
    %1590 = vmatpush.xpose.msra.mxu0 0.0
    %1591 = vmatpush.xpose.msra.mxu0 0.0
    %1592 = vmatpush.xpose.msra.mxu0 0.0
    %1593 = vmatpush.xpose.msra.mxu0 0.0
    %1594 = vmatpush.xpose.msra.mxu0 %v1560
    %1595 = vmatpush.xpose.msra.mxu0 %v1558
    %1596 = vmatpush.xpose.msra.mxu0 %v1556
    %1597 = vmatmul.f32.gmra.mxu0 1.0
    %v1598 = vpop.f32.mrf.mxu0
    %v1599 = vadd.f32 %v1579, %v1598
    %1600 = vdwg.mxu0
    %v1601 = vsub.f32 %v1599, %v1477
    %1602 = vmatpush.xpose.msra.mxu0 0.0
    %1603 = vmatpush.xpose.msra.mxu0 0.0
    %1604 = vmatpush.xpose.msra.mxu0 0.0
    %1605 = vmatpush.xpose.msra.mxu0 0.0
    %1606 = vmatpush.xpose.msra.mxu0 0.0
    %1607 = vmatpush.xpose.msra.mxu0 0.0
    %1608 = vmatpush.xpose.msra.mxu0 0.0
    %1609 = vmatpush.xpose.msra.mxu0 0.0
    %1610 = vmatpush.xpose.msra.mxu0 0.0
    %1611 = vmatpush.xpose.msra.mxu0 0.0
    %1612 = vmatpush.xpose.msra.mxu0 0.0
    %1613 = vmatpush.xpose.msra.mxu0 0.0
    %1614 = vmatpush.xpose.msra.mxu0 0.0
    %1615 = vmatpush.xpose.msra.mxu0 %v1553
    %1616 = vmatpush.xpose.msra.mxu0 %v1551
    %1617 = vmatpush.xpose.msra.mxu0 %v1549
    %1618 = vmatmul.f32.gmra.mxu0 1.0
    %v1619 = vpop.f32.mrf.mxu0
    %v1620 = vadd.f32 1e-16, %v1619
    %1621 = vdwg.mxu0
    %1622 = vmatpush.xpose.msra.mxu0 0.0
    %1623 = vmatpush.xpose.msra.mxu0 0.0
    %1624 = vmatpush.xpose.msra.mxu0 0.0
    %1625 = vmatpush.xpose.msra.mxu0 0.0
    %1626 = vmatpush.xpose.msra.mxu0 0.0
    %1627 = vmatpush.xpose.msra.mxu0 0.0
    %1628 = vmatpush.xpose.msra.mxu0 0.0
    %1629 = vmatpush.xpose.msra.mxu0 0.0
    %1630 = vmatpush.xpose.msra.mxu0 0.0
    %1631 = vmatpush.xpose.msra.mxu0 0.0
    %1632 = vmatpush.xpose.msra.mxu0 0.0
    %1633 = vmatpush.xpose.msra.mxu0 0.0
    %1634 = vmatpush.xpose.msra.mxu0 0.0
    %1635 = vmatpush.xpose.msra.mxu0 %v1554
    %1636 = vmatpush.xpose.msra.mxu0 %v1552
    %1637 = vmatpush.xpose.msra.mxu0 %v1550
    %1638 = vmatmul.f32.gmra.mxu0 1.0
    %v1639 = vpop.f32.mrf.mxu0
    %v1640 = vadd.f32 %v1620, %v1639
    %1641 = vdwg.mxu0
    %v1642 = vrcp.pop %v1640
    %v1643 = vmul.f32 %v1640, %v1642
    %v1644 = vsub.f32 1.0, %v1643
    %v1645 = vmul.f32 %v1642, %v1644
    %v1646 = vadd.f32 %v1642, %v1645
    %vm1647 = vweird.f32 %v1640
    %vm1648 = vweird.f32 %v1642
    %vm1649 = vmor %vm1647, %vm1648
    %v1650 = vsel %vm1649, %v1642, %v1646
    %v1651 = vand.u32 2147483647, %v1640
    %vm1652 = vcmp.eq.f32.partialorder %v1651, 8.507059e+37
    %v1653 = vand.u32 %v1640, 2147483648
    %v1654 = vor.u32 1.1754944e-38, %v1653
    %v1655 = vsel %vm1652, %v1654, %v1650
    %v1656 = vmul.f32 %v1599, %v1655
    %v1657 = vmul.f32 %v1601, %v1656
    %v1658 = vadd.f32 %v1536, %v1657
    %v1659 = vadd.f32 %v68, -10.0
    %v1660 = vadd.f32 %v69, -10.0
    %v1661 = vadd.f32 %v70, -10.0
    %v1662 = vadd.f32 %v71, -10.0
    %v1663 = vadd.f32 %v72, -10.0
    %v1664 = vadd.f32 %v73, -10.0
    %v1665 = vmax.f32 %v1659, 0.0
    %v1666 = vmax.f32 %v1660, 0.0
    %v1667 = vmax.f32 %v1661, 0.0
    %v1668 = vmax.f32 %v1662, 0.0
    %v1669 = vmax.f32 %v1663, 0.0
    %v1670 = vmax.f32 %v1664, 0.0
    %v1671 = vmin.f32 %v1665, 1.0
    %v1672 = vmin.f32 %v1666, 1.0
    %v1673 = vmin.f32 %v1667, 1.0
    %v1674 = vmin.f32 %v1668, 1.0
    %v1675 = vmin.f32 %v1669, 1.0
    %v1676 = vmin.f32 %v1670, 1.0
    %v1677 = vmul.f32 %v1671, %v50
    %v1678 = vmul.f32 %v1672, %v51
    %v1679 = vmul.f32 %v1673, %v52
    %v1680 = vmul.f32 %v1674, %v53
    %v1681 = vmul.f32 %v1675, %v54
    %v1682 = vmul.f32 %v1676, %v55
    %1683 = vmatpush.xpose.msra.mxu0 0.0
    %1684 = vmatpush.xpose.msra.mxu0 0.0
    %1685 = vmatpush.xpose.msra.mxu0 0.0
    %1686 = vmatpush.xpose.msra.mxu0 0.0
    %1687 = vmatpush.xpose.msra.mxu0 0.0
    %1688 = vmatpush.xpose.msra.mxu0 0.0
    %1689 = vmatpush.xpose.msra.mxu0 0.0
    %1690 = vmatpush.xpose.msra.mxu0 0.0
    %1691 = vmatpush.xpose.msra.mxu0 0.0
    %1692 = vmatpush.xpose.msra.mxu0 0.0
    %1693 = vmatpush.xpose.msra.mxu0 0.0
    %1694 = vmatpush.xpose.msra.mxu0 0.0
    %1695 = vmatpush.xpose.msra.mxu0 0.0
    %1696 = vmatpush.xpose.msra.mxu0 %v1681
    %1697 = vmatpush.xpose.msra.mxu0 %v1679
    %1698 = vmatpush.xpose.msra.mxu0 %v1677
    %1699 = vmatmul.f32.gmra.mxu0 1.0
    %v1700 = vpop.f32.mrf.mxu0
    %v1701 = vadd.f32 0.0, %v1700
    %1702 = vdwg.mxu0
    %1703 = vmatpush.xpose.msra.mxu0 0.0
    %1704 = vmatpush.xpose.msra.mxu0 0.0
    %1705 = vmatpush.xpose.msra.mxu0 0.0
    %1706 = vmatpush.xpose.msra.mxu0 0.0
    %1707 = vmatpush.xpose.msra.mxu0 0.0
    %1708 = vmatpush.xpose.msra.mxu0 0.0
    %1709 = vmatpush.xpose.msra.mxu0 0.0
    %1710 = vmatpush.xpose.msra.mxu0 0.0
    %1711 = vmatpush.xpose.msra.mxu0 0.0
    %1712 = vmatpush.xpose.msra.mxu0 0.0
    %1713 = vmatpush.xpose.msra.mxu0 0.0
    %1714 = vmatpush.xpose.msra.mxu0 0.0
    %1715 = vmatpush.xpose.msra.mxu0 0.0
    %1716 = vmatpush.xpose.msra.mxu0 %v1682
    %1717 = vmatpush.xpose.msra.mxu0 %v1680
    %1718 = vmatpush.xpose.msra.mxu0 %v1678
    %1719 = vmatmul.f32.gmra.mxu0 1.0
    %v1720 = vpop.f32.mrf.mxu0
    %v1721 = vadd.f32 %v1701, %v1720
    %1722 = vdwg.mxu0
    %v1723 = vsub.f32 %v1721, %v1599
    %1724 = vmatpush.xpose.msra.mxu0 0.0
    %1725 = vmatpush.xpose.msra.mxu0 0.0
    %1726 = vmatpush.xpose.msra.mxu0 0.0
    %1727 = vmatpush.xpose.msra.mxu0 0.0
    %1728 = vmatpush.xpose.msra.mxu0 0.0
    %1729 = vmatpush.xpose.msra.mxu0 0.0
    %1730 = vmatpush.xpose.msra.mxu0 0.0
    %1731 = vmatpush.xpose.msra.mxu0 0.0
    %1732 = vmatpush.xpose.msra.mxu0 0.0
    %1733 = vmatpush.xpose.msra.mxu0 0.0
    %1734 = vmatpush.xpose.msra.mxu0 0.0
    %1735 = vmatpush.xpose.msra.mxu0 0.0
    %1736 = vmatpush.xpose.msra.mxu0 0.0
    %1737 = vmatpush.xpose.msra.mxu0 %v1675
    %1738 = vmatpush.xpose.msra.mxu0 %v1673
    %1739 = vmatpush.xpose.msra.mxu0 %v1671
    %1740 = vmatmul.f32.gmra.mxu0 1.0
    %v1741 = vpop.f32.mrf.mxu0
    %v1742 = vadd.f32 1e-16, %v1741
    %1743 = vdwg.mxu0
    %1744 = vmatpush.xpose.msra.mxu0 0.0
    %1745 = vmatpush.xpose.msra.mxu0 0.0
    %1746 = vmatpush.xpose.msra.mxu0 0.0
    %1747 = vmatpush.xpose.msra.mxu0 0.0
    %1748 = vmatpush.xpose.msra.mxu0 0.0
    %1749 = vmatpush.xpose.msra.mxu0 0.0
    %1750 = vmatpush.xpose.msra.mxu0 0.0
    %1751 = vmatpush.xpose.msra.mxu0 0.0
    %1752 = vmatpush.xpose.msra.mxu0 0.0
    %1753 = vmatpush.xpose.msra.mxu0 0.0
    %1754 = vmatpush.xpose.msra.mxu0 0.0
    %1755 = vmatpush.xpose.msra.mxu0 0.0
    %1756 = vmatpush.xpose.msra.mxu0 0.0
    %1757 = vmatpush.xpose.msra.mxu0 %v1676
    %1758 = vmatpush.xpose.msra.mxu0 %v1674
    %1759 = vmatpush.xpose.msra.mxu0 %v1672
    %1760 = vmatmul.f32.gmra.mxu0 1.0
    %v1761 = vpop.f32.mrf.mxu0
    %v1762 = vadd.f32 %v1742, %v1761
    %1763 = vdwg.mxu0
    %v1764 = vrcp.pop %v1762
    %v1765 = vmul.f32 %v1762, %v1764
    %v1766 = vsub.f32 1.0, %v1765
    %v1767 = vmul.f32 %v1764, %v1766
    %v1768 = vadd.f32 %v1764, %v1767
    %vm1769 = vweird.f32 %v1762
    %vm1770 = vweird.f32 %v1764
    %vm1771 = vmor %vm1769, %vm1770
    %v1772 = vsel %vm1771, %v1764, %v1768
    %v1773 = vand.u32 2147483647, %v1762
    %vm1774 = vcmp.eq.f32.partialorder %v1773, 8.507059e+37
    %v1775 = vand.u32 %v1762, 2147483648
    %v1776 = vor.u32 1.1754944e-38, %v1775
    %v1777 = vsel %vm1774, %v1776, %v1772
    %v1778 = vmul.f32 %v1721, %v1777
    %v1779 = vmul.f32 %v1723, %v1778
    %v1780 = vadd.f32 %v1658, %v1779
    %v1781 = vadd.f32 %v68, -9.0
    %v1782 = vadd.f32 %v69, -9.0
    %v1783 = vadd.f32 %v70, -9.0
    %v1784 = vadd.f32 %v71, -9.0
    %v1785 = vadd.f32 %v72, -9.0
    %v1786 = vadd.f32 %v73, -9.0
    %v1787 = vmax.f32 %v1781, 0.0
    %v1788 = vmax.f32 %v1782, 0.0
    %v1789 = vmax.f32 %v1783, 0.0
    %v1790 = vmax.f32 %v1784, 0.0
    %v1791 = vmax.f32 %v1785, 0.0
    %v1792 = vmax.f32 %v1786, 0.0
    %v1793 = vmin.f32 %v1787, 1.0
    %v1794 = vmin.f32 %v1788, 1.0
    %v1795 = vmin.f32 %v1789, 1.0
    %v1796 = vmin.f32 %v1790, 1.0
    %v1797 = vmin.f32 %v1791, 1.0
    %v1798 = vmin.f32 %v1792, 1.0
    %v1799 = vmul.f32 %v1793, %v50
    %v1800 = vmul.f32 %v1794, %v51
    %v1801 = vmul.f32 %v1795, %v52
    %v1802 = vmul.f32 %v1796, %v53
    %v1803 = vmul.f32 %v1797, %v54
    %v1804 = vmul.f32 %v1798, %v55
    %1805 = vmatpush.xpose.msra.mxu0 0.0
    %1806 = vmatpush.xpose.msra.mxu0 0.0
    %1807 = vmatpush.xpose.msra.mxu0 0.0
    %1808 = vmatpush.xpose.msra.mxu0 0.0
    %1809 = vmatpush.xpose.msra.mxu0 0.0
    %1810 = vmatpush.xpose.msra.mxu0 0.0
    %1811 = vmatpush.xpose.msra.mxu0 0.0
    %1812 = vmatpush.xpose.msra.mxu0 0.0
    %1813 = vmatpush.xpose.msra.mxu0 0.0
    %1814 = vmatpush.xpose.msra.mxu0 0.0
    %1815 = vmatpush.xpose.msra.mxu0 0.0
    %1816 = vmatpush.xpose.msra.mxu0 0.0
    %1817 = vmatpush.xpose.msra.mxu0 0.0
    %1818 = vmatpush.xpose.msra.mxu0 %v1803
    %1819 = vmatpush.xpose.msra.mxu0 %v1801
    %1820 = vmatpush.xpose.msra.mxu0 %v1799
    %1821 = vmatmul.f32.gmra.mxu0 1.0
    %v1822 = vpop.f32.mrf.mxu0
    %v1823 = vadd.f32 0.0, %v1822
    %1824 = vdwg.mxu0
    %1825 = vmatpush.xpose.msra.mxu0 0.0
    %1826 = vmatpush.xpose.msra.mxu0 0.0
    %1827 = vmatpush.xpose.msra.mxu0 0.0
    %1828 = vmatpush.xpose.msra.mxu0 0.0
    %1829 = vmatpush.xpose.msra.mxu0 0.0
    %1830 = vmatpush.xpose.msra.mxu0 0.0
    %1831 = vmatpush.xpose.msra.mxu0 0.0
    %1832 = vmatpush.xpose.msra.mxu0 0.0
    %1833 = vmatpush.xpose.msra.mxu0 0.0
    %1834 = vmatpush.xpose.msra.mxu0 0.0
    %1835 = vmatpush.xpose.msra.mxu0 0.0
    %1836 = vmatpush.xpose.msra.mxu0 0.0
    %1837 = vmatpush.xpose.msra.mxu0 0.0
    %1838 = vmatpush.xpose.msra.mxu0 %v1804
    %1839 = vmatpush.xpose.msra.mxu0 %v1802
    %1840 = vmatpush.xpose.msra.mxu0 %v1800
    %1841 = vmatmul.f32.gmra.mxu0 1.0
    %v1842 = vpop.f32.mrf.mxu0
    %v1843 = vadd.f32 %v1823, %v1842
    %1844 = vdwg.mxu0
    %v1845 = vsub.f32 %v1843, %v1721
    %1846 = vmatpush.xpose.msra.mxu0 0.0
    %1847 = vmatpush.xpose.msra.mxu0 0.0
    %1848 = vmatpush.xpose.msra.mxu0 0.0
    %1849 = vmatpush.xpose.msra.mxu0 0.0
    %1850 = vmatpush.xpose.msra.mxu0 0.0
    %1851 = vmatpush.xpose.msra.mxu0 0.0
    %1852 = vmatpush.xpose.msra.mxu0 0.0
    %1853 = vmatpush.xpose.msra.mxu0 0.0
    %1854 = vmatpush.xpose.msra.mxu0 0.0
    %1855 = vmatpush.xpose.msra.mxu0 0.0
    %1856 = vmatpush.xpose.msra.mxu0 0.0
    %1857 = vmatpush.xpose.msra.mxu0 0.0
    %1858 = vmatpush.xpose.msra.mxu0 0.0
    %1859 = vmatpush.xpose.msra.mxu0 %v1797
    %1860 = vmatpush.xpose.msra.mxu0 %v1795
    %1861 = vmatpush.xpose.msra.mxu0 %v1793
    %1862 = vmatmul.f32.gmra.mxu0 1.0
    %v1863 = vpop.f32.mrf.mxu0
    %v1864 = vadd.f32 1e-16, %v1863
    %1865 = vdwg.mxu0
    %1866 = vmatpush.xpose.msra.mxu0 0.0
    %1867 = vmatpush.xpose.msra.mxu0 0.0
    %1868 = vmatpush.xpose.msra.mxu0 0.0
    %1869 = vmatpush.xpose.msra.mxu0 0.0
    %1870 = vmatpush.xpose.msra.mxu0 0.0
    %1871 = vmatpush.xpose.msra.mxu0 0.0
    %1872 = vmatpush.xpose.msra.mxu0 0.0
    %1873 = vmatpush.xpose.msra.mxu0 0.0
    %1874 = vmatpush.xpose.msra.mxu0 0.0
    %1875 = vmatpush.xpose.msra.mxu0 0.0
    %1876 = vmatpush.xpose.msra.mxu0 0.0
    %1877 = vmatpush.xpose.msra.mxu0 0.0
    %1878 = vmatpush.xpose.msra.mxu0 0.0
    %1879 = vmatpush.xpose.msra.mxu0 %v1798
    %1880 = vmatpush.xpose.msra.mxu0 %v1796
    %1881 = vmatpush.xpose.msra.mxu0 %v1794
    %1882 = vmatmul.f32.gmra.mxu0 1.0
    %v1883 = vpop.f32.mrf.mxu0
    %v1884 = vadd.f32 %v1864, %v1883
    %1885 = vdwg.mxu0
    %v1886 = vrcp.pop %v1884
    %v1887 = vmul.f32 %v1884, %v1886
    %v1888 = vsub.f32 1.0, %v1887
    %v1889 = vmul.f32 %v1886, %v1888
    %v1890 = vadd.f32 %v1886, %v1889
    %vm1891 = vweird.f32 %v1884
    %vm1892 = vweird.f32 %v1886
    %vm1893 = vmor %vm1891, %vm1892
    %v1894 = vsel %vm1893, %v1886, %v1890
    %v1895 = vand.u32 2147483647, %v1884
    %vm1896 = vcmp.eq.f32.partialorder %v1895, 8.507059e+37
    %v1897 = vand.u32 %v1884, 2147483648
    %v1898 = vor.u32 1.1754944e-38, %v1897
    %v1899 = vsel %vm1896, %v1898, %v1894
    %v1900 = vmul.f32 %v1843, %v1899
    %v1901 = vmul.f32 %v1845, %v1900
    %v1902 = vadd.f32 %v1780, %v1901
    %v1903 = vadd.f32 %v68, -8.0
    %v1904 = vadd.f32 %v69, -8.0
    %v1905 = vadd.f32 %v70, -8.0
    %v1906 = vadd.f32 %v71, -8.0
    %v1907 = vadd.f32 %v72, -8.0
    %v1908 = vadd.f32 %v73, -8.0
    %v1909 = vmax.f32 %v1903, 0.0
    %v1910 = vmax.f32 %v1904, 0.0
    %v1911 = vmax.f32 %v1905, 0.0
    %v1912 = vmax.f32 %v1906, 0.0
    %v1913 = vmax.f32 %v1907, 0.0
    %v1914 = vmax.f32 %v1908, 0.0
    %v1915 = vmin.f32 %v1909, 1.0
    %v1916 = vmin.f32 %v1910, 1.0
    %v1917 = vmin.f32 %v1911, 1.0
    %v1918 = vmin.f32 %v1912, 1.0
    %v1919 = vmin.f32 %v1913, 1.0
    %v1920 = vmin.f32 %v1914, 1.0
    %v1921 = vmul.f32 %v1915, %v50
    %v1922 = vmul.f32 %v1916, %v51
    %v1923 = vmul.f32 %v1917, %v52
    %v1924 = vmul.f32 %v1918, %v53
    %v1925 = vmul.f32 %v1919, %v54
    %v1926 = vmul.f32 %v1920, %v55
    %1927 = vmatpush.xpose.msra.mxu0 0.0
    %1928 = vmatpush.xpose.msra.mxu0 0.0
    %1929 = vmatpush.xpose.msra.mxu0 0.0
    %1930 = vmatpush.xpose.msra.mxu0 0.0
    %1931 = vmatpush.xpose.msra.mxu0 0.0
    %1932 = vmatpush.xpose.msra.mxu0 0.0
    %1933 = vmatpush.xpose.msra.mxu0 0.0
    %1934 = vmatpush.xpose.msra.mxu0 0.0
    %1935 = vmatpush.xpose.msra.mxu0 0.0
    %1936 = vmatpush.xpose.msra.mxu0 0.0
    %1937 = vmatpush.xpose.msra.mxu0 0.0
    %1938 = vmatpush.xpose.msra.mxu0 0.0
    %1939 = vmatpush.xpose.msra.mxu0 0.0
    %1940 = vmatpush.xpose.msra.mxu0 %v1925
    %1941 = vmatpush.xpose.msra.mxu0 %v1923
    %1942 = vmatpush.xpose.msra.mxu0 %v1921
    %1943 = vmatmul.f32.gmra.mxu0 1.0
    %v1944 = vpop.f32.mrf.mxu0
    %v1945 = vadd.f32 0.0, %v1944
    %1946 = vdwg.mxu0
    %1947 = vmatpush.xpose.msra.mxu0 0.0
    %1948 = vmatpush.xpose.msra.mxu0 0.0
    %1949 = vmatpush.xpose.msra.mxu0 0.0
    %1950 = vmatpush.xpose.msra.mxu0 0.0
    %1951 = vmatpush.xpose.msra.mxu0 0.0
    %1952 = vmatpush.xpose.msra.mxu0 0.0
    %1953 = vmatpush.xpose.msra.mxu0 0.0
    %1954 = vmatpush.xpose.msra.mxu0 0.0
    %1955 = vmatpush.xpose.msra.mxu0 0.0
    %1956 = vmatpush.xpose.msra.mxu0 0.0
    %1957 = vmatpush.xpose.msra.mxu0 0.0
    %1958 = vmatpush.xpose.msra.mxu0 0.0
    %1959 = vmatpush.xpose.msra.mxu0 0.0
    %1960 = vmatpush.xpose.msra.mxu0 %v1926
    %1961 = vmatpush.xpose.msra.mxu0 %v1924
    %1962 = vmatpush.xpose.msra.mxu0 %v1922
    %1963 = vmatmul.f32.gmra.mxu0 1.0
    %v1964 = vpop.f32.mrf.mxu0
    %v1965 = vadd.f32 %v1945, %v1964
    %1966 = vdwg.mxu0
    %v1967 = vsub.f32 %v1965, %v1843
    %1968 = vmatpush.xpose.msra.mxu0 0.0
    %1969 = vmatpush.xpose.msra.mxu0 0.0
    %1970 = vmatpush.xpose.msra.mxu0 0.0
    %1971 = vmatpush.xpose.msra.mxu0 0.0
    %1972 = vmatpush.xpose.msra.mxu0 0.0
    %1973 = vmatpush.xpose.msra.mxu0 0.0
    %1974 = vmatpush.xpose.msra.mxu0 0.0
    %1975 = vmatpush.xpose.msra.mxu0 0.0
    %1976 = vmatpush.xpose.msra.mxu0 0.0
    %1977 = vmatpush.xpose.msra.mxu0 0.0
    %1978 = vmatpush.xpose.msra.mxu0 0.0
    %1979 = vmatpush.xpose.msra.mxu0 0.0
    %1980 = vmatpush.xpose.msra.mxu0 0.0
    %1981 = vmatpush.xpose.msra.mxu0 %v1919
    %1982 = vmatpush.xpose.msra.mxu0 %v1917
    %1983 = vmatpush.xpose.msra.mxu0 %v1915
    %1984 = vmatmul.f32.gmra.mxu0 1.0
    %v1985 = vpop.f32.mrf.mxu0
    %v1986 = vadd.f32 1e-16, %v1985
    %1987 = vdwg.mxu0
    %1988 = vmatpush.xpose.msra.mxu0 0.0
    %1989 = vmatpush.xpose.msra.mxu0 0.0
    %1990 = vmatpush.xpose.msra.mxu0 0.0
    %1991 = vmatpush.xpose.msra.mxu0 0.0
    %1992 = vmatpush.xpose.msra.mxu0 0.0
    %1993 = vmatpush.xpose.msra.mxu0 0.0
    %1994 = vmatpush.xpose.msra.mxu0 0.0
    %1995 = vmatpush.xpose.msra.mxu0 0.0
    %1996 = vmatpush.xpose.msra.mxu0 0.0
    %1997 = vmatpush.xpose.msra.mxu0 0.0
    %1998 = vmatpush.xpose.msra.mxu0 0.0
    %1999 = vmatpush.xpose.msra.mxu0 0.0
    %2000 = vmatpush.xpose.msra.mxu0 0.0
    %2001 = vmatpush.xpose.msra.mxu0 %v1920
    %2002 = vmatpush.xpose.msra.mxu0 %v1918
    %2003 = vmatpush.xpose.msra.mxu0 %v1916
    %2004 = vmatmul.f32.gmra.mxu0 1.0
    %v2005 = vpop.f32.mrf.mxu0
    %v2006 = vadd.f32 %v1986, %v2005
    %2007 = vdwg.mxu0
    %v2008 = vrcp.pop %v2006
    %v2009 = vmul.f32 %v2006, %v2008
    %v2010 = vsub.f32 1.0, %v2009
    %v2011 = vmul.f32 %v2008, %v2010
    %v2012 = vadd.f32 %v2008, %v2011
    %vm2013 = vweird.f32 %v2006
    %vm2014 = vweird.f32 %v2008
    %vm2015 = vmor %vm2013, %vm2014
    %v2016 = vsel %vm2015, %v2008, %v2012
    %v2017 = vand.u32 2147483647, %v2006
    %vm2018 = vcmp.eq.f32.partialorder %v2017, 8.507059e+37
    %v2019 = vand.u32 %v2006, 2147483648
    %v2020 = vor.u32 1.1754944e-38, %v2019
    %v2021 = vsel %vm2018, %v2020, %v2016
    %v2022 = vmul.f32 %v1965, %v2021
    %v2023 = vmul.f32 %v1967, %v2022
    %v2024 = vadd.f32 %v1902, %v2023
    %v2025 = vadd.f32 %v68, -7.0
    %v2026 = vadd.f32 %v69, -7.0
    %v2027 = vadd.f32 %v70, -7.0
    %v2028 = vadd.f32 %v71, -7.0
    %v2029 = vadd.f32 %v72, -7.0
    %v2030 = vadd.f32 %v73, -7.0
    %v2031 = vmax.f32 %v2025, 0.0
    %v2032 = vmax.f32 %v2026, 0.0
    %v2033 = vmax.f32 %v2027, 0.0
    %v2034 = vmax.f32 %v2028, 0.0
    %v2035 = vmax.f32 %v2029, 0.0
    %v2036 = vmax.f32 %v2030, 0.0
    %v2037 = vmin.f32 %v2031, 1.0
    %v2038 = vmin.f32 %v2032, 1.0
    %v2039 = vmin.f32 %v2033, 1.0
    %v2040 = vmin.f32 %v2034, 1.0
    %v2041 = vmin.f32 %v2035, 1.0
    %v2042 = vmin.f32 %v2036, 1.0
    %v2043 = vmul.f32 %v2037, %v50
    %v2044 = vmul.f32 %v2038, %v51
    %v2045 = vmul.f32 %v2039, %v52
    %v2046 = vmul.f32 %v2040, %v53
    %v2047 = vmul.f32 %v2041, %v54
    %v2048 = vmul.f32 %v2042, %v55
    %2049 = vmatpush.xpose.msra.mxu0 0.0
    %2050 = vmatpush.xpose.msra.mxu0 0.0
    %2051 = vmatpush.xpose.msra.mxu0 0.0
    %2052 = vmatpush.xpose.msra.mxu0 0.0
    %2053 = vmatpush.xpose.msra.mxu0 0.0
    %2054 = vmatpush.xpose.msra.mxu0 0.0
    %2055 = vmatpush.xpose.msra.mxu0 0.0
    %2056 = vmatpush.xpose.msra.mxu0 0.0
    %2057 = vmatpush.xpose.msra.mxu0 0.0
    %2058 = vmatpush.xpose.msra.mxu0 0.0
    %2059 = vmatpush.xpose.msra.mxu0 0.0
    %2060 = vmatpush.xpose.msra.mxu0 0.0
    %2061 = vmatpush.xpose.msra.mxu0 0.0
    %2062 = vmatpush.xpose.msra.mxu0 %v2047
    %2063 = vmatpush.xpose.msra.mxu0 %v2045
    %2064 = vmatpush.xpose.msra.mxu0 %v2043
    %2065 = vmatmul.f32.gmra.mxu0 1.0
    %v2066 = vpop.f32.mrf.mxu0
    %v2067 = vadd.f32 0.0, %v2066
    %2068 = vdwg.mxu0
    %2069 = vmatpush.xpose.msra.mxu0 0.0
    %2070 = vmatpush.xpose.msra.mxu0 0.0
    %2071 = vmatpush.xpose.msra.mxu0 0.0
    %2072 = vmatpush.xpose.msra.mxu0 0.0
    %2073 = vmatpush.xpose.msra.mxu0 0.0
    %2074 = vmatpush.xpose.msra.mxu0 0.0
    %2075 = vmatpush.xpose.msra.mxu0 0.0
    %2076 = vmatpush.xpose.msra.mxu0 0.0
    %2077 = vmatpush.xpose.msra.mxu0 0.0
    %2078 = vmatpush.xpose.msra.mxu0 0.0
    %2079 = vmatpush.xpose.msra.mxu0 0.0
    %2080 = vmatpush.xpose.msra.mxu0 0.0
    %2081 = vmatpush.xpose.msra.mxu0 0.0
    %2082 = vmatpush.xpose.msra.mxu0 %v2048
    %2083 = vmatpush.xpose.msra.mxu0 %v2046
    %2084 = vmatpush.xpose.msra.mxu0 %v2044
    %2085 = vmatmul.f32.gmra.mxu0 1.0
    %v2086 = vpop.f32.mrf.mxu0
    %v2087 = vadd.f32 %v2067, %v2086
    %2088 = vdwg.mxu0
    %v2089 = vsub.f32 %v2087, %v1965
    %2090 = vmatpush.xpose.msra.mxu0 0.0
    %2091 = vmatpush.xpose.msra.mxu0 0.0
    %2092 = vmatpush.xpose.msra.mxu0 0.0
    %2093 = vmatpush.xpose.msra.mxu0 0.0
    %2094 = vmatpush.xpose.msra.mxu0 0.0
    %2095 = vmatpush.xpose.msra.mxu0 0.0
    %2096 = vmatpush.xpose.msra.mxu0 0.0
    %2097 = vmatpush.xpose.msra.mxu0 0.0
    %2098 = vmatpush.xpose.msra.mxu0 0.0
    %2099 = vmatpush.xpose.msra.mxu0 0.0
    %2100 = vmatpush.xpose.msra.mxu0 0.0
    %2101 = vmatpush.xpose.msra.mxu0 0.0
    %2102 = vmatpush.xpose.msra.mxu0 0.0
    %2103 = vmatpush.xpose.msra.mxu0 %v2041
    %2104 = vmatpush.xpose.msra.mxu0 %v2039
    %2105 = vmatpush.xpose.msra.mxu0 %v2037
    %2106 = vmatmul.f32.gmra.mxu0 1.0
    %v2107 = vpop.f32.mrf.mxu0
    %v2108 = vadd.f32 1e-16, %v2107
    %2109 = vdwg.mxu0
    %2110 = vmatpush.xpose.msra.mxu0 0.0
    %2111 = vmatpush.xpose.msra.mxu0 0.0
    %2112 = vmatpush.xpose.msra.mxu0 0.0
    %2113 = vmatpush.xpose.msra.mxu0 0.0
    %2114 = vmatpush.xpose.msra.mxu0 0.0
    %2115 = vmatpush.xpose.msra.mxu0 0.0
    %2116 = vmatpush.xpose.msra.mxu0 0.0
    %2117 = vmatpush.xpose.msra.mxu0 0.0
    %2118 = vmatpush.xpose.msra.mxu0 0.0
    %2119 = vmatpush.xpose.msra.mxu0 0.0
    %2120 = vmatpush.xpose.msra.mxu0 0.0
    %2121 = vmatpush.xpose.msra.mxu0 0.0
    %2122 = vmatpush.xpose.msra.mxu0 0.0
    %2123 = vmatpush.xpose.msra.mxu0 %v2042
    %2124 = vmatpush.xpose.msra.mxu0 %v2040
    %2125 = vmatpush.xpose.msra.mxu0 %v2038
    %2126 = vmatmul.f32.gmra.mxu0 1.0
    %v2127 = vpop.f32.mrf.mxu0
    %v2128 = vadd.f32 %v2108, %v2127
    %2129 = vdwg.mxu0
    %v2130 = vrcp.pop %v2128
    %v2131 = vmul.f32 %v2128, %v2130
    %v2132 = vsub.f32 1.0, %v2131
    %v2133 = vmul.f32 %v2130, %v2132
    %v2134 = vadd.f32 %v2130, %v2133
    %vm2135 = vweird.f32 %v2128
    %vm2136 = vweird.f32 %v2130
    %vm2137 = vmor %vm2135, %vm2136
    %v2138 = vsel %vm2137, %v2130, %v2134
    %v2139 = vand.u32 2147483647, %v2128
    %vm2140 = vcmp.eq.f32.partialorder %v2139, 8.507059e+37
    %v2141 = vand.u32 %v2128, 2147483648
    %v2142 = vor.u32 1.1754944e-38, %v2141
    %v2143 = vsel %vm2140, %v2142, %v2138
    %v2144 = vmul.f32 %v2087, %v2143
    %v2145 = vmul.f32 %v2089, %v2144
    %v2146 = vadd.f32 %v2024, %v2145
    %v2147 = vadd.f32 %v68, -6.0
    %v2148 = vadd.f32 %v69, -6.0
    %v2149 = vadd.f32 %v70, -6.0
    %v2150 = vadd.f32 %v71, -6.0
    %v2151 = vadd.f32 %v72, -6.0
    %v2152 = vadd.f32 %v73, -6.0
    %v2153 = vmax.f32 %v2147, 0.0
    %v2154 = vmax.f32 %v2148, 0.0
    %v2155 = vmax.f32 %v2149, 0.0
    %v2156 = vmax.f32 %v2150, 0.0
    %v2157 = vmax.f32 %v2151, 0.0
    %v2158 = vmax.f32 %v2152, 0.0
    %v2159 = vmin.f32 %v2153, 1.0
    %v2160 = vmin.f32 %v2154, 1.0
    %v2161 = vmin.f32 %v2155, 1.0
    %v2162 = vmin.f32 %v2156, 1.0
    %v2163 = vmin.f32 %v2157, 1.0
    %v2164 = vmin.f32 %v2158, 1.0
    %v2165 = vmul.f32 %v2159, %v50
    %v2166 = vmul.f32 %v2160, %v51
    %v2167 = vmul.f32 %v2161, %v52
    %v2168 = vmul.f32 %v2162, %v53
    %v2169 = vmul.f32 %v2163, %v54
    %v2170 = vmul.f32 %v2164, %v55
    %2171 = vmatpush.xpose.msra.mxu0 0.0
    %2172 = vmatpush.xpose.msra.mxu0 0.0
    %2173 = vmatpush.xpose.msra.mxu0 0.0
    %2174 = vmatpush.xpose.msra.mxu0 0.0
    %2175 = vmatpush.xpose.msra.mxu0 0.0
    %2176 = vmatpush.xpose.msra.mxu0 0.0
    %2177 = vmatpush.xpose.msra.mxu0 0.0
    %2178 = vmatpush.xpose.msra.mxu0 0.0
    %2179 = vmatpush.xpose.msra.mxu0 0.0
    %2180 = vmatpush.xpose.msra.mxu0 0.0
    %2181 = vmatpush.xpose.msra.mxu0 0.0
    %2182 = vmatpush.xpose.msra.mxu0 0.0
    %2183 = vmatpush.xpose.msra.mxu0 0.0
    %2184 = vmatpush.xpose.msra.mxu0 %v2169
    %2185 = vmatpush.xpose.msra.mxu0 %v2167
    %2186 = vmatpush.xpose.msra.mxu0 %v2165
    %2187 = vmatmul.f32.gmra.mxu0 1.0
    %v2188 = vpop.f32.mrf.mxu0
    %v2189 = vadd.f32 0.0, %v2188
    %2190 = vdwg.mxu0
    %2191 = vmatpush.xpose.msra.mxu0 0.0
    %2192 = vmatpush.xpose.msra.mxu0 0.0
    %2193 = vmatpush.xpose.msra.mxu0 0.0
    %2194 = vmatpush.xpose.msra.mxu0 0.0
    %2195 = vmatpush.xpose.msra.mxu0 0.0
    %2196 = vmatpush.xpose.msra.mxu0 0.0
    %2197 = vmatpush.xpose.msra.mxu0 0.0
    %2198 = vmatpush.xpose.msra.mxu0 0.0
    %2199 = vmatpush.xpose.msra.mxu0 0.0
    %2200 = vmatpush.xpose.msra.mxu0 0.0
    %2201 = vmatpush.xpose.msra.mxu0 0.0
    %2202 = vmatpush.xpose.msra.mxu0 0.0
    %2203 = vmatpush.xpose.msra.mxu0 0.0
    %2204 = vmatpush.xpose.msra.mxu0 %v2170
    %2205 = vmatpush.xpose.msra.mxu0 %v2168
    %2206 = vmatpush.xpose.msra.mxu0 %v2166
    %2207 = vmatmul.f32.gmra.mxu0 1.0
    %v2208 = vpop.f32.mrf.mxu0
    %v2209 = vadd.f32 %v2189, %v2208
    %2210 = vdwg.mxu0
    %v2211 = vsub.f32 %v2209, %v2087
    %2212 = vmatpush.xpose.msra.mxu0 0.0
    %2213 = vmatpush.xpose.msra.mxu0 0.0
    %2214 = vmatpush.xpose.msra.mxu0 0.0
    %2215 = vmatpush.xpose.msra.mxu0 0.0
    %2216 = vmatpush.xpose.msra.mxu0 0.0
    %2217 = vmatpush.xpose.msra.mxu0 0.0
    %2218 = vmatpush.xpose.msra.mxu0 0.0
    %2219 = vmatpush.xpose.msra.mxu0 0.0
    %2220 = vmatpush.xpose.msra.mxu0 0.0
    %2221 = vmatpush.xpose.msra.mxu0 0.0
    %2222 = vmatpush.xpose.msra.mxu0 0.0
    %2223 = vmatpush.xpose.msra.mxu0 0.0
    %2224 = vmatpush.xpose.msra.mxu0 0.0
    %2225 = vmatpush.xpose.msra.mxu0 %v2163
    %2226 = vmatpush.xpose.msra.mxu0 %v2161
    %2227 = vmatpush.xpose.msra.mxu0 %v2159
    %2228 = vmatmul.f32.gmra.mxu0 1.0
    %v2229 = vpop.f32.mrf.mxu0
    %v2230 = vadd.f32 1e-16, %v2229
    %2231 = vdwg.mxu0
    %2232 = vmatpush.xpose.msra.mxu0 0.0
    %2233 = vmatpush.xpose.msra.mxu0 0.0
    %2234 = vmatpush.xpose.msra.mxu0 0.0
    %2235 = vmatpush.xpose.msra.mxu0 0.0
    %2236 = vmatpush.xpose.msra.mxu0 0.0
    %2237 = vmatpush.xpose.msra.mxu0 0.0
    %2238 = vmatpush.xpose.msra.mxu0 0.0
    %2239 = vmatpush.xpose.msra.mxu0 0.0
    %2240 = vmatpush.xpose.msra.mxu0 0.0
    %2241 = vmatpush.xpose.msra.mxu0 0.0
    %2242 = vmatpush.xpose.msra.mxu0 0.0
    %2243 = vmatpush.xpose.msra.mxu0 0.0
    %2244 = vmatpush.xpose.msra.mxu0 0.0
    %2245 = vmatpush.xpose.msra.mxu0 %v2164
    %2246 = vmatpush.xpose.msra.mxu0 %v2162
    %2247 = vmatpush.xpose.msra.mxu0 %v2160
    %2248 = vmatmul.f32.gmra.mxu0 1.0
    %v2249 = vpop.f32.mrf.mxu0
    %v2250 = vadd.f32 %v2230, %v2249
    %2251 = vdwg.mxu0
    %v2252 = vrcp.pop %v2250
    %v2253 = vmul.f32 %v2250, %v2252
    %v2254 = vsub.f32 1.0, %v2253
    %v2255 = vmul.f32 %v2252, %v2254
    %v2256 = vadd.f32 %v2252, %v2255
    %vm2257 = vweird.f32 %v2250
    %vm2258 = vweird.f32 %v2252
    %vm2259 = vmor %vm2257, %vm2258
    %v2260 = vsel %vm2259, %v2252, %v2256
    %v2261 = vand.u32 2147483647, %v2250
    %vm2262 = vcmp.eq.f32.partialorder %v2261, 8.507059e+37
    %v2263 = vand.u32 %v2250, 2147483648
    %v2264 = vor.u32 1.1754944e-38, %v2263
    %v2265 = vsel %vm2262, %v2264, %v2260
    %v2266 = vmul.f32 %v2209, %v2265
    %v2267 = vmul.f32 %v2211, %v2266
    %v2268 = vadd.f32 %v2146, %v2267
    %v2269 = vadd.f32 %v68, -5.0
    %v2270 = vadd.f32 %v69, -5.0
    %v2271 = vadd.f32 %v70, -5.0
    %v2272 = vadd.f32 %v71, -5.0
    %v2273 = vadd.f32 %v72, -5.0
    %v2274 = vadd.f32 %v73, -5.0
    %v2275 = vmax.f32 %v2269, 0.0
    %v2276 = vmax.f32 %v2270, 0.0
    %v2277 = vmax.f32 %v2271, 0.0
    %v2278 = vmax.f32 %v2272, 0.0
    %v2279 = vmax.f32 %v2273, 0.0
    %v2280 = vmax.f32 %v2274, 0.0
    %v2281 = vmin.f32 %v2275, 1.0
    %v2282 = vmin.f32 %v2276, 1.0
    %v2283 = vmin.f32 %v2277, 1.0
    %v2284 = vmin.f32 %v2278, 1.0
    %v2285 = vmin.f32 %v2279, 1.0
    %v2286 = vmin.f32 %v2280, 1.0
    %v2287 = vmul.f32 %v2281, %v50
    %v2288 = vmul.f32 %v2282, %v51
    %v2289 = vmul.f32 %v2283, %v52
    %v2290 = vmul.f32 %v2284, %v53
    %v2291 = vmul.f32 %v2285, %v54
    %v2292 = vmul.f32 %v2286, %v55
    %2293 = vmatpush.xpose.msra.mxu0 0.0
    %2294 = vmatpush.xpose.msra.mxu0 0.0
    %2295 = vmatpush.xpose.msra.mxu0 0.0
    %2296 = vmatpush.xpose.msra.mxu0 0.0
    %2297 = vmatpush.xpose.msra.mxu0 0.0
    %2298 = vmatpush.xpose.msra.mxu0 0.0
    %2299 = vmatpush.xpose.msra.mxu0 0.0
    %2300 = vmatpush.xpose.msra.mxu0 0.0
    %2301 = vmatpush.xpose.msra.mxu0 0.0
    %2302 = vmatpush.xpose.msra.mxu0 0.0
    %2303 = vmatpush.xpose.msra.mxu0 0.0
    %2304 = vmatpush.xpose.msra.mxu0 0.0
    %2305 = vmatpush.xpose.msra.mxu0 0.0
    %2306 = vmatpush.xpose.msra.mxu0 %v2291
    %2307 = vmatpush.xpose.msra.mxu0 %v2289
    %2308 = vmatpush.xpose.msra.mxu0 %v2287
    %2309 = vmatmul.f32.gmra.mxu0 1.0
    %v2310 = vpop.f32.mrf.mxu0
    %v2311 = vadd.f32 0.0, %v2310
    %2312 = vdwg.mxu0
    %2313 = vmatpush.xpose.msra.mxu0 0.0
    %2314 = vmatpush.xpose.msra.mxu0 0.0
    %2315 = vmatpush.xpose.msra.mxu0 0.0
    %2316 = vmatpush.xpose.msra.mxu0 0.0
    %2317 = vmatpush.xpose.msra.mxu0 0.0
    %2318 = vmatpush.xpose.msra.mxu0 0.0
    %2319 = vmatpush.xpose.msra.mxu0 0.0
    %2320 = vmatpush.xpose.msra.mxu0 0.0
    %2321 = vmatpush.xpose.msra.mxu0 0.0
    %2322 = vmatpush.xpose.msra.mxu0 0.0
    %2323 = vmatpush.xpose.msra.mxu0 0.0
    %2324 = vmatpush.xpose.msra.mxu0 0.0
    %2325 = vmatpush.xpose.msra.mxu0 0.0
    %2326 = vmatpush.xpose.msra.mxu0 %v2292
    %2327 = vmatpush.xpose.msra.mxu0 %v2290
    %2328 = vmatpush.xpose.msra.mxu0 %v2288
    %2329 = vmatmul.f32.gmra.mxu0 1.0
    %v2330 = vpop.f32.mrf.mxu0
    %v2331 = vadd.f32 %v2311, %v2330
    %2332 = vdwg.mxu0
    %v2333 = vsub.f32 %v2331, %v2209
    %2334 = vmatpush.xpose.msra.mxu0 0.0
    %2335 = vmatpush.xpose.msra.mxu0 0.0
    %2336 = vmatpush.xpose.msra.mxu0 0.0
    %2337 = vmatpush.xpose.msra.mxu0 0.0
    %2338 = vmatpush.xpose.msra.mxu0 0.0
    %2339 = vmatpush.xpose.msra.mxu0 0.0
    %2340 = vmatpush.xpose.msra.mxu0 0.0
    %2341 = vmatpush.xpose.msra.mxu0 0.0
    %2342 = vmatpush.xpose.msra.mxu0 0.0
    %2343 = vmatpush.xpose.msra.mxu0 0.0
    %2344 = vmatpush.xpose.msra.mxu0 0.0
    %2345 = vmatpush.xpose.msra.mxu0 0.0
    %2346 = vmatpush.xpose.msra.mxu0 0.0
    %2347 = vmatpush.xpose.msra.mxu0 %v2285
    %2348 = vmatpush.xpose.msra.mxu0 %v2283
    %2349 = vmatpush.xpose.msra.mxu0 %v2281
    %2350 = vmatmul.f32.gmra.mxu0 1.0
    %v2351 = vpop.f32.mrf.mxu0
    %v2352 = vadd.f32 1e-16, %v2351
    %2353 = vdwg.mxu0
    %2354 = vmatpush.xpose.msra.mxu0 0.0
    %2355 = vmatpush.xpose.msra.mxu0 0.0
    %2356 = vmatpush.xpose.msra.mxu0 0.0
    %2357 = vmatpush.xpose.msra.mxu0 0.0
    %2358 = vmatpush.xpose.msra.mxu0 0.0
    %2359 = vmatpush.xpose.msra.mxu0 0.0
    %2360 = vmatpush.xpose.msra.mxu0 0.0
    %2361 = vmatpush.xpose.msra.mxu0 0.0
    %2362 = vmatpush.xpose.msra.mxu0 0.0
    %2363 = vmatpush.xpose.msra.mxu0 0.0
    %2364 = vmatpush.xpose.msra.mxu0 0.0
    %2365 = vmatpush.xpose.msra.mxu0 0.0
    %2366 = vmatpush.xpose.msra.mxu0 0.0
    %2367 = vmatpush.xpose.msra.mxu0 %v2286
    %2368 = vmatpush.xpose.msra.mxu0 %v2284
    %2369 = vmatpush.xpose.msra.mxu0 %v2282
    %2370 = vmatmul.f32.gmra.mxu0 1.0
    %v2371 = vpop.f32.mrf.mxu0
    %v2372 = vadd.f32 %v2352, %v2371
    %2373 = vdwg.mxu0
    %v2374 = vrcp.pop %v2372
    %v2375 = vmul.f32 %v2372, %v2374
    %v2376 = vsub.f32 1.0, %v2375
    %v2377 = vmul.f32 %v2374, %v2376
    %v2378 = vadd.f32 %v2374, %v2377
    %vm2379 = vweird.f32 %v2372
    %vm2380 = vweird.f32 %v2374
    %vm2381 = vmor %vm2379, %vm2380
    %v2382 = vsel %vm2381, %v2374, %v2378
    %v2383 = vand.u32 2147483647, %v2372
    %vm2384 = vcmp.eq.f32.partialorder %v2383, 8.507059e+37
    %v2385 = vand.u32 %v2372, 2147483648
    %v2386 = vor.u32 1.1754944e-38, %v2385
    %v2387 = vsel %vm2384, %v2386, %v2382
    %v2388 = vmul.f32 %v2331, %v2387
    %v2389 = vmul.f32 %v2333, %v2388
    %v2390 = vadd.f32 %v2268, %v2389
    %v2391 = vadd.f32 %v68, -4.0
    %v2392 = vadd.f32 %v69, -4.0
    %v2393 = vadd.f32 %v70, -4.0
    %v2394 = vadd.f32 %v71, -4.0
    %v2395 = vadd.f32 %v72, -4.0
    %v2396 = vadd.f32 %v73, -4.0
    %v2397 = vmax.f32 %v2391, 0.0
    %v2398 = vmax.f32 %v2392, 0.0
    %v2399 = vmax.f32 %v2393, 0.0
    %v2400 = vmax.f32 %v2394, 0.0
    %v2401 = vmax.f32 %v2395, 0.0
    %v2402 = vmax.f32 %v2396, 0.0
    %v2403 = vmin.f32 %v2397, 1.0
    %v2404 = vmin.f32 %v2398, 1.0
    %v2405 = vmin.f32 %v2399, 1.0
    %v2406 = vmin.f32 %v2400, 1.0
    %v2407 = vmin.f32 %v2401, 1.0
    %v2408 = vmin.f32 %v2402, 1.0
    %v2409 = vmul.f32 %v2403, %v50
    %v2410 = vmul.f32 %v2404, %v51
    %v2411 = vmul.f32 %v2405, %v52
    %v2412 = vmul.f32 %v2406, %v53
    %v2413 = vmul.f32 %v2407, %v54
    %v2414 = vmul.f32 %v2408, %v55
    %2415 = vmatpush.xpose.msra.mxu0 0.0
    %2416 = vmatpush.xpose.msra.mxu0 0.0
    %2417 = vmatpush.xpose.msra.mxu0 0.0
    %2418 = vmatpush.xpose.msra.mxu0 0.0
    %2419 = vmatpush.xpose.msra.mxu0 0.0
    %2420 = vmatpush.xpose.msra.mxu0 0.0
    %2421 = vmatpush.xpose.msra.mxu0 0.0
    %2422 = vmatpush.xpose.msra.mxu0 0.0
    %2423 = vmatpush.xpose.msra.mxu0 0.0
    %2424 = vmatpush.xpose.msra.mxu0 0.0
    %2425 = vmatpush.xpose.msra.mxu0 0.0
    %2426 = vmatpush.xpose.msra.mxu0 0.0
    %2427 = vmatpush.xpose.msra.mxu0 0.0
    %2428 = vmatpush.xpose.msra.mxu0 %v2413
    %2429 = vmatpush.xpose.msra.mxu0 %v2411
    %2430 = vmatpush.xpose.msra.mxu0 %v2409
    %2431 = vmatmul.f32.gmra.mxu0 1.0
    %v2432 = vpop.f32.mrf.mxu0
    %v2433 = vadd.f32 0.0, %v2432
    %2434 = vdwg.mxu0
    %2435 = vmatpush.xpose.msra.mxu0 0.0
    %2436 = vmatpush.xpose.msra.mxu0 0.0
    %2437 = vmatpush.xpose.msra.mxu0 0.0
    %2438 = vmatpush.xpose.msra.mxu0 0.0
    %2439 = vmatpush.xpose.msra.mxu0 0.0
    %2440 = vmatpush.xpose.msra.mxu0 0.0
    %2441 = vmatpush.xpose.msra.mxu0 0.0
    %2442 = vmatpush.xpose.msra.mxu0 0.0
    %2443 = vmatpush.xpose.msra.mxu0 0.0
    %2444 = vmatpush.xpose.msra.mxu0 0.0
    %2445 = vmatpush.xpose.msra.mxu0 0.0
    %2446 = vmatpush.xpose.msra.mxu0 0.0
    %2447 = vmatpush.xpose.msra.mxu0 0.0
    %2448 = vmatpush.xpose.msra.mxu0 %v2414
    %2449 = vmatpush.xpose.msra.mxu0 %v2412
    %2450 = vmatpush.xpose.msra.mxu0 %v2410
    %2451 = vmatmul.f32.gmra.mxu0 1.0
    %v2452 = vpop.f32.mrf.mxu0
    %v2453 = vadd.f32 %v2433, %v2452
    %2454 = vdwg.mxu0
    %v2455 = vsub.f32 %v2453, %v2331
    %2456 = vmatpush.xpose.msra.mxu0 0.0
    %2457 = vmatpush.xpose.msra.mxu0 0.0
    %2458 = vmatpush.xpose.msra.mxu0 0.0
    %2459 = vmatpush.xpose.msra.mxu0 0.0
    %2460 = vmatpush.xpose.msra.mxu0 0.0
    %2461 = vmatpush.xpose.msra.mxu0 0.0
    %2462 = vmatpush.xpose.msra.mxu0 0.0
    %2463 = vmatpush.xpose.msra.mxu0 0.0
    %2464 = vmatpush.xpose.msra.mxu0 0.0
    %2465 = vmatpush.xpose.msra.mxu0 0.0
    %2466 = vmatpush.xpose.msra.mxu0 0.0
    %2467 = vmatpush.xpose.msra.mxu0 0.0
    %2468 = vmatpush.xpose.msra.mxu0 0.0
    %2469 = vmatpush.xpose.msra.mxu0 %v2407
    %2470 = vmatpush.xpose.msra.mxu0 %v2405
    %2471 = vmatpush.xpose.msra.mxu0 %v2403
    %2472 = vmatmul.f32.gmra.mxu0 1.0
    %v2473 = vpop.f32.mrf.mxu0
    %v2474 = vadd.f32 1e-16, %v2473
    %2475 = vdwg.mxu0
    %2476 = vmatpush.xpose.msra.mxu0 0.0
    %2477 = vmatpush.xpose.msra.mxu0 0.0
    %2478 = vmatpush.xpose.msra.mxu0 0.0
    %2479 = vmatpush.xpose.msra.mxu0 0.0
    %2480 = vmatpush.xpose.msra.mxu0 0.0
    %2481 = vmatpush.xpose.msra.mxu0 0.0
    %2482 = vmatpush.xpose.msra.mxu0 0.0
    %2483 = vmatpush.xpose.msra.mxu0 0.0
    %2484 = vmatpush.xpose.msra.mxu0 0.0
    %2485 = vmatpush.xpose.msra.mxu0 0.0
    %2486 = vmatpush.xpose.msra.mxu0 0.0
    %2487 = vmatpush.xpose.msra.mxu0 0.0
    %2488 = vmatpush.xpose.msra.mxu0 0.0
    %2489 = vmatpush.xpose.msra.mxu0 %v2408
    %2490 = vmatpush.xpose.msra.mxu0 %v2406
    %2491 = vmatpush.xpose.msra.mxu0 %v2404
    %2492 = vmatmul.f32.gmra.mxu0 1.0
    %v2493 = vpop.f32.mrf.mxu0
    %v2494 = vadd.f32 %v2474, %v2493
    %2495 = vdwg.mxu0
    %v2496 = vrcp.pop %v2494
    %v2497 = vmul.f32 %v2494, %v2496
    %v2498 = vsub.f32 1.0, %v2497
    %v2499 = vmul.f32 %v2496, %v2498
    %v2500 = vadd.f32 %v2496, %v2499
    %vm2501 = vweird.f32 %v2494
    %vm2502 = vweird.f32 %v2496
    %vm2503 = vmor %vm2501, %vm2502
    %v2504 = vsel %vm2503, %v2496, %v2500
    %v2505 = vand.u32 2147483647, %v2494
    %vm2506 = vcmp.eq.f32.partialorder %v2505, 8.507059e+37
    %v2507 = vand.u32 %v2494, 2147483648
    %v2508 = vor.u32 1.1754944e-38, %v2507
    %v2509 = vsel %vm2506, %v2508, %v2504
    %v2510 = vmul.f32 %v2453, %v2509
    %v2511 = vmul.f32 %v2455, %v2510
    %v2512 = vadd.f32 %v2390, %v2511
    %v2513 = vadd.f32 %v68, -3.0
    %v2514 = vadd.f32 %v69, -3.0
    %v2515 = vadd.f32 %v70, -3.0
    %v2516 = vadd.f32 %v71, -3.0
    %v2517 = vadd.f32 %v72, -3.0
    %v2518 = vadd.f32 %v73, -3.0
    %v2519 = vmax.f32 %v2513, 0.0
    %v2520 = vmax.f32 %v2514, 0.0
    %v2521 = vmax.f32 %v2515, 0.0
    %v2522 = vmax.f32 %v2516, 0.0
    %v2523 = vmax.f32 %v2517, 0.0
    %v2524 = vmax.f32 %v2518, 0.0
    %v2525 = vmin.f32 %v2519, 1.0
    %v2526 = vmin.f32 %v2520, 1.0
    %v2527 = vmin.f32 %v2521, 1.0
    %v2528 = vmin.f32 %v2522, 1.0
    %v2529 = vmin.f32 %v2523, 1.0
    %v2530 = vmin.f32 %v2524, 1.0
    %v2531 = vmul.f32 %v2525, %v50
    %v2532 = vmul.f32 %v2526, %v51
    %v2533 = vmul.f32 %v2527, %v52
    %v2534 = vmul.f32 %v2528, %v53
    %v2535 = vmul.f32 %v2529, %v54
    %v2536 = vmul.f32 %v2530, %v55
    %2537 = vmatpush.xpose.msra.mxu0 0.0
    %2538 = vmatpush.xpose.msra.mxu0 0.0
    %2539 = vmatpush.xpose.msra.mxu0 0.0
    %2540 = vmatpush.xpose.msra.mxu0 0.0
    %2541 = vmatpush.xpose.msra.mxu0 0.0
    %2542 = vmatpush.xpose.msra.mxu0 0.0
    %2543 = vmatpush.xpose.msra.mxu0 0.0
    %2544 = vmatpush.xpose.msra.mxu0 0.0
    %2545 = vmatpush.xpose.msra.mxu0 0.0
    %2546 = vmatpush.xpose.msra.mxu0 0.0
    %2547 = vmatpush.xpose.msra.mxu0 0.0
    %2548 = vmatpush.xpose.msra.mxu0 0.0
    %2549 = vmatpush.xpose.msra.mxu0 0.0
    %2550 = vmatpush.xpose.msra.mxu0 %v2535
    %2551 = vmatpush.xpose.msra.mxu0 %v2533
    %2552 = vmatpush.xpose.msra.mxu0 %v2531
    %2553 = vmatmul.f32.gmra.mxu0 1.0
    %v2554 = vpop.f32.mrf.mxu0
    %v2555 = vadd.f32 0.0, %v2554
    %2556 = vdwg.mxu0
    %2557 = vmatpush.xpose.msra.mxu0 0.0
    %2558 = vmatpush.xpose.msra.mxu0 0.0
    %2559 = vmatpush.xpose.msra.mxu0 0.0
    %2560 = vmatpush.xpose.msra.mxu0 0.0
    %2561 = vmatpush.xpose.msra.mxu0 0.0
    %2562 = vmatpush.xpose.msra.mxu0 0.0
    %2563 = vmatpush.xpose.msra.mxu0 0.0
    %2564 = vmatpush.xpose.msra.mxu0 0.0
    %2565 = vmatpush.xpose.msra.mxu0 0.0
    %2566 = vmatpush.xpose.msra.mxu0 0.0
    %2567 = vmatpush.xpose.msra.mxu0 0.0
    %2568 = vmatpush.xpose.msra.mxu0 0.0
    %2569 = vmatpush.xpose.msra.mxu0 0.0
    %2570 = vmatpush.xpose.msra.mxu0 %v2536
    %2571 = vmatpush.xpose.msra.mxu0 %v2534
    %2572 = vmatpush.xpose.msra.mxu0 %v2532
    %2573 = vmatmul.f32.gmra.mxu0 1.0
    %v2574 = vpop.f32.mrf.mxu0
    %v2575 = vadd.f32 %v2555, %v2574
    %2576 = vdwg.mxu0
    %v2577 = vsub.f32 %v2575, %v2453
    %2578 = vmatpush.xpose.msra.mxu0 0.0
    %2579 = vmatpush.xpose.msra.mxu0 0.0
    %2580 = vmatpush.xpose.msra.mxu0 0.0
    %2581 = vmatpush.xpose.msra.mxu0 0.0
    %2582 = vmatpush.xpose.msra.mxu0 0.0
    %2583 = vmatpush.xpose.msra.mxu0 0.0
    %2584 = vmatpush.xpose.msra.mxu0 0.0
    %2585 = vmatpush.xpose.msra.mxu0 0.0
    %2586 = vmatpush.xpose.msra.mxu0 0.0
    %2587 = vmatpush.xpose.msra.mxu0 0.0
    %2588 = vmatpush.xpose.msra.mxu0 0.0
    %2589 = vmatpush.xpose.msra.mxu0 0.0
    %2590 = vmatpush.xpose.msra.mxu0 0.0
    %2591 = vmatpush.xpose.msra.mxu0 %v2529
    %2592 = vmatpush.xpose.msra.mxu0 %v2527
    %2593 = vmatpush.xpose.msra.mxu0 %v2525
    %2594 = vmatmul.f32.gmra.mxu0 1.0
    %v2595 = vpop.f32.mrf.mxu0
    %v2596 = vadd.f32 1e-16, %v2595
    %2597 = vdwg.mxu0
    %2598 = vmatpush.xpose.msra.mxu0 0.0
    %2599 = vmatpush.xpose.msra.mxu0 0.0
    %2600 = vmatpush.xpose.msra.mxu0 0.0
    %2601 = vmatpush.xpose.msra.mxu0 0.0
    %2602 = vmatpush.xpose.msra.mxu0 0.0
    %2603 = vmatpush.xpose.msra.mxu0 0.0
    %2604 = vmatpush.xpose.msra.mxu0 0.0
    %2605 = vmatpush.xpose.msra.mxu0 0.0
    %2606 = vmatpush.xpose.msra.mxu0 0.0
    %2607 = vmatpush.xpose.msra.mxu0 0.0
    %2608 = vmatpush.xpose.msra.mxu0 0.0
    %2609 = vmatpush.xpose.msra.mxu0 0.0
    %2610 = vmatpush.xpose.msra.mxu0 0.0
    %2611 = vmatpush.xpose.msra.mxu0 %v2530
    %2612 = vmatpush.xpose.msra.mxu0 %v2528
    %2613 = vmatpush.xpose.msra.mxu0 %v2526
    %2614 = vmatmul.f32.gmra.mxu0 1.0
    %v2615 = vpop.f32.mrf.mxu0
    %v2616 = vadd.f32 %v2596, %v2615
    %2617 = vdwg.mxu0
    %v2618 = vrcp.pop %v2616
    %v2619 = vmul.f32 %v2616, %v2618
    %v2620 = vsub.f32 1.0, %v2619
    %v2621 = vmul.f32 %v2618, %v2620
    %v2622 = vadd.f32 %v2618, %v2621
    %vm2623 = vweird.f32 %v2616
    %vm2624 = vweird.f32 %v2618
    %vm2625 = vmor %vm2623, %vm2624
    %v2626 = vsel %vm2625, %v2618, %v2622
    %v2627 = vand.u32 2147483647, %v2616
    %vm2628 = vcmp.eq.f32.partialorder %v2627, 8.507059e+37
    %v2629 = vand.u32 %v2616, 2147483648
    %v2630 = vor.u32 1.1754944e-38, %v2629
    %v2631 = vsel %vm2628, %v2630, %v2626
    %v2632 = vmul.f32 %v2575, %v2631
    %v2633 = vmul.f32 %v2577, %v2632
    %v2634 = vadd.f32 %v2512, %v2633
    %v2635 = vadd.f32 %v68, -2.0
    %v2636 = vadd.f32 %v69, -2.0
    %v2637 = vadd.f32 %v70, -2.0
    %v2638 = vadd.f32 %v71, -2.0
    %v2639 = vadd.f32 %v72, -2.0
    %v2640 = vadd.f32 %v73, -2.0
    %v2641 = vmax.f32 %v2635, 0.0
    %v2642 = vmax.f32 %v2636, 0.0
    %v2643 = vmax.f32 %v2637, 0.0
    %v2644 = vmax.f32 %v2638, 0.0
    %v2645 = vmax.f32 %v2639, 0.0
    %v2646 = vmax.f32 %v2640, 0.0
    %v2647 = vmin.f32 %v2641, 1.0
    %v2648 = vmin.f32 %v2642, 1.0
    %v2649 = vmin.f32 %v2643, 1.0
    %v2650 = vmin.f32 %v2644, 1.0
    %v2651 = vmin.f32 %v2645, 1.0
    %v2652 = vmin.f32 %v2646, 1.0
    %v2653 = vmul.f32 %v2647, %v50
    %v2654 = vmul.f32 %v2648, %v51
    %v2655 = vmul.f32 %v2649, %v52
    %v2656 = vmul.f32 %v2650, %v53
    %v2657 = vmul.f32 %v2651, %v54
    %v2658 = vmul.f32 %v2652, %v55
    %2659 = vmatpush.xpose.msra.mxu0 0.0
    %2660 = vmatpush.xpose.msra.mxu0 0.0
    %2661 = vmatpush.xpose.msra.mxu0 0.0
    %2662 = vmatpush.xpose.msra.mxu0 0.0
    %2663 = vmatpush.xpose.msra.mxu0 0.0
    %2664 = vmatpush.xpose.msra.mxu0 0.0
    %2665 = vmatpush.xpose.msra.mxu0 0.0
    %2666 = vmatpush.xpose.msra.mxu0 0.0
    %2667 = vmatpush.xpose.msra.mxu0 0.0
    %2668 = vmatpush.xpose.msra.mxu0 0.0
    %2669 = vmatpush.xpose.msra.mxu0 0.0
    %2670 = vmatpush.xpose.msra.mxu0 0.0
    %2671 = vmatpush.xpose.msra.mxu0 0.0
    %2672 = vmatpush.xpose.msra.mxu0 %v2657
    %2673 = vmatpush.xpose.msra.mxu0 %v2655
    %2674 = vmatpush.xpose.msra.mxu0 %v2653
    %2675 = vmatmul.f32.gmra.mxu0 1.0
    %v2676 = vpop.f32.mrf.mxu0
    %v2677 = vadd.f32 0.0, %v2676
    %2678 = vdwg.mxu0
    %2679 = vmatpush.xpose.msra.mxu0 0.0
    %2680 = vmatpush.xpose.msra.mxu0 0.0
    %2681 = vmatpush.xpose.msra.mxu0 0.0
    %2682 = vmatpush.xpose.msra.mxu0 0.0
    %2683 = vmatpush.xpose.msra.mxu0 0.0
    %2684 = vmatpush.xpose.msra.mxu0 0.0
    %2685 = vmatpush.xpose.msra.mxu0 0.0
    %2686 = vmatpush.xpose.msra.mxu0 0.0
    %2687 = vmatpush.xpose.msra.mxu0 0.0
    %2688 = vmatpush.xpose.msra.mxu0 0.0
    %2689 = vmatpush.xpose.msra.mxu0 0.0
    %2690 = vmatpush.xpose.msra.mxu0 0.0
    %2691 = vmatpush.xpose.msra.mxu0 0.0
    %2692 = vmatpush.xpose.msra.mxu0 %v2658
    %2693 = vmatpush.xpose.msra.mxu0 %v2656
    %2694 = vmatpush.xpose.msra.mxu0 %v2654
    %2695 = vmatmul.f32.gmra.mxu0 1.0
    %v2696 = vpop.f32.mrf.mxu0
    %v2697 = vadd.f32 %v2677, %v2696
    %2698 = vdwg.mxu0
    %v2699 = vsub.f32 %v2697, %v2575
    %2700 = vmatpush.xpose.msra.mxu0 0.0
    %2701 = vmatpush.xpose.msra.mxu0 0.0
    %2702 = vmatpush.xpose.msra.mxu0 0.0
    %2703 = vmatpush.xpose.msra.mxu0 0.0
    %2704 = vmatpush.xpose.msra.mxu0 0.0
    %2705 = vmatpush.xpose.msra.mxu0 0.0
    %2706 = vmatpush.xpose.msra.mxu0 0.0
    %2707 = vmatpush.xpose.msra.mxu0 0.0
    %2708 = vmatpush.xpose.msra.mxu0 0.0
    %2709 = vmatpush.xpose.msra.mxu0 0.0
    %2710 = vmatpush.xpose.msra.mxu0 0.0
    %2711 = vmatpush.xpose.msra.mxu0 0.0
    %2712 = vmatpush.xpose.msra.mxu0 0.0
    %2713 = vmatpush.xpose.msra.mxu0 %v2651
    %2714 = vmatpush.xpose.msra.mxu0 %v2649
    %2715 = vmatpush.xpose.msra.mxu0 %v2647
    %2716 = vmatmul.f32.gmra.mxu0 1.0
    %v2717 = vpop.f32.mrf.mxu0
    %v2718 = vadd.f32 1e-16, %v2717
    %2719 = vdwg.mxu0
    %2720 = vmatpush.xpose.msra.mxu0 0.0
    %2721 = vmatpush.xpose.msra.mxu0 0.0
    %2722 = vmatpush.xpose.msra.mxu0 0.0
    %2723 = vmatpush.xpose.msra.mxu0 0.0
    %2724 = vmatpush.xpose.msra.mxu0 0.0
    %2725 = vmatpush.xpose.msra.mxu0 0.0
    %2726 = vmatpush.xpose.msra.mxu0 0.0
    %2727 = vmatpush.xpose.msra.mxu0 0.0
    %2728 = vmatpush.xpose.msra.mxu0 0.0
    %2729 = vmatpush.xpose.msra.mxu0 0.0
    %2730 = vmatpush.xpose.msra.mxu0 0.0
    %2731 = vmatpush.xpose.msra.mxu0 0.0
    %2732 = vmatpush.xpose.msra.mxu0 0.0
    %2733 = vmatpush.xpose.msra.mxu0 %v2652
    %2734 = vmatpush.xpose.msra.mxu0 %v2650
    %2735 = vmatpush.xpose.msra.mxu0 %v2648
    %2736 = vmatmul.f32.gmra.mxu0 1.0
    %v2737 = vpop.f32.mrf.mxu0
    %v2738 = vadd.f32 %v2718, %v2737
    %2739 = vdwg.mxu0
    %v2740 = vrcp.pop %v2738
    %v2741 = vmul.f32 %v2738, %v2740
    %v2742 = vsub.f32 1.0, %v2741
    %v2743 = vmul.f32 %v2740, %v2742
    %v2744 = vadd.f32 %v2740, %v2743
    %vm2745 = vweird.f32 %v2738
    %vm2746 = vweird.f32 %v2740
    %vm2747 = vmor %vm2745, %vm2746
    %v2748 = vsel %vm2747, %v2740, %v2744
    %v2749 = vand.u32 2147483647, %v2738
    %vm2750 = vcmp.eq.f32.partialorder %v2749, 8.507059e+37
    %v2751 = vand.u32 %v2738, 2147483648
    %v2752 = vor.u32 1.1754944e-38, %v2751
    %v2753 = vsel %vm2750, %v2752, %v2748
    %v2754 = vmul.f32 %v2697, %v2753
    %v2755 = vmul.f32 %v2699, %v2754
    %v2756 = vadd.f32 %v2634, %v2755
    %v2757 = vadd.f32 %v68, -1.0
    %v2758 = vadd.f32 %v69, -1.0
    %v2759 = vadd.f32 %v70, -1.0
    %v2760 = vadd.f32 %v71, -1.0
    %v2761 = vadd.f32 %v72, -1.0
    %v2762 = vadd.f32 %v73, -1.0
    %v2763 = vmax.f32 %v2757, 0.0
    %v2764 = vmax.f32 %v2758, 0.0
    %v2765 = vmax.f32 %v2759, 0.0
    %v2766 = vmax.f32 %v2760, 0.0
    %v2767 = vmax.f32 %v2761, 0.0
    %v2768 = vmax.f32 %v2762, 0.0
    %v2769 = vmin.f32 %v2763, 1.0
    %v2770 = vmin.f32 %v2764, 1.0
    %v2771 = vmin.f32 %v2765, 1.0
    %v2772 = vmin.f32 %v2766, 1.0
    %v2773 = vmin.f32 %v2767, 1.0
    %v2774 = vmin.f32 %v2768, 1.0
    %v2775 = vmul.f32 %v2769, %v50
    %v2776 = vmul.f32 %v2770, %v51
    %v2777 = vmul.f32 %v2771, %v52
    %v2778 = vmul.f32 %v2772, %v53
    %v2779 = vmul.f32 %v2773, %v54
    %v2780 = vmul.f32 %v2774, %v55
    %2781 = vmatpush.xpose.msra.mxu0 0.0
    %2782 = vmatpush.xpose.msra.mxu0 0.0
    %2783 = vmatpush.xpose.msra.mxu0 0.0
    %2784 = vmatpush.xpose.msra.mxu0 0.0
    %2785 = vmatpush.xpose.msra.mxu0 0.0
    %2786 = vmatpush.xpose.msra.mxu0 0.0
    %2787 = vmatpush.xpose.msra.mxu0 0.0
    %2788 = vmatpush.xpose.msra.mxu0 0.0
    %2789 = vmatpush.xpose.msra.mxu0 0.0
    %2790 = vmatpush.xpose.msra.mxu0 0.0
    %2791 = vmatpush.xpose.msra.mxu0 0.0
    %2792 = vmatpush.xpose.msra.mxu0 0.0
    %2793 = vmatpush.xpose.msra.mxu0 0.0
    %2794 = vmatpush.xpose.msra.mxu0 %v2779
    %2795 = vmatpush.xpose.msra.mxu0 %v2777
    %2796 = vmatpush.xpose.msra.mxu0 %v2775
    %2797 = vmatmul.f32.gmra.mxu0 1.0
    %v2798 = vpop.f32.mrf.mxu0
    %v2799 = vadd.f32 0.0, %v2798
    %2800 = vdwg.mxu0
    %2801 = vmatpush.xpose.msra.mxu0 0.0
    %2802 = vmatpush.xpose.msra.mxu0 0.0
    %2803 = vmatpush.xpose.msra.mxu0 0.0
    %2804 = vmatpush.xpose.msra.mxu0 0.0
    %2805 = vmatpush.xpose.msra.mxu0 0.0
    %2806 = vmatpush.xpose.msra.mxu0 0.0
    %2807 = vmatpush.xpose.msra.mxu0 0.0
    %2808 = vmatpush.xpose.msra.mxu0 0.0
    %2809 = vmatpush.xpose.msra.mxu0 0.0
    %2810 = vmatpush.xpose.msra.mxu0 0.0
    %2811 = vmatpush.xpose.msra.mxu0 0.0
    %2812 = vmatpush.xpose.msra.mxu0 0.0
    %2813 = vmatpush.xpose.msra.mxu0 0.0
    %2814 = vmatpush.xpose.msra.mxu0 %v2780
    %2815 = vmatpush.xpose.msra.mxu0 %v2778
    %2816 = vmatpush.xpose.msra.mxu0 %v2776
    %2817 = vmatmul.f32.gmra.mxu0 1.0
    %v2818 = vpop.f32.mrf.mxu0
    %v2819 = vadd.f32 %v2799, %v2818
    %2820 = vdwg.mxu0
    %v2821 = vsub.f32 %v2819, %v2697
    %2822 = vmatpush.xpose.msra.mxu0 0.0
    %2823 = vmatpush.xpose.msra.mxu0 0.0
    %2824 = vmatpush.xpose.msra.mxu0 0.0
    %2825 = vmatpush.xpose.msra.mxu0 0.0
    %2826 = vmatpush.xpose.msra.mxu0 0.0
    %2827 = vmatpush.xpose.msra.mxu0 0.0
    %2828 = vmatpush.xpose.msra.mxu0 0.0
    %2829 = vmatpush.xpose.msra.mxu0 0.0
    %2830 = vmatpush.xpose.msra.mxu0 0.0
    %2831 = vmatpush.xpose.msra.mxu0 0.0
    %2832 = vmatpush.xpose.msra.mxu0 0.0
    %2833 = vmatpush.xpose.msra.mxu0 0.0
    %2834 = vmatpush.xpose.msra.mxu0 0.0
    %2835 = vmatpush.xpose.msra.mxu0 %v2773
    %2836 = vmatpush.xpose.msra.mxu0 %v2771
    %2837 = vmatpush.xpose.msra.mxu0 %v2769
    %2838 = vmatmul.f32.gmra.mxu0 1.0
    %v2839 = vpop.f32.mrf.mxu0
    %v2840 = vadd.f32 1e-16, %v2839
    %2841 = vdwg.mxu0
    %2842 = vmatpush.xpose.msra.mxu0 0.0
    %2843 = vmatpush.xpose.msra.mxu0 0.0
    %2844 = vmatpush.xpose.msra.mxu0 0.0
    %2845 = vmatpush.xpose.msra.mxu0 0.0
    %2846 = vmatpush.xpose.msra.mxu0 0.0
    %2847 = vmatpush.xpose.msra.mxu0 0.0
    %2848 = vmatpush.xpose.msra.mxu0 0.0
    %2849 = vmatpush.xpose.msra.mxu0 0.0
    %2850 = vmatpush.xpose.msra.mxu0 0.0
    %2851 = vmatpush.xpose.msra.mxu0 0.0
    %2852 = vmatpush.xpose.msra.mxu0 0.0
    %2853 = vmatpush.xpose.msra.mxu0 0.0
    %2854 = vmatpush.xpose.msra.mxu0 0.0
    %2855 = vmatpush.xpose.msra.mxu0 %v2774
    %2856 = vmatpush.xpose.msra.mxu0 %v2772
    %2857 = vmatpush.xpose.msra.mxu0 %v2770
    %2858 = vmatmul.f32.gmra.mxu0 1.0
    %v2859 = vpop.f32.mrf.mxu0
    %v2860 = vadd.f32 %v2840, %v2859
    %2861 = vdwg.mxu0
    %v2862 = vrcp.pop %v2860
    %v2863 = vmul.f32 %v2860, %v2862
    %v2864 = vsub.f32 1.0, %v2863
    %v2865 = vmul.f32 %v2862, %v2864
    %v2866 = vadd.f32 %v2862, %v2865
    %vm2867 = vweird.f32 %v2860
    %vm2868 = vweird.f32 %v2862
    %vm2869 = vmor %vm2867, %vm2868
    %v2870 = vsel %vm2869, %v2862, %v2866
    %v2871 = vand.u32 2147483647, %v2860
    %vm2872 = vcmp.eq.f32.partialorder %v2871, 8.507059e+37
    %v2873 = vand.u32 %v2860, 2147483648
    %v2874 = vor.u32 1.1754944e-38, %v2873
    %v2875 = vsel %vm2872, %v2874, %v2870
    %v2876 = vmul.f32 %v2819, %v2875
    %v2877 = vmul.f32 %v2821, %v2876
    %v2878 = vadd.f32 %v2756, %v2877
    %v2879 = vadd.f32 %v68, 0.0
    %v2880 = vadd.f32 %v69, 0.0
    %v2881 = vadd.f32 %v70, 0.0
    %v2882 = vadd.f32 %v71, 0.0
    %v2883 = vadd.f32 %v72, 0.0
    %v2884 = vadd.f32 %v73, 0.0
    %v2885 = vmax.f32 %v2879, 0.0
    %v2886 = vmax.f32 %v2880, 0.0
    %v2887 = vmax.f32 %v2881, 0.0
    %v2888 = vmax.f32 %v2882, 0.0
    %v2889 = vmax.f32 %v2883, 0.0
    %v2890 = vmax.f32 %v2884, 0.0
    %v2891 = vmin.f32 %v2885, 1.0
    %v2892 = vmin.f32 %v2886, 1.0
    %v2893 = vmin.f32 %v2887, 1.0
    %v2894 = vmin.f32 %v2888, 1.0
    %v2895 = vmin.f32 %v2889, 1.0
    %v2896 = vmin.f32 %v2890, 1.0
    %v2897 = vmul.f32 %v2891, %v50
    %v2898 = vmul.f32 %v2892, %v51
    %v2899 = vmul.f32 %v2893, %v52
    %v2900 = vmul.f32 %v2894, %v53
    %v2901 = vmul.f32 %v2895, %v54
    %v2902 = vmul.f32 %v2896, %v55
    %2903 = vmatpush.xpose.msra.mxu0 0.0
    %2904 = vmatpush.xpose.msra.mxu0 0.0
    %2905 = vmatpush.xpose.msra.mxu0 0.0
    %2906 = vmatpush.xpose.msra.mxu0 0.0
    %2907 = vmatpush.xpose.msra.mxu0 0.0
    %2908 = vmatpush.xpose.msra.mxu0 0.0
    %2909 = vmatpush.xpose.msra.mxu0 0.0
    %2910 = vmatpush.xpose.msra.mxu0 0.0
    %2911 = vmatpush.xpose.msra.mxu0 0.0
    %2912 = vmatpush.xpose.msra.mxu0 0.0
    %2913 = vmatpush.xpose.msra.mxu0 0.0
    %2914 = vmatpush.xpose.msra.mxu0 0.0
    %2915 = vmatpush.xpose.msra.mxu0 0.0
    %2916 = vmatpush.xpose.msra.mxu0 %v2901
    %2917 = vmatpush.xpose.msra.mxu0 %v2899
    %2918 = vmatpush.xpose.msra.mxu0 %v2897
    %2919 = vmatmul.f32.gmra.mxu0 1.0
    %v2920 = vpop.f32.mrf.mxu0
    %v2921 = vadd.f32 0.0, %v2920
    %2922 = vdwg.mxu0
    %2923 = vmatpush.xpose.msra.mxu0 0.0
    %2924 = vmatpush.xpose.msra.mxu0 0.0
    %2925 = vmatpush.xpose.msra.mxu0 0.0
    %2926 = vmatpush.xpose.msra.mxu0 0.0
    %2927 = vmatpush.xpose.msra.mxu0 0.0
    %2928 = vmatpush.xpose.msra.mxu0 0.0
    %2929 = vmatpush.xpose.msra.mxu0 0.0
    %2930 = vmatpush.xpose.msra.mxu0 0.0
    %2931 = vmatpush.xpose.msra.mxu0 0.0
    %2932 = vmatpush.xpose.msra.mxu0 0.0
    %2933 = vmatpush.xpose.msra.mxu0 0.0
    %2934 = vmatpush.xpose.msra.mxu0 0.0
    %2935 = vmatpush.xpose.msra.mxu0 0.0
    %2936 = vmatpush.xpose.msra.mxu0 %v2902
    %2937 = vmatpush.xpose.msra.mxu0 %v2900
    %2938 = vmatpush.xpose.msra.mxu0 %v2898
    %2939 = vmatmul.f32.gmra.mxu0 1.0
    %v2940 = vpop.f32.mrf.mxu0
    %v2941 = vadd.f32 %v2921, %v2940
    %2942 = vdwg.mxu0
    %v2943 = vsub.f32 %v2941, %v2819
    %2944 = vmatpush.xpose.msra.mxu0 0.0
    %2945 = vmatpush.xpose.msra.mxu0 0.0
    %2946 = vmatpush.xpose.msra.mxu0 0.0
    %2947 = vmatpush.xpose.msra.mxu0 0.0
    %2948 = vmatpush.xpose.msra.mxu0 0.0
    %2949 = vmatpush.xpose.msra.mxu0 0.0
    %2950 = vmatpush.xpose.msra.mxu0 0.0
    %2951 = vmatpush.xpose.msra.mxu0 0.0
    %2952 = vmatpush.xpose.msra.mxu0 0.0
    %2953 = vmatpush.xpose.msra.mxu0 0.0
    %2954 = vmatpush.xpose.msra.mxu0 0.0
    %2955 = vmatpush.xpose.msra.mxu0 0.0
    %2956 = vmatpush.xpose.msra.mxu0 0.0
    %2957 = vmatpush.xpose.msra.mxu0 %v2895
    %2958 = vmatpush.xpose.msra.mxu0 %v2893
    %2959 = vmatpush.xpose.msra.mxu0 %v2891
    %2960 = vmatmul.f32.gmra.mxu0 1.0
    %v2961 = vpop.f32.mrf.mxu0
    %v2962 = vadd.f32 1e-16, %v2961
    %2963 = vdwg.mxu0
    %2964 = vmatpush.xpose.msra.mxu0 0.0
    %2965 = vmatpush.xpose.msra.mxu0 0.0
    %2966 = vmatpush.xpose.msra.mxu0 0.0
    %2967 = vmatpush.xpose.msra.mxu0 0.0
    %2968 = vmatpush.xpose.msra.mxu0 0.0
    %2969 = vmatpush.xpose.msra.mxu0 0.0
    %2970 = vmatpush.xpose.msra.mxu0 0.0
    %2971 = vmatpush.xpose.msra.mxu0 0.0
    %2972 = vmatpush.xpose.msra.mxu0 0.0
    %2973 = vmatpush.xpose.msra.mxu0 0.0
    %2974 = vmatpush.xpose.msra.mxu0 0.0
    %2975 = vmatpush.xpose.msra.mxu0 0.0
    %2976 = vmatpush.xpose.msra.mxu0 0.0
    %2977 = vmatpush.xpose.msra.mxu0 %v2896
    %2978 = vmatpush.xpose.msra.mxu0 %v2894
    %2979 = vmatpush.xpose.msra.mxu0 %v2892
    %2980 = vmatmul.f32.gmra.mxu0 1.0
    %v2981 = vpop.f32.mrf.mxu0
    %v2982 = vadd.f32 %v2962, %v2981
    %2983 = vdwg.mxu0
    %v2984 = vrcp.pop %v2982
    %v2985 = vmul.f32 %v2982, %v2984
    %v2986 = vsub.f32 1.0, %v2985
    %v2987 = vmul.f32 %v2984, %v2986
    %v2988 = vadd.f32 %v2984, %v2987
    %vm2989 = vweird.f32 %v2982
    %vm2990 = vweird.f32 %v2984
    %vm2991 = vmor %vm2989, %vm2990
    %v2992 = vsel %vm2991, %v2984, %v2988
    %v2993 = vand.u32 2147483647, %v2982
    %vm2994 = vcmp.eq.f32.partialorder %v2993, 8.507059e+37
    %v2995 = vand.u32 %v2982, 2147483648
    %v2996 = vor.u32 1.1754944e-38, %v2995
    %v2997 = vsel %vm2994, %v2996, %v2992
    %v2998 = vmul.f32 %v2941, %v2997
    %v2999 = vmul.f32 %v2943, %v2998
    %v3000 = vadd.f32 %v2878, %v2999
    %v3001 = vadd.f32 %v68, 1.0
    %v3002 = vadd.f32 %v69, 1.0
    %v3003 = vadd.f32 %v70, 1.0
    %v3004 = vadd.f32 %v71, 1.0
    %v3005 = vadd.f32 %v72, 1.0
    %v3006 = vadd.f32 %v73, 1.0
    %v3007 = vmax.f32 %v3001, 0.0
    %v3008 = vmax.f32 %v3002, 0.0
    %v3009 = vmax.f32 %v3003, 0.0
    %v3010 = vmax.f32 %v3004, 0.0
    %v3011 = vmax.f32 %v3005, 0.0
    %v3012 = vmax.f32 %v3006, 0.0
    %v3013 = vmin.f32 %v3007, 1.0
    %v3014 = vmin.f32 %v3008, 1.0
    %v3015 = vmin.f32 %v3009, 1.0
    %v3016 = vmin.f32 %v3010, 1.0
    %v3017 = vmin.f32 %v3011, 1.0
    %v3018 = vmin.f32 %v3012, 1.0
    %v3019 = vmul.f32 %v3013, %v50
    %v3020 = vmul.f32 %v3014, %v51
    %v3021 = vmul.f32 %v3015, %v52
    %v3022 = vmul.f32 %v3016, %v53
    %v3023 = vmul.f32 %v3017, %v54
    %v3024 = vmul.f32 %v3018, %v55
    %3025 = vmatpush.xpose.msra.mxu0 0.0
    %3026 = vmatpush.xpose.msra.mxu0 0.0
    %3027 = vmatpush.xpose.msra.mxu0 0.0
    %3028 = vmatpush.xpose.msra.mxu0 0.0
    %3029 = vmatpush.xpose.msra.mxu0 0.0
    %3030 = vmatpush.xpose.msra.mxu0 0.0
    %3031 = vmatpush.xpose.msra.mxu0 0.0
    %3032 = vmatpush.xpose.msra.mxu0 0.0
    %3033 = vmatpush.xpose.msra.mxu0 0.0
    %3034 = vmatpush.xpose.msra.mxu0 0.0
    %3035 = vmatpush.xpose.msra.mxu0 0.0
    %3036 = vmatpush.xpose.msra.mxu0 0.0
    %3037 = vmatpush.xpose.msra.mxu0 0.0
    %3038 = vmatpush.xpose.msra.mxu0 %v3023
    %3039 = vmatpush.xpose.msra.mxu0 %v3021
    %3040 = vmatpush.xpose.msra.mxu0 %v3019
    %3041 = vmatmul.f32.gmra.mxu0 1.0
    %v3042 = vpop.f32.mrf.mxu0
    %v3043 = vadd.f32 0.0, %v3042
    %3044 = vdwg.mxu0
    %3045 = vmatpush.xpose.msra.mxu0 0.0
    %3046 = vmatpush.xpose.msra.mxu0 0.0
    %3047 = vmatpush.xpose.msra.mxu0 0.0
    %3048 = vmatpush.xpose.msra.mxu0 0.0
    %3049 = vmatpush.xpose.msra.mxu0 0.0
    %3050 = vmatpush.xpose.msra.mxu0 0.0
    %3051 = vmatpush.xpose.msra.mxu0 0.0
    %3052 = vmatpush.xpose.msra.mxu0 0.0
    %3053 = vmatpush.xpose.msra.mxu0 0.0
    %3054 = vmatpush.xpose.msra.mxu0 0.0
    %3055 = vmatpush.xpose.msra.mxu0 0.0
    %3056 = vmatpush.xpose.msra.mxu0 0.0
    %3057 = vmatpush.xpose.msra.mxu0 0.0
    %3058 = vmatpush.xpose.msra.mxu0 %v3024
    %3059 = vmatpush.xpose.msra.mxu0 %v3022
    %3060 = vmatpush.xpose.msra.mxu0 %v3020
    %3061 = vmatmul.f32.gmra.mxu0 1.0
    %v3062 = vpop.f32.mrf.mxu0
    %v3063 = vadd.f32 %v3043, %v3062
    %3064 = vdwg.mxu0
    %v3065 = vsub.f32 %v3063, %v2941
    %3066 = vmatpush.xpose.msra.mxu0 0.0
    %3067 = vmatpush.xpose.msra.mxu0 0.0
    %3068 = vmatpush.xpose.msra.mxu0 0.0
    %3069 = vmatpush.xpose.msra.mxu0 0.0
    %3070 = vmatpush.xpose.msra.mxu0 0.0
    %3071 = vmatpush.xpose.msra.mxu0 0.0
    %3072 = vmatpush.xpose.msra.mxu0 0.0
    %3073 = vmatpush.xpose.msra.mxu0 0.0
    %3074 = vmatpush.xpose.msra.mxu0 0.0
    %3075 = vmatpush.xpose.msra.mxu0 0.0
    %3076 = vmatpush.xpose.msra.mxu0 0.0
    %3077 = vmatpush.xpose.msra.mxu0 0.0
    %3078 = vmatpush.xpose.msra.mxu0 0.0
    %3079 = vmatpush.xpose.msra.mxu0 %v3017
    %3080 = vmatpush.xpose.msra.mxu0 %v3015
    %3081 = vmatpush.xpose.msra.mxu0 %v3013
    %3082 = vmatmul.f32.gmra.mxu0 1.0
    %v3083 = vpop.f32.mrf.mxu0
    %v3084 = vadd.f32 1e-16, %v3083
    %3085 = vdwg.mxu0
    %3086 = vmatpush.xpose.msra.mxu0 0.0
    %3087 = vmatpush.xpose.msra.mxu0 0.0
    %3088 = vmatpush.xpose.msra.mxu0 0.0
    %3089 = vmatpush.xpose.msra.mxu0 0.0
    %3090 = vmatpush.xpose.msra.mxu0 0.0
    %3091 = vmatpush.xpose.msra.mxu0 0.0
    %3092 = vmatpush.xpose.msra.mxu0 0.0
    %3093 = vmatpush.xpose.msra.mxu0 0.0
    %3094 = vmatpush.xpose.msra.mxu0 0.0
    %3095 = vmatpush.xpose.msra.mxu0 0.0
    %3096 = vmatpush.xpose.msra.mxu0 0.0
    %3097 = vmatpush.xpose.msra.mxu0 0.0
    %3098 = vmatpush.xpose.msra.mxu0 0.0
    %3099 = vmatpush.xpose.msra.mxu0 %v3018
    %3100 = vmatpush.xpose.msra.mxu0 %v3016
    %3101 = vmatpush.xpose.msra.mxu0 %v3014
    %3102 = vmatmul.f32.gmra.mxu0 1.0
    %v3103 = vpop.f32.mrf.mxu0
    %v3104 = vadd.f32 %v3084, %v3103
    %3105 = vdwg.mxu0
    %v3106 = vrcp.pop %v3104
    %v3107 = vmul.f32 %v3104, %v3106
    %v3108 = vsub.f32 1.0, %v3107
    %v3109 = vmul.f32 %v3106, %v3108
    %v3110 = vadd.f32 %v3106, %v3109
    %vm3111 = vweird.f32 %v3104
    %vm3112 = vweird.f32 %v3106
    %vm3113 = vmor %vm3111, %vm3112
    %v3114 = vsel %vm3113, %v3106, %v3110
    %v3115 = vand.u32 2147483647, %v3104
    %vm3116 = vcmp.eq.f32.partialorder %v3115, 8.507059e+37
    %v3117 = vand.u32 %v3104, 2147483648
    %v3118 = vor.u32 1.1754944e-38, %v3117
    %v3119 = vsel %vm3116, %v3118, %v3114
    %v3120 = vmul.f32 %v3063, %v3119
    %v3121 = vmul.f32 %v3065, %v3120
    %v3122 = vadd.f32 %v3000, %v3121
    %v3123 = vrcp.pop %v3063
    %v3124 = vmul.f32 %v3063, %v3123
    %v3125 = vsub.f32 1.0, %v3124
    %v3126 = vmul.f32 %v3123, %v3125
    %v3127 = vadd.f32 %v3123, %v3126
    %vm3128 = vweird.f32 %v3063
    %vm3129 = vweird.f32 %v3123
    %vm3130 = vmor %vm3128, %vm3129
    %v3131 = vsel %vm3130, %v3123, %v3127
    %v3132 = vand.u32 2147483647, %v3063
    %vm3133 = vcmp.eq.f32.partialorder %v3132, 8.507059e+37
    %v3134 = vand.u32 %v3063, 2147483648
    %v3135 = vor.u32 1.1754944e-38, %v3134
    %v3136 = vsel %vm3133, %v3135, %v3131
    %v3137 = vmul.f32 %v3122, %v3136
    %vm3138 = vcmask 195584
    %3139 = vst.msk [vmem:[#allocation7] sm:$0xff] %vm3138, %v3137
    // Predicated region
    $region18: #{tpu_custom_call.1} parent=1 // pred_check
      _
    $region19: #{tpu_custom_call.1} parent=1 // pred_check_branch
      %3141 = sbr.rel (0) target = $region21
    $region20: #{tpu_custom_call.1} parent=1 // pred_region
      %3143 = vsyncadd [#allocation4], 0
      %s3145 = sshll.u32 [#allocation7], 4
      %s3146 = int_to_ptr.vmem [resolvable:$true] %s3145
      %s3147 = sshll.u32 %s2, 4
      %s3148 = int_to_ptr.hbm [resolvable:$true] %s3147
      %3150 = dma.vmem_to_hbm [thread:$0]  %s3146, 128, %s3148, [#allocation4]
    $region21: #{tpu_custom_call.1} parent=1 // pred_fallthru
      _
    // Predicated region
    $region22: #{tpu_custom_call.1} parent=1 // pred_check
      _
    $region23: #{tpu_custom_call.1} parent=1 // pred_check_branch
      %3152 = sbr.rel (0) target = $region25
    $region24: #{tpu_custom_call.1} parent=1 // pred_region
      %3154 = dma.done [#allocation4], 128
    $region25: #{tpu_custom_call.1} parent=1 // pred_fallthru
      _
    %3155 = vsyncpa [#allocation3], 1
    %3156 = vsyncpa [#allocation6], 1
    %3157 = vsyncpa [#allocation4], 1

</llo_original>
